<compile_context>
chip_gen: v6e
topology: v6e:2x2x1
jax: 0.10.0
libtpu: 0.0.40
codegen_flags: <defaults>
</compile_context>

<pallas_src>
import functools

import jax
import jax.numpy as jnp
from jax import lax
from jax.experimental import pallas as pl
from jax.experimental.pallas import tpu as pltpu


# ----------------------------------------------------------------------------
# Helpers
# ----------------------------------------------------------------------------
def _cout_tile(c):
    # MXU-friendly output-channel tile: 256 (v6e/v7x) > 128 (v5e) > full.
    for t in (256, 128):
        if c % t == 0:
            return t
    return c


def _phase_split(xpad, stride):
    # Space-to-depth of the spatially padded NHWC activation:
    #   P[n, a, b, u, v, c] = xpad[n, u*s + a, v*s + b, c]
    # flattened to (N*s*s, Hp, Wp, C).  For stride=1 this is a no-op reshape.
    n, hp_full, wp_full, c = xpad.shape
    s = stride
    hp, wp = hp_full // s, wp_full // s
    xp = xpad.reshape(n, hp, s, wp, s, c).transpose(0, 2, 4, 1, 3, 5)
    return xp.reshape(n * s * s, hp, wp, c)


# ----------------------------------------------------------------------------
# Pallas kernels
# ----------------------------------------------------------------------------
def _conv1_bn_relu_kernel(a_ref, w_ref, s2_ref, b2_ref, o_ref, *, stride, Ho, Wo):
    # a_ref : (s*s, Hp, Wp, Cin)  bf16  phase-split, zero-padded relu1(bn1(x))
    # w_ref : (3, 3, Cin, TC)     bf16  conv1 weights (Cout tile)
    # s2/b2 : (1, TC)             f32   folded BN2 scale / bias
    # o_ref : (1, Ho, Wo, TC)     bf16
    cin = a_ref.shape[-1]
    tc = o_ref.shape[-1]
    a = a_ref[...]
    w = w_ref[...]
    acc = jnp.zeros((Ho * Wo, tc), jnp.float32)
    for kh in range(3):                      # 9 static taps -> 9 MXU matmuls
        for kw in range(3):
            ph = (kh % stride) * stride + (kw % stride)
            dh, dw = kh // stride, kw // stride
            patch = a[ph, dh:dh + Ho, dw:dw + Wo, :].reshape(Ho * Wo, cin)
            acc = acc + jnp.dot(patch, w[kh, kw],
                                preferred_element_type=jnp.float32)
    # Fused BN2 + ReLU epilogue in f32 (VPU), stored as bf16.
    h = jnp.maximum(acc * s2_ref[...] + b2_ref[...], 0.0)
    o_ref[0] = h.reshape(Ho, Wo, tc).astype(o_ref.dtype)


def _conv2_add_kernel(h_ref, w_ref, r_ref, o_ref, *, Ho, Wo):
    # equalInOut branch: out = conv2(h) + x
    # h_ref : (1, Ho+2, Wo+2, Cm) bf16   padded conv1 output
    # w_ref : (3, 3, Cm, TC)      bf16
    # r_ref : (1, Ho, Wo, TC)     f32    residual (original x)
    cm = h_ref.shape[-1]
    tc = o_ref.shape[-1]
    h = h_ref[0]
    w = w_ref[...]
    acc = jnp.zeros((Ho * Wo, tc), jnp.float32)
    for kh in range(3):
        for kw in range(3):
            patch = h[kh:kh + Ho, kw:kw + Wo, :].reshape(Ho * Wo, cm)
            acc = acc + jnp.dot(patch, w[kh, kw],
                                preferred_element_type=jnp.float32)
    out = acc.reshape(Ho, Wo, tc) + r_ref[0]          # fused residual add (f32)
    o_ref[0] = out.astype(o_ref.dtype)


def _conv2_shortcut_kernel(h_ref, w_ref, a_ref, wsc_ref, o_ref, *, stride, Ho, Wo):
    # non-equal branch: out = conv2(h) + convShortcut(relu1(bn1(x)))
    # a_ref   : (s*s, Hp, Wp, Cin) bf16  same phase tensor as kernel 1
    # wsc_ref : (Cin, TC)          bf16  1x1 shortcut conv weights
    cm = h_ref.shape[-1]
    cin = a_ref.shape[-1]
    tc = o_ref.shape[-1]
    h = h_ref[0]
    w = w_ref[...]
    acc = jnp.zeros((Ho * Wo, tc), jnp.float32)
    for kh in range(3):
        for kw in range(3):
            patch = h[kh:kh + Ho, kw:kw + Wo, :].reshape(Ho * Wo, cm)
            acc = acc + jnp.dot(patch, w[kh, kw],
                                preferred_element_type=jnp.float32)
    # Strided 1x1 shortcut == contiguous slice of one phase plane + matmul.
    p_sc = (1 % stride) * stride + (1 % stride)
    d_sc = 1 // stride
    xs = a_ref[p_sc]
    xs = xs[d_sc:d_sc + Ho, d_sc:d_sc + Wo, :].reshape(Ho * Wo, cin)
    acc = acc + jnp.dot(xs, wsc_ref[...], preferred_element_type=jnp.float32)
    o_ref[0] = acc.reshape(Ho, Wo, tc).astype(o_ref.dtype)


# ----------------------------------------------------------------------------
# Pallas wrappers
# ----------------------------------------------------------------------------
_PAR2 = pltpu.CompilerParams(dimension_semantics=("parallel", "parallel"))


def conv1_bn2_relu(actP, w1, s2, b2, *, stride, Ho, Wo):
    nss, hp, wp, cin = actP.shape
    n = nss // (stride * stride)
    cm = w1.shape[-1]
    tc = _cout_tile(cm)
    kernel = functools.partial(_conv1_bn_relu_kernel, stride=stride, Ho=Ho, Wo=Wo)
    return pl.pallas_call(
        kernel,
        out_shape=jax.ShapeDtypeStruct((n, Ho, Wo, cm), jnp.bfloat16),
        grid=(n, cm // tc),
        in_specs=[
            pl.BlockSpec((stride * stride, hp, wp, cin), lambda i, c: (i, 0, 0, 0)),
            pl.BlockSpec((3, 3, cin, tc), lambda i, c: (0, 0, 0, c)),
            pl.BlockSpec((1, tc), lambda i, c: (0, c)),
            pl.BlockSpec((1, tc), lambda i, c: (0, c)),
        ],
        out_specs=pl.BlockSpec((1, Ho, Wo, tc), lambda i, c: (i, 0, 0, c)),
        compiler_params=_PAR2,
    )(actP, w1, s2.reshape(1, cm).astype(jnp.float32),
      b2.reshape(1, cm).astype(jnp.float32))


def conv2_add_residual(h_pad, w2, x_res, *, Ho, Wo):
    n, _, _, cm = h_pad.shape
    cout = w2.shape[-1]
    tc = _cout_tile(cout)
    kernel = functools.partial(_conv2_add_kernel, Ho=Ho, Wo=Wo)
    return pl.pallas_call(
        kernel,
        out_shape=jax.ShapeDtypeStruct((n, Ho, Wo, cout), jnp.float32),
        grid=(n, cout // tc),
        in_specs=[
            pl.BlockSpec((1, Ho + 2, Wo + 2, cm), lambda i, c: (i, 0, 0, 0)),
            pl.BlockSpec((3, 3, cm, tc), lambda i, c: (0, 0, 0, c)),
            pl.BlockSpec((1, Ho, Wo, tc), lambda i, c: (i, 0, 0, c)),
        ],
        out_specs=pl.BlockSpec((1, Ho, Wo, tc), lambda i, c: (i, 0, 0, c)),
        compiler_params=_PAR2,
    )(h_pad, w2, x_res)


def conv2_add_shortcut(h_pad, w2, actP, wsc, *, stride, Ho, Wo):
    n, _, _, cm = h_pad.shape
    _, hp, wp, cin = actP.shape
    cout = w2.shape[-1]
    tc = _cout_tile(cout)
    kernel = functools.partial(_conv2_shortcut_kernel, stride=stride, Ho=Ho, Wo=Wo)
    return pl.pallas_call(
        kernel,
        out_shape=jax.ShapeDtypeStruct((n, Ho, Wo, cout), jnp.float32),
        grid=(n, cout // tc),
        in_specs=[
            pl.BlockSpec((1, Ho + 2, Wo + 2, cm), lambda i, c: (i, 0, 0, 0)),
            pl.BlockSpec((3, 3, cm, tc), lambda i, c: (0, 0, 0, c)),
            pl.BlockSpec((stride * stride, hp, wp, cin), lambda i, c: (i, 0, 0, 0)),
            pl.BlockSpec((cin, tc), lambda i, c: (0, c)),
        ],
        out_specs=pl.BlockSpec((1, Ho, Wo, tc), lambda i, c: (i, 0, 0, c)),
        compiler_params=_PAR2,
    )(h_pad, w2, actP, wsc)


# ----------------------------------------------------------------------------
# BasicBlock parameters + forward
# ----------------------------------------------------------------------------
def init_basic_block_params(key, in_planes, out_planes):
    eps = 1e-5
    ks = jax.random.split(key, 11)

    def folded_bn(k0, k1, k2, k3, c):
        gamma = 1.0 + 0.1 * jax.random.normal(k0, (c,), jnp.float32)
        beta = 0.1 * jax.random.normal(k1, (c,), jnp.float32)
        mean = 0.1 * jax.random.normal(k2, (c,), jnp.float32)
        var = jax.random.uniform(k3, (c,), jnp.float32, minval=0.5, maxval=1.5)
        scale = gamma * lax.rsqrt(var + eps)
        return scale, beta - mean * scale

    s1, b1 = folded_bn(ks[0], ks[1], ks[2], ks[3], in_planes)
    s2, b2 = folded_bn(ks[4], ks[5], ks[6], ks[7], out_planes)
    params = {
        "bn1_scale": s1, "bn1_bias": b1,
        "bn2_scale": s2, "bn2_bias": b2,
        "conv1_w": 0.1 * jax.random.normal(
            ks[8], (3, 3, in_planes, out_planes), jnp.float32),
        "conv2_w": 0.1 * jax.random.normal(
            ks[9], (3, 3, out_planes, out_planes), jnp.float32),
    }
    if in_planes != out_planes:
        params["convsc_w"] = 0.1 * jax.random.normal(
            ks[10], (in_planes, out_planes), jnp.float32)
    return params


def _basic_block_forward(x_nchw, params, stride, in_planes, out_planes):
    assert stride in (1, 2), "WideResNet BasicBlock uses stride 1 or 2"
    equal_in_out = in_planes == out_planes
    assert (not equal_in_out) or stride == 1, "identity shortcut needs stride 1"

    # NCHW -> NHWC once at the block boundary (hoist out in a full network).
    x = jnp.transpose(x_nchw, (0, 2, 3, 1)).astype(jnp.float32)
    N, H, W, _ = x.shape
    assert H % stride == 0 and W % stride == 0
    Ho, Wo = H // stride, W // stride

    # relu1(bn1(x)) + zero pad + space-to-depth: one fused XLA pre-pass that
    # reads x (f32) and writes the bf16 phase tensor feeding both convs.
    act = jnp.maximum(x * params["bn1_scale"] + params["bn1_bias"], 0.0)
    act_pad = jnp.pad(act, ((0, 0), (1, 1), (1, 1), (0, 0)))
    actP = _phase_split(act_pad, stride).astype(jnp.bfloat16)

    # Kernel 1: conv1 (strided, direct) + BN2 + ReLU epilogue -> bf16 h.
    w1 = params["conv1_w"].astype(jnp.bfloat16)
    h = conv1_bn2_relu(actP, w1, params["bn2_scale"], params["bn2_bias"],
                       stride=stride, Ho=Ho, Wo=Wo)

    # droprate == 0.0 -> identity (see TODO at top for p > 0).

    # Kernel 2: conv2 (stride 1) fused with the residual add / 1x1 shortcut.
    h_pad = jnp.pad(h, ((0, 0), (1, 1), (1, 1), (0, 0)))
    w2 = params["conv2_w"].astype(jnp.bfloat16)
    if equal_in_out:
        y = conv2_add_residual(h_pad, w2, x, Ho=Ho, Wo=Wo)
    else:
        wsc = params["convsc_w"].astype(jnp.bfloat16)
        y = conv2_add_shortcut(h_pad, w2, actP, wsc, stride=stride, Ho=Ho, Wo=Wo)

    return jnp.transpose(y, (0, 3, 1, 2))              # NHWC -> NCHW


basic_block_forward = jax.jit(_basic_block_forward, static_argnums=(2, 3, 4))


# ----------------------------------------------------------------------------
# Pure-JAX reference (lax.conv) matching the kernel's bf16-MXU / f32-acc path
# ----------------------------------------------------------------------------
def reference_forward(x_nchw, params, stride, in_planes, out_planes):
    def conv_ref(a, w_hwio, st, pad):
        return lax.conv_general_dilated(
            a, w_hwio, (st, st), [(pad, pad), (pad, pad)],
            dimension_numbers=("NHWC", "HWIO", "NHWC"),
            preferred_element_type=jnp.float32)

    equal_in_out = in_planes == out_planes
    x = jnp.transpose(x_nchw, (0, 2, 3, 1)).astype(jnp.float32)
    act = jnp.maximum(x * params["bn1_scale"] + params["bn1_bias"], 0.0)
    act_b = act.astype(jnp.bfloat16)
    out = conv_ref(act_b, params["conv1_w"].astype(jnp.bfloat16), stride, 1)
    out = jnp.maximum(out * params["bn2_scale"] + params["bn2_bias"], 0.0)
    out = conv_ref(out.astype(jnp.bfloat16),
                   params["conv2_w"].astype(jnp.bfloat16), 1, 1)
    if equal_in_out:
        short = x
    else:
        wsc = params["convsc_w"].astype(jnp.bfloat16).reshape(
            1, 1, in_planes, out_planes)
        short = conv_ref(act_b, wsc, stride, 0)
    y = short + out
    return jnp.transpose(y, (0, 3, 1, 2))


# ----------------------------------------------------------------------------
if __name__ == "__main__":
    key = jax.random.PRNGKey(0)
    kx, kp1, kp2, kp3 = jax.random.split(key, 4)

    N, Cin, H, W = 2, 4, 16, 16
    Cout = 8
    x = jax.random.normal(kx, (N, Cin, H, W), jnp.float32)

    def check(y, y_ref, shape):
        assert y.shape == shape
        err = float(jnp.max(jnp.abs(y - y_ref)))
        assert jnp.allclose(y, y_ref, atol=1e-2, rtol=1e-2), err

    # Case 1: in != out, stride 2 (convShortcut path, downsampling block).
    params = init_basic_block_params(kp1, Cin, Cout)
    y = jax.block_until_ready(basic_block_forward(x, params, 2, Cin, Cout))
    check(y, reference_forward(x, params, 2, Cin, Cout), (N, Cout, H // 2, W // 2))

    # Case 2: in == out, stride 1 (identity-shortcut block).
    params_eq = init_basic_block_params(kp2, Cin, Cin)
    y2 = jax.block_until_ready(basic_block_forward(x, params_eq, 1, Cin, Cin))
    check(y2, reference_forward(x, params_eq, 1, Cin, Cin), (N, Cin, H, W))

    # Case 3: in != out, stride 1 (first block of a WRN stage).
    params_w = init_basic_block_params(kp3, Cin, Cout)
    y3 = jax.block_until_ready(basic_block_forward(x, params_w, 1, Cin, Cout))
    check(y3, reference_forward(x, params_w, 1, Cin, Cout), (N, Cout, H, W))

    print("KERNEL_OK")
</pallas_src>

<mosaic_0001>
module attributes {stable_mosaic.version = 11 : i64} {
  func.func @_conv1_bn_relu_kernel(%arg0: i32, %arg1: i32, %arg2: memref<4x9x9x4xbf16, #tpu.memory_space<vmem>>, %arg3: memref<3x3x4x8xbf16, #tpu.memory_space<vmem>>, %arg4: memref<1x8xf32, #tpu.memory_space<vmem>>, %arg5: memref<1x8xf32, #tpu.memory_space<vmem>>, %arg6: memref<1x8x8x8xbf16, #tpu.memory_space<vmem>>) attributes {dimension_semantics = [#tpu.dimension_semantics<parallel>, #tpu.dimension_semantics<parallel>], iteration_bounds = array<i64: 2, 1>, scalar_prefetch = 0 : i64, scratch_operands = 0 : i64, tpu.core_type = #tpu.core_type<tc>, window_params = [{transform_indices = @transform_0, window_bounds = array<i64: 4, 9, 9, 4>}, {transform_indices = @transform_1, window_bounds = array<i64: 3, 3, 4, 8>}, {transform_indices = @transform_2, window_bounds = array<i64: 1, 8>}, {transform_indices = @transform_3, window_bounds = array<i64: 1, 8>}, {transform_indices = @transform_4, window_bounds = array<i64: 1, 8, 8, 8>}]} {
    %c0 = arith.constant 0 : index
    %c0_0 = arith.constant 0 : index
    %c0_1 = arith.constant 0 : index
    %c0_2 = arith.constant 0 : index
    %0 = vector.load %arg2[%c0, %c0_0, %c0_1, %c0_2] : memref<4x9x9x4xbf16, #tpu.memory_space<vmem>>, vector<4x9x9x4xbf16>
    %c0_3 = arith.constant 0 : index
    %c0_4 = arith.constant 0 : index
    %c0_5 = arith.constant 0 : index
    %c0_6 = arith.constant 0 : index
    %1 = vector.load %arg3[%c0_3, %c0_4, %c0_5, %c0_6] : memref<3x3x4x8xbf16, #tpu.memory_space<vmem>>, vector<3x3x4x8xbf16>
    %cst = arith.constant 0.000000e+00 : f32
    %2 = vector.broadcast %cst : f32 to vector<64x8xf32>
    %3 = vector.extract_strided_slice %0 {offsets = [0, 0, 0, 0], sizes = [1, 8, 8, 4], strides = [1, 1, 1, 1]} : vector<4x9x9x4xbf16> to vector<1x8x8x4xbf16>
    %4 = vector.shape_cast %3 : vector<1x8x8x4xbf16> to vector<8x8x4xbf16>
    %5 = vector.shape_cast %4 : vector<8x8x4xbf16> to vector<64x4xbf16>
    %6 = vector.extract_strided_slice %1 {offsets = [0, 0, 0, 0], sizes = [1, 1, 4, 8], strides = [1, 1, 1, 1]} : vector<3x3x4x8xbf16> to vector<1x1x4x8xbf16>
    %7 = vector.shape_cast %6 : vector<1x1x4x8xbf16> to vector<4x8xbf16>
    %cst_7 = arith.constant dense<0.000000e+00> : vector<64x8xf32>
    %8 = tpu.matmul %5, %7, %cst_7 {dimension_numbers = #tpu.dot_dimension_numbers<[1], [0], [0], [1], [0, 0, 1, 1], [], []>} : vector<64x4xbf16>, vector<4x8xbf16>, vector<64x8xf32> -> vector<64x8xf32>
    %9 = arith.addf %2, %8 : vector<64x8xf32>
    %10 = vector.extract_strided_slice %0 {offsets = [1, 0, 0, 0], sizes = [1, 8, 8, 4], strides = [1, 1, 1, 1]} : vector<4x9x9x4xbf16> to vector<1x8x8x4xbf16>
    %11 = vector.shape_cast %10 : vector<1x8x8x4xbf16> to vector<8x8x4xbf16>
    %12 = vector.shape_cast %11 : vector<8x8x4xbf16> to vector<64x4xbf16>
    %13 = vector.extract_strided_slice %1 {offsets = [0, 1, 0, 0], sizes = [1, 1, 4, 8], strides = [1, 1, 1, 1]} : vector<3x3x4x8xbf16> to vector<1x1x4x8xbf16>
    %14 = vector.shape_cast %13 : vector<1x1x4x8xbf16> to vector<4x8xbf16>
    %cst_8 = arith.constant dense<0.000000e+00> : vector<64x8xf32>
    %15 = tpu.matmul %12, %14, %cst_8 {dimension_numbers = #tpu.dot_dimension_numbers<[1], [0], [0], [1], [0, 0, 1, 1], [], []>} : vector<64x4xbf16>, vector<4x8xbf16>, vector<64x8xf32> -> vector<64x8xf32>
    %16 = arith.addf %9, %15 : vector<64x8xf32>
    %17 = vector.extract_strided_slice %0 {offsets = [0, 0, 1, 0], sizes = [1, 8, 8, 4], strides = [1, 1, 1, 1]} : vector<4x9x9x4xbf16> to vector<1x8x8x4xbf16>
    %18 = vector.shape_cast %17 : vector<1x8x8x4xbf16> to vector<8x8x4xbf16>
    %19 = vector.shape_cast %18 : vector<8x8x4xbf16> to vector<64x4xbf16>
    %20 = vector.extract_strided_slice %1 {offsets = [0, 2, 0, 0], sizes = [1, 1, 4, 8], strides = [1, 1, 1, 1]} : vector<3x3x4x8xbf16> to vector<1x1x4x8xbf16>
    %21 = vector.shape_cast %20 : vector<1x1x4x8xbf16> to vector<4x8xbf16>
    %cst_9 = arith.constant dense<0.000000e+00> : vector<64x8xf32>
    %22 = tpu.matmul %19, %21, %cst_9 {dimension_numbers = #tpu.dot_dimension_numbers<[1], [0], [0], [1], [0, 0, 1, 1], [], []>} : vector<64x4xbf16>, vector<4x8xbf16>, vector<64x8xf32> -> vector<64x8xf32>
    %23 = arith.addf %16, %22 : vector<64x8xf32>
    %24 = vector.extract_strided_slice %0 {offsets = [2, 0, 0, 0], sizes = [1, 8, 8, 4], strides = [1, 1, 1, 1]} : vector<4x9x9x4xbf16> to vector<1x8x8x4xbf16>
    %25 = vector.shape_cast %24 : vector<1x8x8x4xbf16> to vector<8x8x4xbf16>
    %26 = vector.shape_cast %25 : vector<8x8x4xbf16> to vector<64x4xbf16>
    %27 = vector.extract_strided_slice %1 {offsets = [1, 0, 0, 0], sizes = [1, 1, 4, 8], strides = [1, 1, 1, 1]} : vector<3x3x4x8xbf16> to vector<1x1x4x8xbf16>
    %28 = vector.shape_cast %27 : vector<1x1x4x8xbf16> to vector<4x8xbf16>
    %cst_10 = arith.constant dense<0.000000e+00> : vector<64x8xf32>
    %29 = tpu.matmul %26, %28, %cst_10 {dimension_numbers = #tpu.dot_dimension_numbers<[1], [0], [0], [1], [0, 0, 1, 1], [], []>} : vector<64x4xbf16>, vector<4x8xbf16>, vector<64x8xf32> -> vector<64x8xf32>
    %30 = arith.addf %23, %29 : vector<64x8xf32>
    %31 = vector.extract_strided_slice %0 {offsets = [3, 0, 0, 0], sizes = [1, 8, 8, 4], strides = [1, 1, 1, 1]} : vector<4x9x9x4xbf16> to vector<1x8x8x4xbf16>
    %32 = vector.shape_cast %31 : vector<1x8x8x4xbf16> to vector<8x8x4xbf16>
    %33 = vector.shape_cast %32 : vector<8x8x4xbf16> to vector<64x4xbf16>
    %34 = vector.extract_strided_slice %1 {offsets = [1, 1, 0, 0], sizes = [1, 1, 4, 8], strides = [1, 1, 1, 1]} : vector<3x3x4x8xbf16> to vector<1x1x4x8xbf16>
    %35 = vector.shape_cast %34 : vector<1x1x4x8xbf16> to vector<4x8xbf16>
    %cst_11 = arith.constant dense<0.000000e+00> : vector<64x8xf32>
    %36 = tpu.matmul %33, %35, %cst_11 {dimension_numbers = #tpu.dot_dimension_numbers<[1], [0], [0], [1], [0, 0, 1, 1], [], []>} : vector<64x4xbf16>, vector<4x8xbf16>, vector<64x8xf32> -> vector<64x8xf32>
    %37 = arith.addf %30, %36 : vector<64x8xf32>
    %38 = vector.extract_strided_slice %0 {offsets = [2, 0, 1, 0], sizes = [1, 8, 8, 4], strides = [1, 1, 1, 1]} : vector<4x9x9x4xbf16> to vector<1x8x8x4xbf16>
    %39 = vector.shape_cast %38 : vector<1x8x8x4xbf16> to vector<8x8x4xbf16>
    %40 = vector.shape_cast %39 : vector<8x8x4xbf16> to vector<64x4xbf16>
    %41 = vector.extract_strided_slice %1 {offsets = [1, 2, 0, 0], sizes = [1, 1, 4, 8], strides = [1, 1, 1, 1]} : vector<3x3x4x8xbf16> to vector<1x1x4x8xbf16>
    %42 = vector.shape_cast %41 : vector<1x1x4x8xbf16> to vector<4x8xbf16>
    %cst_12 = arith.constant dense<0.000000e+00> : vector<64x8xf32>
    %43 = tpu.matmul %40, %42, %cst_12 {dimension_numbers = #tpu.dot_dimension_numbers<[1], [0], [0], [1], [0, 0, 1, 1], [], []>} : vector<64x4xbf16>, vector<4x8xbf16>, vector<64x8xf32> -> vector<64x8xf32>
    %44 = arith.addf %37, %43 : vector<64x8xf32>
    %45 = vector.extract_strided_slice %0 {offsets = [0, 1, 0, 0], sizes = [1, 8, 8, 4], strides = [1, 1, 1, 1]} : vector<4x9x9x4xbf16> to vector<1x8x8x4xbf16>
    %46 = vector.shape_cast %45 : vector<1x8x8x4xbf16> to vector<8x8x4xbf16>
    %47 = vector.shape_cast %46 : vector<8x8x4xbf16> to vector<64x4xbf16>
    %48 = vector.extract_strided_slice %1 {offsets = [2, 0, 0, 0], sizes = [1, 1, 4, 8], strides = [1, 1, 1, 1]} : vector<3x3x4x8xbf16> to vector<1x1x4x8xbf16>
    %49 = vector.shape_cast %48 : vector<1x1x4x8xbf16> to vector<4x8xbf16>
    %cst_13 = arith.constant dense<0.000000e+00> : vector<64x8xf32>
    %50 = tpu.matmul %47, %49, %cst_13 {dimension_numbers = #tpu.dot_dimension_numbers<[1], [0], [0], [1], [0, 0, 1, 1], [], []>} : vector<64x4xbf16>, vector<4x8xbf16>, vector<64x8xf32> -> vector<64x8xf32>
    %51 = arith.addf %44, %50 : vector<64x8xf32>
    %52 = vector.extract_strided_slice %0 {offsets = [1, 1, 0, 0], sizes = [1, 8, 8, 4], strides = [1, 1, 1, 1]} : vector<4x9x9x4xbf16> to vector<1x8x8x4xbf16>
    %53 = vector.shape_cast %52 : vector<1x8x8x4xbf16> to vector<8x8x4xbf16>
    %54 = vector.shape_cast %53 : vector<8x8x4xbf16> to vector<64x4xbf16>
    %55 = vector.extract_strided_slice %1 {offsets = [2, 1, 0, 0], sizes = [1, 1, 4, 8], strides = [1, 1, 1, 1]} : vector<3x3x4x8xbf16> to vector<1x1x4x8xbf16>
    %56 = vector.shape_cast %55 : vector<1x1x4x8xbf16> to vector<4x8xbf16>
    %cst_14 = arith.constant dense<0.000000e+00> : vector<64x8xf32>
    %57 = tpu.matmul %54, %56, %cst_14 {dimension_numbers = #tpu.dot_dimension_numbers<[1], [0], [0], [1], [0, 0, 1, 1], [], []>} : vector<64x4xbf16>, vector<4x8xbf16>, vector<64x8xf32> -> vector<64x8xf32>
    %58 = arith.addf %51, %57 : vector<64x8xf32>
    %59 = vector.extract_strided_slice %0 {offsets = [0, 1, 1, 0], sizes = [1, 8, 8, 4], strides = [1, 1, 1, 1]} : vector<4x9x9x4xbf16> to vector<1x8x8x4xbf16>
    %60 = vector.shape_cast %59 : vector<1x8x8x4xbf16> to vector<8x8x4xbf16>
    %61 = vector.shape_cast %60 : vector<8x8x4xbf16> to vector<64x4xbf16>
    %62 = vector.extract_strided_slice %1 {offsets = [2, 2, 0, 0], sizes = [1, 1, 4, 8], strides = [1, 1, 1, 1]} : vector<3x3x4x8xbf16> to vector<1x1x4x8xbf16>
    %63 = vector.shape_cast %62 : vector<1x1x4x8xbf16> to vector<4x8xbf16>
    %cst_15 = arith.constant dense<0.000000e+00> : vector<64x8xf32>
    %64 = tpu.matmul %61, %63, %cst_15 {dimension_numbers = #tpu.dot_dimension_numbers<[1], [0], [0], [1], [0, 0, 1, 1], [], []>} : vector<64x4xbf16>, vector<4x8xbf16>, vector<64x8xf32> -> vector<64x8xf32>
    %65 = arith.addf %58, %64 : vector<64x8xf32>
    %c0_16 = arith.constant 0 : index
    %c0_17 = arith.constant 0 : index
    %66 = vector.load %arg4[%c0_16, %c0_17] : memref<1x8xf32, #tpu.memory_space<vmem>>, vector<1x8xf32>
    %67 = vector.broadcast %66 : vector<1x8xf32> to vector<64x8xf32>
    %68 = arith.mulf %65, %67 : vector<64x8xf32>
    %c0_18 = arith.constant 0 : index
    %c0_19 = arith.constant 0 : index
    %69 = vector.load %arg5[%c0_18, %c0_19] : memref<1x8xf32, #tpu.memory_space<vmem>>, vector<1x8xf32>
    %70 = vector.broadcast %69 : vector<1x8xf32> to vector<64x8xf32>
    %71 = arith.addf %68, %70 : vector<64x8xf32>
    %cst_20 = arith.constant 0.000000e+00 : f32
    %72 = vector.broadcast %cst_20 : f32 to vector<64x8xf32>
    %73 = arith.maximumf %71, %72 : vector<64x8xf32>
    %74 = vector.shape_cast %73 : vector<64x8xf32> to vector<8x8x8xf32>
    %75 = arith.truncf %74 : vector<8x8x8xf32> to vector<8x8x8xbf16>
    %c0_21 = arith.constant 0 : index
    %c0_22 = arith.constant 0 : index
    %c0_23 = arith.constant 0 : index
    %c0_24 = arith.constant 0 : index
    %76 = vector.load %arg6[%c0_21, %c0_22, %c0_23, %c0_24] : memref<1x8x8x8xbf16, #tpu.memory_space<vmem>>, vector<1x8x8x8xbf16>
    %77 = vector.shape_cast %76 : vector<1x8x8x8xbf16> to vector<8x8x8xbf16>
    %78 = vector.shape_cast %75 : vector<8x8x8xbf16> to vector<1x8x8x8xbf16>
    tpu.vector_store %arg6[%c0_21, %c0_22, %c0_23, %c0_24], %78 {strides = array<i32>} : memref<1x8x8x8xbf16, #tpu.memory_space<vmem>>, vector<1x8x8x8xbf16>,
    return
  }
  func.func @transform_0(%arg0: i32, %arg1: i32) -> (i32, i32, i32, i32) {
    %c0_i32 = arith.constant 0 : i32
    %c0_i32_0 = arith.constant 0 : i32
    %c0_i32_1 = arith.constant 0 : i32
    %c0_i32_2 = arith.constant 0 : i32
    return %arg0, %c0_i32, %c0_i32_0, %c0_i32_1 : i32, i32, i32, i32
  }
  func.func @transform_1(%arg0: i32, %arg1: i32) -> (i32, i32, i32, i32) {
    %c0_i32 = arith.constant 0 : i32
    %c0_i32_0 = arith.constant 0 : i32
    %c0_i32_1 = arith.constant 0 : i32
    %c0_i32_2 = arith.constant 0 : i32
    return %c0_i32, %c0_i32_0, %c0_i32_1, %arg1 : i32, i32, i32, i32
  }
  func.func @transform_2(%arg0: i32, %arg1: i32) -> (i32, i32) {
    %c0_i32 = arith.constant 0 : i32
    %c0_i32_0 = arith.constant 0 : i32
    return %c0_i32, %arg1 : i32, i32
  }
  func.func @transform_3(%arg0: i32, %arg1: i32) -> (i32, i32) {
    %c0_i32 = arith.constant 0 : i32
    %c0_i32_0 = arith.constant 0 : i32
    return %c0_i32, %arg1 : i32, i32
  }
  func.func @transform_4(%arg0: i32, %arg1: i32) -> (i32, i32, i32, i32) {
    %c0_i32 = arith.constant 0 : i32
    %c0_i32_0 = arith.constant 0 : i32
    %c0_i32_1 = arith.constant 0 : i32
    return %arg0, %c0_i32, %c0_i32_0, %arg1 : i32, i32, i32, i32
  }
}

module attributes {stable_mosaic.version = 11 : i64} {
  func.func @_conv2_shortcut_kernel(%arg0: i32, %arg1: i32, %arg2: memref<1x10x10x8xbf16, #tpu.memory_space<vmem>>, %arg3: memref<3x3x8x8xbf16, #tpu.memory_space<vmem>>, %arg4: memref<4x9x9x4xbf16, #tpu.memory_space<vmem>>, %arg5: memref<4x8xbf16, #tpu.memory_space<vmem>>, %arg6: memref<1x8x8x8xf32, #tpu.memory_space<vmem>>) attributes {dimension_semantics = [#tpu.dimension_semantics<parallel>, #tpu.dimension_semantics<parallel>], iteration_bounds = array<i64: 2, 1>, scalar_prefetch = 0 : i64, scratch_operands = 0 : i64, tpu.core_type = #tpu.core_type<tc>, window_params = [{transform_indices = @transform_0, window_bounds = array<i64: 1, 10, 10, 8>}, {transform_indices = @transform_1, window_bounds = array<i64: 3, 3, 8, 8>}, {transform_indices = @transform_2, window_bounds = array<i64: 4, 9, 9, 4>}, {transform_indices = @transform_3, window_bounds = array<i64: 4, 8>}, {transform_indices = @transform_4, window_bounds = array<i64: 1, 8, 8, 8>}]} {
    %c0 = arith.constant 0 : index
    %c0_0 = arith.constant 0 : index
    %c0_1 = arith.constant 0 : index
    %c0_2 = arith.constant 0 : index
    %0 = vector.load %arg2[%c0, %c0_0, %c0_1, %c0_2] : memref<1x10x10x8xbf16, #tpu.memory_space<vmem>>, vector<1x10x10x8xbf16>
    %1 = vector.shape_cast %0 : vector<1x10x10x8xbf16> to vector<10x10x8xbf16>
    %c0_3 = arith.constant 0 : index
    %c0_4 = arith.constant 0 : index
    %c0_5 = arith.constant 0 : index
    %c0_6 = arith.constant 0 : index
    %2 = vector.load %arg3[%c0_3, %c0_4, %c0_5, %c0_6] : memref<3x3x8x8xbf16, #tpu.memory_space<vmem>>, vector<3x3x8x8xbf16>
    %cst = arith.constant 0.000000e+00 : f32
    %3 = vector.broadcast %cst : f32 to vector<64x8xf32>
    %4 = vector.extract_strided_slice %1 {offsets = [0, 0, 0], sizes = [8, 8, 8], strides = [1, 1, 1]} : vector<10x10x8xbf16> to vector<8x8x8xbf16>
    %5 = vector.shape_cast %4 : vector<8x8x8xbf16> to vector<64x8xbf16>
    %6 = vector.extract_strided_slice %2 {offsets = [0, 0, 0, 0], sizes = [1, 1, 8, 8], strides = [1, 1, 1, 1]} : vector<3x3x8x8xbf16> to vector<1x1x8x8xbf16>
    %7 = vector.shape_cast %6 : vector<1x1x8x8xbf16> to vector<8x8xbf16>
    %cst_7 = arith.constant dense<0.000000e+00> : vector<64x8xf32>
    %8 = tpu.matmul %5, %7, %cst_7 {dimension_numbers = #tpu.dot_dimension_numbers<[1], [0], [0], [1], [0, 0, 1, 1], [], []>} : vector<64x8xbf16>, vector<8x8xbf16>, vector<64x8xf32> -> vector<64x8xf32>
    %9 = arith.addf %3, %8 : vector<64x8xf32>
    %10 = vector.extract_strided_slice %1 {offsets = [0, 1, 0], sizes = [8, 8, 8], strides = [1, 1, 1]} : vector<10x10x8xbf16> to vector<8x8x8xbf16>
    %11 = vector.shape_cast %10 : vector<8x8x8xbf16> to vector<64x8xbf16>
    %12 = vector.extract_strided_slice %2 {offsets = [0, 1, 0, 0], sizes = [1, 1, 8, 8], strides = [1, 1, 1, 1]} : vector<3x3x8x8xbf16> to vector<1x1x8x8xbf16>
    %13 = vector.shape_cast %12 : vector<1x1x8x8xbf16> to vector<8x8xbf16>
    %cst_8 = arith.constant dense<0.000000e+00> : vector<64x8xf32>
    %14 = tpu.matmul %11, %13, %cst_8 {dimension_numbers = #tpu.dot_dimension_numbers<[1], [0], [0], [1], [0, 0, 1, 1], [], []>} : vector<64x8xbf16>, vector<8x8xbf16>, vector<64x8xf32> -> vector<64x8xf32>
    %15 = arith.addf %9, %14 : vector<64x8xf32>
    %16 = vector.extract_strided_slice %1 {offsets = [0, 2, 0], sizes = [8, 8, 8], strides = [1, 1, 1]} : vector<10x10x8xbf16> to vector<8x8x8xbf16>
    %17 = vector.shape_cast %16 : vector<8x8x8xbf16> to vector<64x8xbf16>
    %18 = vector.extract_strided_slice %2 {offsets = [0, 2, 0, 0], sizes = [1, 1, 8, 8], strides = [1, 1, 1, 1]} : vector<3x3x8x8xbf16> to vector<1x1x8x8xbf16>
    %19 = vector.shape_cast %18 : vector<1x1x8x8xbf16> to vector<8x8xbf16>
    %cst_9 = arith.constant dense<0.000000e+00> : vector<64x8xf32>
    %20 = tpu.matmul %17, %19, %cst_9 {dimension_numbers = #tpu.dot_dimension_numbers<[1], [0], [0], [1], [0, 0, 1, 1], [], []>} : vector<64x8xbf16>, vector<8x8xbf16>, vector<64x8xf32> -> vector<64x8xf32>
    %21 = arith.addf %15, %20 : vector<64x8xf32>
    %22 = vector.extract_strided_slice %1 {offsets = [1, 0, 0], sizes = [8, 8, 8], strides = [1, 1, 1]} : vector<10x10x8xbf16> to vector<8x8x8xbf16>
    %23 = vector.shape_cast %22 : vector<8x8x8xbf16> to vector<64x8xbf16>
    %24 = vector.extract_strided_slice %2 {offsets = [1, 0, 0, 0], sizes = [1, 1, 8, 8], strides = [1, 1, 1, 1]} : vector<3x3x8x8xbf16> to vector<1x1x8x8xbf16>
    %25 = vector.shape_cast %24 : vector<1x1x8x8xbf16> to vector<8x8xbf16>
    %cst_10 = arith.constant dense<0.000000e+00> : vector<64x8xf32>
    %26 = tpu.matmul %23, %25, %cst_10 {dimension_numbers = #tpu.dot_dimension_numbers<[1], [0], [0], [1], [0, 0, 1, 1], [], []>} : vector<64x8xbf16>, vector<8x8xbf16>, vector<64x8xf32> -> vector<64x8xf32>
    %27 = arith.addf %21, %26 : vector<64x8xf32>
    %28 = vector.extract_strided_slice %1 {offsets = [1, 1, 0], sizes = [8, 8, 8], strides = [1, 1, 1]} : vector<10x10x8xbf16> to vector<8x8x8xbf16>
    %29 = vector.shape_cast %28 : vector<8x8x8xbf16> to vector<64x8xbf16>
    %30 = vector.extract_strided_slice %2 {offsets = [1, 1, 0, 0], sizes = [1, 1, 8, 8], strides = [1, 1, 1, 1]} : vector<3x3x8x8xbf16> to vector<1x1x8x8xbf16>
    %31 = vector.shape_cast %30 : vector<1x1x8x8xbf16> to vector<8x8xbf16>
    %cst_11 = arith.constant dense<0.000000e+00> : vector<64x8xf32>
    %32 = tpu.matmul %29, %31, %cst_11 {dimension_numbers = #tpu.dot_dimension_numbers<[1], [0], [0], [1], [0, 0, 1, 1], [], []>} : vector<64x8xbf16>, vector<8x8xbf16>, vector<64x8xf32> -> vector<64x8xf32>
    %33 = arith.addf %27, %32 : vector<64x8xf32>
    %34 = vector.extract_strided_slice %1 {offsets = [1, 2, 0], sizes = [8, 8, 8], strides = [1, 1, 1]} : vector<10x10x8xbf16> to vector<8x8x8xbf16>
    %35 = vector.shape_cast %34 : vector<8x8x8xbf16> to vector<64x8xbf16>
    %36 = vector.extract_strided_slice %2 {offsets = [1, 2, 0, 0], sizes = [1, 1, 8, 8], strides = [1, 1, 1, 1]} : vector<3x3x8x8xbf16> to vector<1x1x8x8xbf16>
    %37 = vector.shape_cast %36 : vector<1x1x8x8xbf16> to vector<8x8xbf16>
    %cst_12 = arith.constant dense<0.000000e+00> : vector<64x8xf32>
    %38 = tpu.matmul %35, %37, %cst_12 {dimension_numbers = #tpu.dot_dimension_numbers<[1], [0], [0], [1], [0, 0, 1, 1], [], []>} : vector<64x8xbf16>, vector<8x8xbf16>, vector<64x8xf32> -> vector<64x8xf32>
    %39 = arith.addf %33, %38 : vector<64x8xf32>
    %40 = vector.extract_strided_slice %1 {offsets = [2, 0, 0], sizes = [8, 8, 8], strides = [1, 1, 1]} : vector<10x10x8xbf16> to vector<8x8x8xbf16>
    %41 = vector.shape_cast %40 : vector<8x8x8xbf16> to vector<64x8xbf16>
    %42 = vector.extract_strided_slice %2 {offsets = [2, 0, 0, 0], sizes = [1, 1, 8, 8], strides = [1, 1, 1, 1]} : vector<3x3x8x8xbf16> to vector<1x1x8x8xbf16>
    %43 = vector.shape_cast %42 : vector<1x1x8x8xbf16> to vector<8x8xbf16>
    %cst_13 = arith.constant dense<0.000000e+00> : vector<64x8xf32>
    %44 = tpu.matmul %41, %43, %cst_13 {dimension_numbers = #tpu.dot_dimension_numbers<[1], [0], [0], [1], [0, 0, 1, 1], [], []>} : vector<64x8xbf16>, vector<8x8xbf16>, vector<64x8xf32> -> vector<64x8xf32>
    %45 = arith.addf %39, %44 : vector<64x8xf32>
    %46 = vector.extract_strided_slice %1 {offsets = [2, 1, 0], sizes = [8, 8, 8], strides = [1, 1, 1]} : vector<10x10x8xbf16> to vector<8x8x8xbf16>
    %47 = vector.shape_cast %46 : vector<8x8x8xbf16> to vector<64x8xbf16>
    %48 = vector.extract_strided_slice %2 {offsets = [2, 1, 0, 0], sizes = [1, 1, 8, 8], strides = [1, 1, 1, 1]} : vector<3x3x8x8xbf16> to vector<1x1x8x8xbf16>
    %49 = vector.shape_cast %48 : vector<1x1x8x8xbf16> to vector<8x8xbf16>
    %cst_14 = arith.constant dense<0.000000e+00> : vector<64x8xf32>
    %50 = tpu.matmul %47, %49, %cst_14 {dimension_numbers = #tpu.dot_dimension_numbers<[1], [0], [0], [1], [0, 0, 1, 1], [], []>} : vector<64x8xbf16>, vector<8x8xbf16>, vector<64x8xf32> -> vector<64x8xf32>
    %51 = arith.addf %45, %50 : vector<64x8xf32>
    %52 = vector.extract_strided_slice %1 {offsets = [2, 2, 0], sizes = [8, 8, 8], strides = [1, 1, 1]} : vector<10x10x8xbf16> to vector<8x8x8xbf16>
    %53 = vector.shape_cast %52 : vector<8x8x8xbf16> to vector<64x8xbf16>
    %54 = vector.extract_strided_slice %2 {offsets = [2, 2, 0, 0], sizes = [1, 1, 8, 8], strides = [1, 1, 1, 1]} : vector<3x3x8x8xbf16> to vector<1x1x8x8xbf16>
    %55 = vector.shape_cast %54 : vector<1x1x8x8xbf16> to vector<8x8xbf16>
    %cst_15 = arith.constant dense<0.000000e+00> : vector<64x8xf32>
    %56 = tpu.matmul %53, %55, %cst_15 {dimension_numbers = #tpu.dot_dimension_numbers<[1], [0], [0], [1], [0, 0, 1, 1], [], []>} : vector<64x8xbf16>, vector<8x8xbf16>, vector<64x8xf32> -> vector<64x8xf32>
    %57 = arith.addf %51, %56 : vector<64x8xf32>
    %c3 = arith.constant 3 : index
    %c0_16 = arith.constant 0 : index
    %c0_17 = arith.constant 0 : index
    %c0_18 = arith.constant 0 : index
    %58 = vector.load %arg4[%c3, %c0_16, %c0_17, %c0_18] : memref<4x9x9x4xbf16, #tpu.memory_space<vmem>>, vector<1x9x9x4xbf16>
    %59 = vector.shape_cast %58 : vector<1x9x9x4xbf16> to vector<9x9x4xbf16>
    %60 = vector.extract_strided_slice %59 {offsets = [0, 0, 0], sizes = [8, 8, 4], strides = [1, 1, 1]} : vector<9x9x4xbf16> to vector<8x8x4xbf16>
    %61 = vector.shape_cast %60 : vector<8x8x4xbf16> to vector<64x4xbf16>
    %c0_19 = arith.constant 0 : index
    %c0_20 = arith.constant 0 : index
    %62 = vector.load %arg5[%c0_19, %c0_20] : memref<4x8xbf16, #tpu.memory_space<vmem>>, vector<4x8xbf16>
    %cst_21 = arith.constant dense<0.000000e+00> : vector<64x8xf32>
    %63 = tpu.matmul %61, %62, %cst_21 {dimension_numbers = #tpu.dot_dimension_numbers<[1], [0], [0], [1], [0, 0, 1, 1], [], []>} : vector<64x4xbf16>, vector<4x8xbf16>, vector<64x8xf32> -> vector<64x8xf32>
    %64 = arith.addf %57, %63 : vector<64x8xf32>
    %65 = vector.shape_cast %64 : vector<64x8xf32> to vector<8x8x8xf32>
    %c0_22 = arith.constant 0 : index
    %c0_23 = arith.constant 0 : index
    %c0_24 = arith.constant 0 : index
    %c0_25 = arith.constant 0 : index
    %66 = vector.load %arg6[%c0_22, %c0_23, %c0_24, %c0_25] : memref<1x8x8x8xf32, #tpu.memory_space<vmem>>, vector<1x8x8x8xf32>
    %67 = vector.shape_cast %66 : vector<1x8x8x8xf32> to vector<8x8x8xf32>
    %68 = vector.shape_cast %65 : vector<8x8x8xf32> to vector<1x8x8x8xf32>
    tpu.vector_store %arg6[%c0_22, %c0_23, %c0_24, %c0_25], %68 {strides = array<i32>} : memref<1x8x8x8xf32, #tpu.memory_space<vmem>>, vector<1x8x8x8xf32>,
    return
  }
  func.func @transform_0(%arg0: i32, %arg1: i32) -> (i32, i32, i32, i32) {
    %c0_i32 = arith.constant 0 : i32
    %c0_i32_0 = arith.constant 0 : i32
    %c0_i32_1 = arith.constant 0 : i32
    %c0_i32_2 = arith.constant 0 : i32
    return %arg0, %c0_i32, %c0_i32_0, %c0_i32_1 : i32, i32, i32, i32
  }
  func.func @transform_1(%arg0: i32, %arg1: i32) -> (i32, i32, i32, i32) {
    %c0_i32 = arith.constant 0 : i32
    %c0_i32_0 = arith.constant 0 : i32
    %c0_i32_1 = arith.constant 0 : i32
    %c0_i32_2 = arith.constant 0 : i32
    return %c0_i32, %c0_i32_0, %c0_i32_1, %arg1 : i32, i32, i32, i32
  }
  func.func @transform_2(%arg0: i32, %arg1: i32) -> (i32, i32, i32, i32) {
    %c0_i32 = arith.constant 0 : i32
    %c0_i32_0 = arith.constant 0 : i32
    %c0_i32_1 = arith.constant 0 : i32
    %c0_i32_2 = arith.constant 0 : i32
    return %arg0, %c0_i32, %c0_i32_0, %c0_i32_1 : i32, i32, i32, i32
  }
  func.func @transform_3(%arg0: i32, %arg1: i32) -> (i32, i32) {
    %c0_i32 = arith.constant 0 : i32
    %c0_i32_0 = arith.constant 0 : i32
    return %c0_i32, %arg1 : i32, i32
  }
  func.func @transform_4(%arg0: i32, %arg1: i32) -> (i32, i32, i32, i32) {
    %c0_i32 = arith.constant 0 : i32
    %c0_i32_0 = arith.constant 0 : i32
    %c0_i32_1 = arith.constant 0 : i32
    return %arg0, %c0_i32, %c0_i32_0, %arg1 : i32, i32, i32, i32
  }
}

</mosaic_0001>

<llo_original>
// kernel: _basic_block_forward.2
$region0: #{_basic_block_forward.2}
  #allocation0 [shape = 'u32[]', space=smem, size = 0x4, offset = 0x4, fixed_abs, tag = 'smem constant byte address 0x4 - core index']
  #allocation1 [shape = 'u32[144,128]{1,0:T(1,128)}', space=vmem, size = 0x12000, scoped, tag = 'internal scratch']
  %s0 = inlined_call_operand.vmem [shape: bf16[8,9,9,4], index: 0, kind: input, shape index: {}]
  %s1 = inlined_call_operand.vmem [shape: bf16[3,3,4,8], index: 1, kind: input, shape index: {}]
  %s2 = inlined_call_operand.vmem [shape: f32[1,8], index: 2, kind: input, shape index: {}]
  %s3 = inlined_call_operand.vmem [shape: f32[1,8], index: 3, kind: input, shape index: {}]
  %s4 = inlined_call_operand.vmem [shape: bf16[2,8,8,8], index: 4, kind: output, shape index: {}]
  %s5 = sld [smem:[#allocation0]]
  $region49: #{_basic_block_forward.2} parent=0
    _
  %s7 = ssub.s32 1, %s5
  %s8 = scalar_select 0, %s7, %s5
  loop: start=0, step=1, limit=4
  $region2: #{_basic_block_forward.2} parent=0 // loop_pre_header
    _
  $region3: #{_basic_block_forward.2} parent=0 // loop_header
    %s10 = sphi 0, %s14
    %p11 = scmp.ge.s32.totalorder %s10, 4
    %s17 = sphi 0, %s29
    %s18 = sphi 0, %s25
    %s19 = sphi 0, %s17
    %s20 = sphi 0, %s18
    %s21 = sphi 0, %s19
    %s22 = sphi 0, %s20
    %s32 = sphi 0, %s34
    %s35 = sphi 0, %s32
    %s36 = sphi 0, %s35
    %s52 = sphi 0, %s36
    %s58 = sphi 0, %s60
    %s61 = sphi 0, %s58
    %s62 = sphi 0, %s61
    %s78 = sphi 0, %s62
    %s84 = sphi 0, %s86
    %s87 = sphi 0, %s84
    %s88 = sphi 0, %s87
    %s104 = sphi 0, %s88
    %s110 = sphi 0, %s112
    %s113 = sphi 0, %s110
    %s114 = sphi 0, %s113
    %s130 = sphi 0, %s114
    %s138 = sphi 0, %s140
    %s141 = sphi 0, %s138
    %s142 = sphi 0, %s141
    %s158 = sphi 0, %s142
  $region4: #{_basic_block_forward.2} parent=0 // loop_header_branch
    %13 = sbr.rel (%p11) target = $region8
  $region5: #{_basic_block_forward.2} parent=0 // loop_body
    %s15 = ssub.s32 %s10, 1
    %s16 = ssub.s32 %s10, 2
    %s23 = sadd.s32 1, %s18
    %p24 = scmp.ge.s32.totalorder %s23, 1
    %s25 = scalar_select %p24, 0, %s23
    %s26 = sadd.s32 1, %s17
    %s27 = scalar_select %p24, %s26, %s17
    %p28 = scmp.ge.s32.totalorder %s27, 2
    %s29 = scalar_select %p28, 0, %s27
    %s30 = ssub.s32 %s17, %s29
    %p31 = scmp.eq.s32.totalorder %s30, 0
    %s33 = sadd.s32 %s32, 1
    %s34 = scalar_select %p31, %s32, %s33
    %p37 = pneg %p31
    %p38 = scmp.eq.s32.totalorder %s10, 1
    %p39 = por %p37, %p38
    %p40 = scmp.ne.s32.totalorder %s32, %s35
    %p41 = scmp.eq.s32.totalorder %s10, 0
    %p42 = por %p40, %p41
    %p43 = scmp.ne.s32.totalorder %s32, %s35
    %p44 = scmp.eq.s32.totalorder %s15, 1
    %p45 = por %p43, %p44
    %p46 = scmp.ne.s32.totalorder %s35, %s36
    %p47 = scmp.eq.s32.totalorder %s15, 0
    %p48 = por %p46, %p47
    %p49 = scmp.ne.s32.totalorder %s35, %s36
    %p50 = scmp.eq.s32.totalorder %s16, 1
    %p51 = por %p49, %p50
    %p53 = scmp.ne.s32.totalorder %s36, %s52
    %p54 = scmp.eq.s32.totalorder %s16, 0
    %p55 = por %p53, %p54
    %s56 = ssub.s32 %s18, %s25
    %p57 = scmp.eq.s32.totalorder %s56, 0
    %s59 = sadd.s32 %s58, 1
    %s60 = scalar_select %p57, %s58, %s59
    %p63 = pneg %p57
    %p64 = scmp.eq.s32.totalorder %s10, 1
    %p65 = por %p63, %p64
    %p66 = scmp.ne.s32.totalorder %s58, %s61
    %p67 = scmp.eq.s32.totalorder %s10, 0
    %p68 = por %p66, %p67
    %p69 = scmp.ne.s32.totalorder %s58, %s61
    %p70 = scmp.eq.s32.totalorder %s15, 1
    %p71 = por %p69, %p70
    %p72 = scmp.ne.s32.totalorder %s61, %s62
    %p73 = scmp.eq.s32.totalorder %s15, 0
    %p74 = por %p72, %p73
    %p75 = scmp.ne.s32.totalorder %s61, %s62
    %p76 = scmp.eq.s32.totalorder %s16, 1
    %p77 = por %p75, %p76
    %p79 = scmp.ne.s32.totalorder %s62, %s78
    %p80 = scmp.eq.s32.totalorder %s16, 0
    %p81 = por %p79, %p80
    %s82 = ssub.s32 %s18, %s25
    %p83 = scmp.eq.s32.totalorder %s82, 0
    %s85 = sadd.s32 %s84, 1
    %s86 = scalar_select %p83, %s84, %s85
    %p89 = pneg %p83
    %p90 = scmp.eq.s32.totalorder %s10, 1
    %p91 = por %p89, %p90
    %p92 = scmp.ne.s32.totalorder %s84, %s87
    %p93 = scmp.eq.s32.totalorder %s10, 0
    %p94 = por %p92, %p93
    %p95 = scmp.ne.s32.totalorder %s84, %s87
    %p96 = scmp.eq.s32.totalorder %s15, 1
    %p97 = por %p95, %p96
    %p98 = scmp.ne.s32.totalorder %s87, %s88
    %p99 = scmp.eq.s32.totalorder %s15, 0
    %p100 = por %p98, %p99
    %p101 = scmp.ne.s32.totalorder %s87, %s88
    %p102 = scmp.eq.s32.totalorder %s16, 1
    %p103 = por %p101, %p102
    %p105 = scmp.ne.s32.totalorder %s88, %s104
    %p106 = scmp.eq.s32.totalorder %s16, 0
    %p107 = por %p105, %p106
    %s108 = ssub.s32 %s18, %s25
    %p109 = scmp.eq.s32.totalorder %s108, 0
    %s111 = sadd.s32 %s110, 1
    %s112 = scalar_select %p109, %s110, %s111
    %p115 = pneg %p109
    %p116 = scmp.eq.s32.totalorder %s10, 1
    %p117 = por %p115, %p116
    %p118 = scmp.ne.s32.totalorder %s110, %s113
    %p119 = scmp.eq.s32.totalorder %s10, 0
    %p120 = por %p118, %p119
    %p121 = scmp.ne.s32.totalorder %s110, %s113
    %p122 = scmp.eq.s32.totalorder %s15, 1
    %p123 = por %p121, %p122
    %p124 = scmp.ne.s32.totalorder %s113, %s114
    %p125 = scmp.eq.s32.totalorder %s15, 0
    %p126 = por %p124, %p125
    %p127 = scmp.ne.s32.totalorder %s113, %s114
    %p128 = scmp.eq.s32.totalorder %s16, 1
    %p129 = por %p127, %p128
    %p131 = scmp.ne.s32.totalorder %s114, %s130
    %p132 = scmp.eq.s32.totalorder %s16, 0
    %p133 = por %p131, %p132
    %s134 = ssub.s32 %s17, %s29
    %s135 = ssub.s32 %s18, %s25
    %s136 = sor.u32 %s134, %s135
    %p137 = scmp.eq.s32.totalorder %s136, 0
    %s139 = sadd.s32 %s138, 1
    %s140 = scalar_select %p137, %s138, %s139
    %p143 = pneg %p137
    %p144 = scmp.eq.s32.totalorder %s10, 1
    %p145 = por %p143, %p144
    %p146 = scmp.ne.s32.totalorder %s138, %s141
    %p147 = scmp.eq.s32.totalorder %s10, 0
    %p148 = por %p146, %p147
    %p149 = scmp.ne.s32.totalorder %s138, %s141
    %p150 = scmp.eq.s32.totalorder %s15, 1
    %p151 = por %p149, %p150
    %p152 = scmp.ne.s32.totalorder %s141, %s142
    %p153 = scmp.eq.s32.totalorder %s15, 0
    %p154 = por %p152, %p153
    %p155 = scmp.ne.s32.totalorder %s141, %s142
    %p156 = scmp.eq.s32.totalorder %s16, 1
    %p157 = por %p155, %p156
    %p159 = scmp.ne.s32.totalorder %s142, %s158
    %p160 = scmp.eq.s32.totalorder %s16, 0
    %p161 = por %p159, %p160
    %p162 = scmp.le.s32.totalorder 1, %s10
    %p163 = scmp.lt.s32.totalorder %s10, 3
    %p164 = pnand %p162, %p163
    %p165 = pneg %p164
    // Predicated region
    $region9: #{_basic_block_forward.2} parent=5 // pred_check
      _
    $region10: #{_basic_block_forward.2} parent=5 // pred_check_branch
      %167 = sbr.rel (%p164) target = $region12
    $region11: #{_basic_block_forward.2} parent=5 // pred_region
      %s168 = ssub.s32 %s10, 1
      // Predicated region
      $region13: #{_basic_block_forward.2} parent=11 // pred_check
        %p169 = pneg %p74
      $region14: #{_basic_block_forward.2} parent=11 // pred_check_branch
        %171 = sbr.rel (%p169) target = $region16
      $region15: #{_basic_block_forward.2} parent=11 // pred_region
        %p172 = scmp.lt.s32.totalorder %s20, 0
        %s173 = scalar_select %p172, %s20, 0
        %s174 = smul.addr %s173, 2
        %s175 = scalar_lea.vmem %s1, %s174
      $region16: #{_basic_block_forward.2} parent=11 // pred_fallthru
        _
      // Predicated region
      $region17: #{_basic_block_forward.2} parent=11 // pred_check
        %p176 = pneg %p100
      $region18: #{_basic_block_forward.2} parent=11 // pred_check_branch
        %178 = sbr.rel (%p176) target = $region20
      $region19: #{_basic_block_forward.2} parent=11 // pred_region
        %p179 = scmp.lt.s32.totalorder %s20, 0
        %s180 = scalar_select %p179, %s20, 0
        %s181 = scalar_lea.vmem %s2, %s180
      $region20: #{_basic_block_forward.2} parent=11 // pred_fallthru
        _
      // Predicated region
      $region21: #{_basic_block_forward.2} parent=11 // pred_check
        %p182 = pneg %p126
      $region22: #{_basic_block_forward.2} parent=11 // pred_check_branch
        %184 = sbr.rel (%p182) target = $region24
      $region23: #{_basic_block_forward.2} parent=11 // pred_region
        %p185 = scmp.lt.s32.totalorder %s20, 0
        %s186 = scalar_select %p185, %s20, 0
        %s187 = scalar_lea.vmem %s3, %s186
      $region24: #{_basic_block_forward.2} parent=11 // pred_fallthru
        _
    $region12: #{_basic_block_forward.2} parent=5 // pred_fallthru
      _
    %p188 = scmp.lt.s32.totalorder %s10, 2
    // Predicated region
    $region25: #{_basic_block_forward.2} parent=5 // pred_check
      %p189 = pneg %p188
    $region26: #{_basic_block_forward.2} parent=5 // pred_check_branch
      %191 = sbr.rel (%p189) target = $region28
    $region27: #{_basic_block_forward.2} parent=5 // pred_region
      // Predicated region
      $region29: #{_basic_block_forward.2} parent=27 // pred_check
        %p192 = pneg %p42
      $region30: #{_basic_block_forward.2} parent=27 // pred_check_branch
        %194 = sbr.rel (%p192) target = $region32
      $region31: #{_basic_block_forward.2} parent=27 // pred_region
        %s195 = smul.u32 4, %s17
        %p196 = scmp.lt.s32.totalorder %s195, 7
        %s197 = scalar_select %p196, %s195, 7
        %s198 = smul.addr %s197, 18
        %s199 = smul.addr %s198, 4
        %s200 = scalar_lea.vmem %s0, %s199
        %s201 = smul.u32 4, %s17
      $region32: #{_basic_block_forward.2} parent=27 // pred_fallthru
        _
    $region28: #{_basic_block_forward.2} parent=5 // pred_fallthru
      _
    %p202 = scmp.le.s32.totalorder 1, %s10
    %p203 = scmp.lt.s32.totalorder %s10, 3
    %p204 = pnand %p202, %p203
    %p205 = pneg %p204
    // Predicated region
    $region33: #{_basic_block_forward.2} parent=5 // pred_check
      _
    $region34: #{_basic_block_forward.2} parent=5 // pred_check_branch
      %207 = sbr.rel (%p204) target = $region36
    $region35: #{_basic_block_forward.2} parent=5 // pred_region
      %s208 = ssub.s32 %s10, 1
      %s209 = smul.u32 4, %s19
      %p210 = scmp.lt.s32.totalorder %s209, 7
      %s211 = scalar_select %p210, %s209, 7
      %s212 = smul.addr %s211, 18
      %s213 = smul.addr %s212, 4
      %s214 = scalar_lea.vmem %s0, %s213
      %p215 = pneg %p48
      %p216 = pneg %p45
      %p217 = scmp.lt.s32.totalorder %s20, 0
      %s218 = scalar_select %p217, %s20, 0
      %s219 = smul.addr %s218, 2
      %s220 = scalar_lea.vmem %s1, %s219
      %p221 = pneg %p74
      %p222 = pneg %p71
      %p223 = scmp.lt.s32.totalorder %s20, 0
      %s224 = scalar_select %p223, %s20, 0
      %s225 = scalar_lea.vmem %s2, %s224
      %p226 = pneg %p100
      %p227 = pneg %p97
      %p228 = scmp.lt.s32.totalorder %s20, 0
      %s229 = scalar_select %p228, %s20, 0
      %s230 = scalar_lea.vmem %s3, %s229
      %p231 = pneg %p126
      %p232 = pneg %p123
      %p233 = pneg %p154
      %p234 = pneg %p151
      %p235 = scmp.lt.s32.totalorder %s19, 1
      %s236 = scalar_select %p235, %s19, 1
      %p237 = scmp.lt.s32.totalorder %s20, 0
      %s238 = scalar_select %p237, %s20, 0
      %s239 = smul.addr %s236, 8
      %s240 = sadd.s32 %s238, %s239
      %s241 = smul.addr %s240, 4
      %s242 = scalar_lea.vmem %s4, %s241
      %s243 = smul.u32 4, %s19
      %p244 = scmp.lt.s32.totalorder %s243, 7
      %s245 = scalar_select %p244, %s243, 7
      %s246 = smul.addr %s245, 18
      %s247 = smul.addr %s246, 4
      %s248 = scalar_lea.vmem %s0, %s247
      %s249 = smul.u32 4, %s19
      %p250 = scmp.lt.s32.totalorder %s20, 0
      %s251 = scalar_select %p250, %s20, 0
      %s252 = smul.addr %s251, 2
      %s253 = scalar_lea.vmem %s1, %s252
      %p254 = scmp.lt.s32.totalorder %s20, 0
      %s255 = scalar_select %p254, %s20, 0
      %s256 = scalar_lea.vmem %s2, %s255
      %p257 = scmp.lt.s32.totalorder %s20, 0
      %s258 = scalar_select %p257, %s20, 0
      %s259 = scalar_lea.vmem %s3, %s258
      %p260 = scmp.lt.s32.totalorder %s19, 1
      %s261 = scalar_select %p260, %s19, 1
      %p262 = scmp.lt.s32.totalorder %s20, 0
      %s263 = scalar_select %p262, %s20, 0
      %s264 = smul.addr %s261, 8
      %s265 = sadd.s32 %s263, %s264
      %s266 = smul.addr %s265, 4
      %s267 = scalar_lea.vmem %s4, %s266
      %v269 = vld [vmem:[%s248] sm:$0xf]
      %v270 = vld [vmem:[%s248 + $0x4] sm:$0x1]
      %v271 = vld [vmem:[%s248 + $0x8] sm:$0xf]
      %v272 = vld [vmem:[%s248 + $0xc] sm:$0x1]
      %v273 = vld [vmem:[%s248 + $0x10] sm:$0xf]
      %v274 = vld [vmem:[%s248 + $0x14] sm:$0x1]
      %v275 = vld [vmem:[%s248 + $0x18] sm:$0xf]
      %v276 = vld [vmem:[%s248 + $0x1c] sm:$0x1]
      %v277 = vld [vmem:[%s248 + $0x20] sm:$0xf]
      %v278 = vld [vmem:[%s248 + $0x24] sm:$0x1]
      %v279 = vld [vmem:[%s248 + $0x28] sm:$0xf]
      %v280 = vld [vmem:[%s248 + $0x2c] sm:$0x1]
      %v281 = vld [vmem:[%s248 + $0x30] sm:$0xf]
      %v282 = vld [vmem:[%s248 + $0x34] sm:$0x1]
      %v283 = vld [vmem:[%s248 + $0x38] sm:$0xf]
      %v284 = vld [vmem:[%s248 + $0x3c] sm:$0x1]
      %v285 = vld [vmem:[%s248 + $0x40] sm:$0xf]
      %v286 = vld [vmem:[%s248 + $0x44] sm:$0x1]
      %v287 = vld [vmem:[%s248 + $0x48] sm:$0xf]
      %v288 = vld [vmem:[%s248 + $0x50] sm:$0xf]
      %v289 = vld [vmem:[%s248 + $0x58] sm:$0xf]
      %v290 = vld [vmem:[%s248 + $0x60] sm:$0xf]
      %v291 = vld [vmem:[%s248 + $0x68] sm:$0xf]
      %v292 = vld [vmem:[%s248 + $0x70] sm:$0xf]
      %v293 = vld [vmem:[%s248 + $0x78] sm:$0xf]
      %v294 = vld [vmem:[%s248 + $0x80] sm:$0xf]
      %v295 = vld [vmem:[%s248 + $0x88] sm:$0xf]
      %v296 = vld [vmem:[%s248 + $0x90] sm:$0xf]
      %v297 = vld [vmem:[%s248 + $0x94] sm:$0x1]
      %v298 = vld [vmem:[%s248 + $0x98] sm:$0xf]
      %v299 = vld [vmem:[%s248 + $0x9c] sm:$0x1]
      %v300 = vld [vmem:[%s248 + $0xa0] sm:$0xf]
      %v301 = vld [vmem:[%s248 + $0xa4] sm:$0x1]
      %v302 = vld [vmem:[%s248 + $0xa8] sm:$0xf]
      %v303 = vld [vmem:[%s248 + $0xac] sm:$0x1]
      %v304 = vld [vmem:[%s248 + $0xb0] sm:$0xf]
      %v305 = vld [vmem:[%s248 + $0xb4] sm:$0x1]
      %v306 = vld [vmem:[%s248 + $0xb8] sm:$0xf]
      %v307 = vld [vmem:[%s248 + $0xbc] sm:$0x1]
      %v308 = vld [vmem:[%s248 + $0xc0] sm:$0xf]
      %v309 = vld [vmem:[%s248 + $0xc4] sm:$0x1]
      %v310 = vld [vmem:[%s248 + $0xc8] sm:$0xf]
      %v311 = vld [vmem:[%s248 + $0xcc] sm:$0x1]
      %v312 = vld [vmem:[%s248 + $0xd8] sm:$0xf]
      %v313 = vld [vmem:[%s248 + $0xe0] sm:$0xf]
      %v314 = vld [vmem:[%s248 + $0xe8] sm:$0xf]
      %v315 = vld [vmem:[%s248 + $0xf0] sm:$0xf]
      %v316 = vld [vmem:[%s248 + $0xf8] sm:$0xf]
      %v317 = vld [vmem:[%s248 + $0x100] sm:$0xf]
      %v318 = vld [vmem:[%s248 + $0x108] sm:$0xf]
      %v319 = vld [vmem:[%s248 + $0x110] sm:$0xf]
      %v320 = vld [vmem:[%s253] sm:$0x3]
      %v321 = vld [vmem:[%s253 + $0x2] sm:$0x3]
      %v322 = vld [vmem:[%s253 + $0x4] sm:$0x3]
      %v323 = vld [vmem:[%s253 + $0x6] sm:$0x3]
      %v324 = vld [vmem:[%s253 + $0x8] sm:$0x3]
      %v325 = vld [vmem:[%s253 + $0xa] sm:$0x3]
      %v326 = vld [vmem:[%s253 + $0xc] sm:$0x3]
      %v327 = vld [vmem:[%s253 + $0xe] sm:$0x3]
      %v328 = vld [vmem:[%s253 + $0x10] sm:$0x3]
      %v337 = vunpack.c.l.b16 %v287
      %v338 = vunpack.c.l.b16 %v288
      %v339 = vunpack.c.l.b16 %v289
      %v340 = vunpack.c.l.b16 %v290
      %v341 = vunpack.c.l.b16 %v291
      %v342 = vunpack.c.l.b16 %v292
      %v343 = vunpack.c.l.b16 %v293
      %v344 = vunpack.c.l.b16 %v294
      %v345 = vpack.c.b16 %v338, %v337
      %v346 = vpack.c.b16 %v340, %v339
      %v347 = vpack.c.b16 %v342, %v341
      %v348 = vpack.c.b16 %v344, %v343
      %vm349 = vcmask 31744
      %v351 = vsel %vm349, %v345, 0
      %v354 = vsel %vm349, %v346, 0
      %v357 = vsel %vm349, %v347, 0
      %v360 = vsel %vm349, %v348, 0
      %vm362 = vcmask 1041408
      %v364 = vsel %vm362, %v321, 0
      %366 = vmatprep.subr.bf16.mxu0 0
      %367 = vmatpush1.bf16.msra.mxu0 0
      %368 = vmatprep.subr.bf16.mxu0 0
      %369 = vmatpush1.bf16.msra.mxu0 0
      %370 = vmatprep.subr.bf16.mxu0 0
      %371 = vmatpush1.bf16.msra.mxu0 0
      %372 = vmatprep.subr.bf16.mxu0 0
      %373 = vmatpush1.bf16.msra.mxu0 0
      %374 = vmatprep.subr.bf16.mxu0 0
      %375 = vmatpush1.bf16.msra.mxu0 0
      %376 = vmatprep.subr.bf16.mxu0 0
      %377 = vmatpush1.bf16.msra.mxu0 0
      %378 = vmatprep.subr.bf16.mxu0 0
      %379 = vmatpush1.bf16.msra.mxu0 0
      %380 = vmatprep.subr.bf16.mxu0 0
      %381 = vmatpush1.bf16.msra.mxu0 %v364
      %382 = vmatprep.subr.bf16.mxu0 0
      %383 = vmatpush2.bf16.msra.mxu0 0
      %384 = vmatprep.subr.bf16.mxu0 0
      %385 = vmatpush2.bf16.msra.mxu0 0
      %386 = vmatprep.subr.bf16.mxu0 0
      %387 = vmatpush2.bf16.msra.mxu0 0
      %388 = vmatprep.subr.bf16.mxu0 0
      %389 = vmatpush2.bf16.msra.mxu0 0
      %390 = vmatprep.subr.bf16.mxu0 0
      %391 = vmatpush2.bf16.msra.mxu0 0
      %392 = vmatprep.subr.bf16.mxu0 0
      %393 = vmatpush2.bf16.msra.mxu0 0
      %394 = vmatprep.subr.bf16.mxu0 0
      %395 = vmatpush2.bf16.msra.mxu0 0
      %396 = vmatprep.subr.bf16.mxu0 0
      %397 = vmatpush2.bf16.msra.mxu0 0
      %398 = vmatprep.mubr.bf16.mxu0 0
      %399 = vmatmul.mubr.bf16.gmra.mxu0 %v351
      %v400 = vpop.f32.mrf.mxu0
      %v401 = vadd.f32 0.0, %v400
      %v402 = vpop.f32.mrf.mxu0
      %v403 = vpop.f32.mrf.mxu0
      %v404 = vadd.f32 0.0, %v403
      %v405 = vpop.f32.mrf.mxu0
      %406 = vmatprep.mubr.bf16.mxu0 0
      %407 = vmatmul.mubr.bf16.gmra.mxu0 %v354
      %v408 = vpop.f32.mrf.mxu0
      %v409 = vadd.f32 0.0, %v408
      %v410 = vpop.f32.mrf.mxu0
      %v411 = vpop.f32.mrf.mxu0
      %v412 = vadd.f32 0.0, %v411
      %v413 = vpop.f32.mrf.mxu0
      %414 = vmatprep.mubr.bf16.mxu0 0
      %415 = vmatmul.mubr.bf16.gmra.mxu0 %v357
      %v416 = vpop.f32.mrf.mxu0
      %v417 = vadd.f32 0.0, %v416
      %v418 = vpop.f32.mrf.mxu0
      %v419 = vpop.f32.mrf.mxu0
      %v420 = vadd.f32 0.0, %v419
      %v421 = vpop.f32.mrf.mxu0
      %422 = vmatprep.mubr.bf16.mxu0 0
      %423 = vmatmul.mubr.bf16.gmra.mxu0 %v360
      %v424 = vpop.f32.mrf.mxu0
      %v425 = vadd.f32 0.0, %v424
      %v426 = vpop.f32.mrf.mxu0
      %v427 = vpop.f32.mrf.mxu0
      %v428 = vadd.f32 0.0, %v427
      %v429 = vpop.f32.mrf.mxu0
      %430 = vdwg.mxu0
      %v439 = vunpack.c.l.b16 %v269
      %v440 = vunpack.c.l.b16 %v271
      %v441 = vunpack.c.l.b16 %v273
      %v442 = vunpack.c.l.b16 %v275
      %v443 = vunpack.c.l.b16 %v277
      %v444 = vunpack.c.l.b16 %v279
      %v445 = vunpack.c.l.b16 %v281
      %v446 = vunpack.c.l.b16 %v283
      %v447 = vpack.c.b16 %v440, %v439
      %v448 = vpack.c.b16 %v442, %v441
      %v449 = vpack.c.b16 %v444, %v443
      %v450 = vpack.c.b16 %v446, %v445
      %v452 = vsel %vm349, %v447, 0
      %v455 = vsel %vm349, %v448, 0
      %v458 = vsel %vm349, %v449, 0
      %v461 = vsel %vm349, %v450, 0
      %v464 = vsel %vm362, %v320, 0
      %466 = vmatprep.subr.bf16.mxu0 0
      %467 = vmatpush1.bf16.msra.mxu0 0
      %468 = vmatprep.subr.bf16.mxu0 0
      %469 = vmatpush1.bf16.msra.mxu0 0
      %470 = vmatprep.subr.bf16.mxu0 0
      %471 = vmatpush1.bf16.msra.mxu0 0
      %472 = vmatprep.subr.bf16.mxu0 0
      %473 = vmatpush1.bf16.msra.mxu0 0
      %474 = vmatprep.subr.bf16.mxu0 0
      %475 = vmatpush1.bf16.msra.mxu0 0
      %476 = vmatprep.subr.bf16.mxu0 0
      %477 = vmatpush1.bf16.msra.mxu0 0
      %478 = vmatprep.subr.bf16.mxu0 0
      %479 = vmatpush1.bf16.msra.mxu0 0
      %480 = vmatprep.subr.bf16.mxu0 0
      %481 = vmatpush1.bf16.msra.mxu0 %v464
      %482 = vmatprep.subr.bf16.mxu0 0
      %483 = vmatpush2.bf16.msra.mxu0 0
      %484 = vmatprep.subr.bf16.mxu0 0
      %485 = vmatpush2.bf16.msra.mxu0 0
      %486 = vmatprep.subr.bf16.mxu0 0
      %487 = vmatpush2.bf16.msra.mxu0 0
      %488 = vmatprep.subr.bf16.mxu0 0
      %489 = vmatpush2.bf16.msra.mxu0 0
      %490 = vmatprep.subr.bf16.mxu0 0
      %491 = vmatpush2.bf16.msra.mxu0 0
      %492 = vmatprep.subr.bf16.mxu0 0
      %493 = vmatpush2.bf16.msra.mxu0 0
      %494 = vmatprep.subr.bf16.mxu0 0
      %495 = vmatpush2.bf16.msra.mxu0 0
      %496 = vmatprep.subr.bf16.mxu0 0
      %497 = vmatpush2.bf16.msra.mxu0 0
      %498 = vmatprep.mubr.bf16.mxu0 0
      %499 = vmatmul.mubr.bf16.gmra.mxu0 %v452
      %v500 = vpop.f32.mrf.mxu0
      %v501 = vadd.f32 %v401, %v500
      %v502 = vpop.f32.mrf.mxu0
      %v503 = vpop.f32.mrf.mxu0
      %v504 = vadd.f32 %v404, %v503
      %v505 = vpop.f32.mrf.mxu0
      %506 = vmatprep.mubr.bf16.mxu0 0
      %507 = vmatmul.mubr.bf16.gmra.mxu0 %v455
      %v508 = vpop.f32.mrf.mxu0
      %v509 = vadd.f32 %v409, %v508
      %v510 = vpop.f32.mrf.mxu0
      %v511 = vpop.f32.mrf.mxu0
      %v512 = vadd.f32 %v412, %v511
      %v513 = vpop.f32.mrf.mxu0
      %514 = vmatprep.mubr.bf16.mxu0 0
      %515 = vmatmul.mubr.bf16.gmra.mxu0 %v458
      %v516 = vpop.f32.mrf.mxu0
      %v517 = vadd.f32 %v417, %v516
      %v518 = vpop.f32.mrf.mxu0
      %v519 = vpop.f32.mrf.mxu0
      %v520 = vadd.f32 %v420, %v519
      %v521 = vpop.f32.mrf.mxu0
      %522 = vmatprep.mubr.bf16.mxu0 0
      %523 = vmatmul.mubr.bf16.gmra.mxu0 %v461
      %v524 = vpop.f32.mrf.mxu0
      %v525 = vadd.f32 %v425, %v524
      %v526 = vpop.f32.mrf.mxu0
      %v527 = vpop.f32.mrf.mxu0
      %v528 = vadd.f32 %v428, %v527
      %v529 = vpop.f32.mrf.mxu0
      %530 = vdwg.mxu0
      %vm531 = vsmask.f32 3328
      %vm532 = vsmask.f32 7440
      %vm533 = vmor %vm531, %vm532
      %v535 = vshrl.u32 %v269, 16
      %v537 = vrot.slane %v535, 4
      %v538 = vshll.u32 %v269, 16
      %v540 = vrot.slane %v538, 5
      %v541 = vor.u32 %v537, %v540
      %v542 = vrot.slane %v541, 4
      %v544 = vshll.u32 %v270, 16
      %v546 = vrot.slane %v544, 5
      %v547 = vsel %vm533, %v542, %v546
      %v549 = vshrl.u32 %v271, 16
      %v551 = vrot.slane %v549, 4
      %v552 = vshll.u32 %v271, 16
      %v554 = vrot.slane %v552, 5
      %v555 = vor.u32 %v551, %v554
      %v556 = vrot.slane %v555, 4
      %v558 = vshll.u32 %v272, 16
      %v560 = vrot.slane %v558, 5
      %v561 = vsel %vm533, %v556, %v560
      %v563 = vshrl.u32 %v273, 16
      %v565 = vrot.slane %v563, 4
      %v566 = vshll.u32 %v273, 16
      %v568 = vrot.slane %v566, 5
      %v569 = vor.u32 %v565, %v568
      %v570 = vrot.slane %v569, 4
      %v572 = vshll.u32 %v274, 16
      %v574 = vrot.slane %v572, 5
      %v575 = vsel %vm533, %v570, %v574
      %v577 = vshrl.u32 %v275, 16
      %v579 = vrot.slane %v577, 4
      %v580 = vshll.u32 %v275, 16
      %v582 = vrot.slane %v580, 5
      %v583 = vor.u32 %v579, %v582
      %v584 = vrot.slane %v583, 4
      %v586 = vshll.u32 %v276, 16
      %v588 = vrot.slane %v586, 5
      %v589 = vsel %vm533, %v584, %v588
      %v591 = vshrl.u32 %v277, 16
      %v593 = vrot.slane %v591, 4
      %v594 = vshll.u32 %v277, 16
      %v596 = vrot.slane %v594, 5
      %v597 = vor.u32 %v593, %v596
      %v598 = vrot.slane %v597, 4
      %v600 = vshll.u32 %v278, 16
      %v602 = vrot.slane %v600, 5
      %v603 = vsel %vm533, %v598, %v602
      %v605 = vshrl.u32 %v279, 16
      %v607 = vrot.slane %v605, 4
      %v608 = vshll.u32 %v279, 16
      %v610 = vrot.slane %v608, 5
      %v611 = vor.u32 %v607, %v610
      %v612 = vrot.slane %v611, 4
      %v614 = vshll.u32 %v280, 16
      %v616 = vrot.slane %v614, 5
      %v617 = vsel %vm533, %v612, %v616
      %v619 = vshrl.u32 %v281, 16
      %v621 = vrot.slane %v619, 4
      %v622 = vshll.u32 %v281, 16
      %v624 = vrot.slane %v622, 5
      %v625 = vor.u32 %v621, %v624
      %v626 = vrot.slane %v625, 4
      %v628 = vshll.u32 %v282, 16
      %v630 = vrot.slane %v628, 5
      %v631 = vsel %vm533, %v626, %v630
      %v633 = vshrl.u32 %v283, 16
      %v635 = vrot.slane %v633, 4
      %v636 = vshll.u32 %v283, 16
      %v638 = vrot.slane %v636, 5
      %v639 = vor.u32 %v635, %v638
      %v640 = vrot.slane %v639, 4
      %v642 = vshll.u32 %v284, 16
      %v644 = vrot.slane %v642, 5
      %v645 = vsel %vm533, %v640, %v644
      %v646 = vunpack.c.l.b16 %v547
      %v647 = vunpack.c.l.b16 %v561
      %v648 = vunpack.c.l.b16 %v575
      %v649 = vunpack.c.l.b16 %v589
      %v650 = vunpack.c.l.b16 %v603
      %v651 = vunpack.c.l.b16 %v617
      %v652 = vunpack.c.l.b16 %v631
      %v653 = vunpack.c.l.b16 %v645
      %v654 = vpack.c.b16 %v647, %v646
      %v655 = vpack.c.b16 %v649, %v648
      %v656 = vpack.c.b16 %v651, %v650
      %v657 = vpack.c.b16 %v653, %v652
      %v659 = vsel %vm349, %v654, 0
      %v662 = vsel %vm349, %v655, 0
      %v665 = vsel %vm349, %v656, 0
      %v668 = vsel %vm349, %v657, 0
      %v671 = vsel %vm362, %v322, 0
      %673 = vmatprep.subr.bf16.mxu0 0
      %674 = vmatpush1.bf16.msra.mxu0 0
      %675 = vmatprep.subr.bf16.mxu0 0
      %676 = vmatpush1.bf16.msra.mxu0 0
      %677 = vmatprep.subr.bf16.mxu0 0
      %678 = vmatpush1.bf16.msra.mxu0 0
      %679 = vmatprep.subr.bf16.mxu0 0
      %680 = vmatpush1.bf16.msra.mxu0 0
      %681 = vmatprep.subr.bf16.mxu0 0
      %682 = vmatpush1.bf16.msra.mxu0 0
      %683 = vmatprep.subr.bf16.mxu0 0
      %684 = vmatpush1.bf16.msra.mxu0 0
      %685 = vmatprep.subr.bf16.mxu0 0
      %686 = vmatpush1.bf16.msra.mxu0 0
      %687 = vmatprep.subr.bf16.mxu0 0
      %688 = vmatpush1.bf16.msra.mxu0 %v671
      %689 = vmatprep.subr.bf16.mxu0 0
      %690 = vmatpush2.bf16.msra.mxu0 0
      %691 = vmatprep.subr.bf16.mxu0 0
      %692 = vmatpush2.bf16.msra.mxu0 0
      %693 = vmatprep.subr.bf16.mxu0 0
      %694 = vmatpush2.bf16.msra.mxu0 0
      %695 = vmatprep.subr.bf16.mxu0 0
      %696 = vmatpush2.bf16.msra.mxu0 0
      %697 = vmatprep.subr.bf16.mxu0 0
      %698 = vmatpush2.bf16.msra.mxu0 0
      %699 = vmatprep.subr.bf16.mxu0 0
      %700 = vmatpush2.bf16.msra.mxu0 0
      %701 = vmatprep.subr.bf16.mxu0 0
      %702 = vmatpush2.bf16.msra.mxu0 0
      %703 = vmatprep.subr.bf16.mxu0 0
      %704 = vmatpush2.bf16.msra.mxu0 0
      %705 = vmatprep.mubr.bf16.mxu0 0
      %706 = vmatmul.mubr.bf16.gmra.mxu0 %v659
      %v707 = vpop.f32.mrf.mxu0
      %v708 = vadd.f32 0.0, %v707
      %v709 = vpop.f32.mrf.mxu0
      %v710 = vpop.f32.mrf.mxu0
      %v711 = vadd.f32 0.0, %v710
      %v712 = vpop.f32.mrf.mxu0
      %713 = vmatprep.mubr.bf16.mxu0 0
      %714 = vmatmul.mubr.bf16.gmra.mxu0 %v662
      %v715 = vpop.f32.mrf.mxu0
      %v716 = vadd.f32 0.0, %v715
      %v717 = vpop.f32.mrf.mxu0
      %v718 = vpop.f32.mrf.mxu0
      %v719 = vadd.f32 0.0, %v718
      %v720 = vpop.f32.mrf.mxu0
      %721 = vmatprep.mubr.bf16.mxu0 0
      %722 = vmatmul.mubr.bf16.gmra.mxu0 %v665
      %v723 = vpop.f32.mrf.mxu0
      %v724 = vadd.f32 0.0, %v723
      %v725 = vpop.f32.mrf.mxu0
      %v726 = vpop.f32.mrf.mxu0
      %v727 = vadd.f32 0.0, %v726
      %v728 = vpop.f32.mrf.mxu0
      %729 = vmatprep.mubr.bf16.mxu0 0
      %730 = vmatmul.mubr.bf16.gmra.mxu0 %v668
      %v731 = vpop.f32.mrf.mxu0
      %v732 = vadd.f32 0.0, %v731
      %v733 = vpop.f32.mrf.mxu0
      %v734 = vpop.f32.mrf.mxu0
      %v735 = vadd.f32 0.0, %v734
      %v736 = vpop.f32.mrf.mxu0
      %737 = vdwg.mxu0
      %v738 = vadd.f32 %v501, %v708
      %v739 = vadd.f32 %v504, %v711
      %v740 = vadd.f32 %v509, %v716
      %v741 = vadd.f32 %v512, %v719
      %v742 = vadd.f32 %v517, %v724
      %v743 = vadd.f32 %v520, %v727
      %v744 = vadd.f32 %v525, %v732
      %v745 = vadd.f32 %v528, %v735
      %v754 = vunpack.c.l.b16 %v296
      %v755 = vunpack.c.l.b16 %v298
      %v756 = vunpack.c.l.b16 %v300
      %v757 = vunpack.c.l.b16 %v302
      %v758 = vunpack.c.l.b16 %v304
      %v759 = vunpack.c.l.b16 %v306
      %v760 = vunpack.c.l.b16 %v308
      %v761 = vunpack.c.l.b16 %v310
      %v762 = vpack.c.b16 %v755, %v754
      %v763 = vpack.c.b16 %v757, %v756
      %v764 = vpack.c.b16 %v759, %v758
      %v765 = vpack.c.b16 %v761, %v760
      %v767 = vsel %vm349, %v762, 0
      %v770 = vsel %vm349, %v763, 0
      %v773 = vsel %vm349, %v764, 0
      %v776 = vsel %vm349, %v765, 0
      %v779 = vsel %vm362, %v323, 0
      %781 = vmatprep.subr.bf16.mxu0 0
      %782 = vmatpush1.bf16.msra.mxu0 0
      %783 = vmatprep.subr.bf16.mxu0 0
      %784 = vmatpush1.bf16.msra.mxu0 0
      %785 = vmatprep.subr.bf16.mxu0 0
      %786 = vmatpush1.bf16.msra.mxu0 0
      %787 = vmatprep.subr.bf16.mxu0 0
      %788 = vmatpush1.bf16.msra.mxu0 0
      %789 = vmatprep.subr.bf16.mxu0 0
      %790 = vmatpush1.bf16.msra.mxu0 0
      %791 = vmatprep.subr.bf16.mxu0 0
      %792 = vmatpush1.bf16.msra.mxu0 0
      %793 = vmatprep.subr.bf16.mxu0 0
      %794 = vmatpush1.bf16.msra.mxu0 0
      %795 = vmatprep.subr.bf16.mxu0 0
      %796 = vmatpush1.bf16.msra.mxu0 %v779
      %797 = vmatprep.subr.bf16.mxu0 0
      %798 = vmatpush2.bf16.msra.mxu0 0
      %799 = vmatprep.subr.bf16.mxu0 0
      %800 = vmatpush2.bf16.msra.mxu0 0
      %801 = vmatprep.subr.bf16.mxu0 0
      %802 = vmatpush2.bf16.msra.mxu0 0
      %803 = vmatprep.subr.bf16.mxu0 0
      %804 = vmatpush2.bf16.msra.mxu0 0
      %805 = vmatprep.subr.bf16.mxu0 0
      %806 = vmatpush2.bf16.msra.mxu0 0
      %807 = vmatprep.subr.bf16.mxu0 0
      %808 = vmatpush2.bf16.msra.mxu0 0
      %809 = vmatprep.subr.bf16.mxu0 0
      %810 = vmatpush2.bf16.msra.mxu0 0
      %811 = vmatprep.subr.bf16.mxu0 0
      %812 = vmatpush2.bf16.msra.mxu0 0
      %813 = vmatprep.mubr.bf16.mxu0 0
      %814 = vmatmul.mubr.bf16.gmra.mxu0 %v767
      %v815 = vpop.f32.mrf.mxu0
      %v816 = vadd.f32 0.0, %v815
      %v817 = vpop.f32.mrf.mxu0
      %v818 = vpop.f32.mrf.mxu0
      %v819 = vadd.f32 0.0, %v818
      %v820 = vpop.f32.mrf.mxu0
      %821 = vmatprep.mubr.bf16.mxu0 0
      %822 = vmatmul.mubr.bf16.gmra.mxu0 %v770
      %v823 = vpop.f32.mrf.mxu0
      %v824 = vadd.f32 0.0, %v823
      %v825 = vpop.f32.mrf.mxu0
      %v826 = vpop.f32.mrf.mxu0
      %v827 = vadd.f32 0.0, %v826
      %v828 = vpop.f32.mrf.mxu0
      %829 = vmatprep.mubr.bf16.mxu0 0
      %830 = vmatmul.mubr.bf16.gmra.mxu0 %v773
      %v831 = vpop.f32.mrf.mxu0
      %v832 = vadd.f32 0.0, %v831
      %v833 = vpop.f32.mrf.mxu0
      %v834 = vpop.f32.mrf.mxu0
      %v835 = vadd.f32 0.0, %v834
      %v836 = vpop.f32.mrf.mxu0
      %837 = vmatprep.mubr.bf16.mxu0 0
      %838 = vmatmul.mubr.bf16.gmra.mxu0 %v776
      %v839 = vpop.f32.mrf.mxu0
      %v840 = vadd.f32 0.0, %v839
      %v841 = vpop.f32.mrf.mxu0
      %v842 = vpop.f32.mrf.mxu0
      %v843 = vadd.f32 0.0, %v842
      %v844 = vpop.f32.mrf.mxu0
      %845 = vdwg.mxu0
      %v846 = vadd.f32 %v738, %v816
      %v847 = vadd.f32 %v739, %v819
      %v848 = vadd.f32 %v740, %v824
      %v849 = vadd.f32 %v741, %v827
      %v850 = vadd.f32 %v742, %v832
      %v851 = vadd.f32 %v743, %v835
      %v852 = vadd.f32 %v744, %v840
      %v853 = vadd.f32 %v745, %v843
      %v862 = vunpack.c.l.b16 %v312
      %v863 = vunpack.c.l.b16 %v313
      %v864 = vunpack.c.l.b16 %v314
      %v865 = vunpack.c.l.b16 %v315
      %v866 = vunpack.c.l.b16 %v316
      %v867 = vunpack.c.l.b16 %v317
      %v868 = vunpack.c.l.b16 %v318
      %v869 = vunpack.c.l.b16 %v319
      %v870 = vpack.c.b16 %v863, %v862
      %v871 = vpack.c.b16 %v865, %v864
      %v872 = vpack.c.b16 %v867, %v866
      %v873 = vpack.c.b16 %v869, %v868
      %v875 = vsel %vm349, %v870, 0
      %v878 = vsel %vm349, %v871, 0
      %v881 = vsel %vm349, %v872, 0
      %v884 = vsel %vm349, %v873, 0
      %v887 = vsel %vm362, %v324, 0
      %889 = vmatprep.subr.bf16.mxu0 0
      %890 = vmatpush1.bf16.msra.mxu0 0
      %891 = vmatprep.subr.bf16.mxu0 0
      %892 = vmatpush1.bf16.msra.mxu0 0
      %893 = vmatprep.subr.bf16.mxu0 0
      %894 = vmatpush1.bf16.msra.mxu0 0
      %895 = vmatprep.subr.bf16.mxu0 0
      %896 = vmatpush1.bf16.msra.mxu0 0
      %897 = vmatprep.subr.bf16.mxu0 0
      %898 = vmatpush1.bf16.msra.mxu0 0
      %899 = vmatprep.subr.bf16.mxu0 0
      %900 = vmatpush1.bf16.msra.mxu0 0
      %901 = vmatprep.subr.bf16.mxu0 0
      %902 = vmatpush1.bf16.msra.mxu0 0
      %903 = vmatprep.subr.bf16.mxu0 0
      %904 = vmatpush1.bf16.msra.mxu0 %v887
      %905 = vmatprep.subr.bf16.mxu0 0
      %906 = vmatpush2.bf16.msra.mxu0 0
      %907 = vmatprep.subr.bf16.mxu0 0
      %908 = vmatpush2.bf16.msra.mxu0 0
      %909 = vmatprep.subr.bf16.mxu0 0
      %910 = vmatpush2.bf16.msra.mxu0 0
      %911 = vmatprep.subr.bf16.mxu0 0
      %912 = vmatpush2.bf16.msra.mxu0 0
      %913 = vmatprep.subr.bf16.mxu0 0
      %914 = vmatpush2.bf16.msra.mxu0 0
      %915 = vmatprep.subr.bf16.mxu0 0
      %916 = vmatpush2.bf16.msra.mxu0 0
      %917 = vmatprep.subr.bf16.mxu0 0
      %918 = vmatpush2.bf16.msra.mxu0 0
      %919 = vmatprep.subr.bf16.mxu0 0
      %920 = vmatpush2.bf16.msra.mxu0 0
      %921 = vmatprep.mubr.bf16.mxu0 0
      %922 = vmatmul.mubr.bf16.gmra.mxu0 %v875
      %v923 = vpop.f32.mrf.mxu0
      %v924 = vadd.f32 0.0, %v923
      %v925 = vpop.f32.mrf.mxu0
      %v926 = vpop.f32.mrf.mxu0
      %v927 = vadd.f32 0.0, %v926
      %v928 = vpop.f32.mrf.mxu0
      %929 = vmatprep.mubr.bf16.mxu0 0
      %930 = vmatmul.mubr.bf16.gmra.mxu0 %v878
      %v931 = vpop.f32.mrf.mxu0
      %v932 = vadd.f32 0.0, %v931
      %v933 = vpop.f32.mrf.mxu0
      %v934 = vpop.f32.mrf.mxu0
      %v935 = vadd.f32 0.0, %v934
      %v936 = vpop.f32.mrf.mxu0
      %937 = vmatprep.mubr.bf16.mxu0 0
      %938 = vmatmul.mubr.bf16.gmra.mxu0 %v881
      %v939 = vpop.f32.mrf.mxu0
      %v940 = vadd.f32 0.0, %v939
      %v941 = vpop.f32.mrf.mxu0
      %v942 = vpop.f32.mrf.mxu0
      %v943 = vadd.f32 0.0, %v942
      %v944 = vpop.f32.mrf.mxu0
      %945 = vmatprep.mubr.bf16.mxu0 0
      %946 = vmatmul.mubr.bf16.gmra.mxu0 %v884
      %v947 = vpop.f32.mrf.mxu0
      %v948 = vadd.f32 0.0, %v947
      %v949 = vpop.f32.mrf.mxu0
      %v950 = vpop.f32.mrf.mxu0
      %v951 = vadd.f32 0.0, %v950
      %v952 = vpop.f32.mrf.mxu0
      %953 = vdwg.mxu0
      %v954 = vadd.f32 %v846, %v924
      %v955 = vadd.f32 %v847, %v927
      %v956 = vadd.f32 %v848, %v932
      %v957 = vadd.f32 %v849, %v935
      %v958 = vadd.f32 %v850, %v940
      %v959 = vadd.f32 %v851, %v943
      %v960 = vadd.f32 %v852, %v948
      %v961 = vadd.f32 %v853, %v951
      %v963 = vshrl.u32 %v296, 16
      %v965 = vrot.slane %v963, 4
      %v966 = vshll.u32 %v296, 16
      %v968 = vrot.slane %v966, 5
      %v969 = vor.u32 %v965, %v968
      %v970 = vrot.slane %v969, 4
      %v972 = vshll.u32 %v297, 16
      %v974 = vrot.slane %v972, 5
      %v975 = vsel %vm533, %v970, %v974
      %v977 = vshrl.u32 %v298, 16
      %v979 = vrot.slane %v977, 4
      %v980 = vshll.u32 %v298, 16
      %v982 = vrot.slane %v980, 5
      %v983 = vor.u32 %v979, %v982
      %v984 = vrot.slane %v983, 4
      %v986 = vshll.u32 %v299, 16
      %v988 = vrot.slane %v986, 5
      %v989 = vsel %vm533, %v984, %v988
      %v991 = vshrl.u32 %v300, 16
      %v993 = vrot.slane %v991, 4
      %v994 = vshll.u32 %v300, 16
      %v996 = vrot.slane %v994, 5
      %v997 = vor.u32 %v993, %v996
      %v998 = vrot.slane %v997, 4
      %v1000 = vshll.u32 %v301, 16
      %v1002 = vrot.slane %v1000, 5
      %v1003 = vsel %vm533, %v998, %v1002
      %v1005 = vshrl.u32 %v302, 16
      %v1007 = vrot.slane %v1005, 4
      %v1008 = vshll.u32 %v302, 16
      %v1010 = vrot.slane %v1008, 5
      %v1011 = vor.u32 %v1007, %v1010
      %v1012 = vrot.slane %v1011, 4
      %v1014 = vshll.u32 %v303, 16
      %v1016 = vrot.slane %v1014, 5
      %v1017 = vsel %vm533, %v1012, %v1016
      %v1019 = vshrl.u32 %v304, 16
      %v1021 = vrot.slane %v1019, 4
      %v1022 = vshll.u32 %v304, 16
      %v1024 = vrot.slane %v1022, 5
      %v1025 = vor.u32 %v1021, %v1024
      %v1026 = vrot.slane %v1025, 4
      %v1028 = vshll.u32 %v305, 16
      %v1030 = vrot.slane %v1028, 5
      %v1031 = vsel %vm533, %v1026, %v1030
      %v1033 = vshrl.u32 %v306, 16
      %v1035 = vrot.slane %v1033, 4
      %v1036 = vshll.u32 %v306, 16
      %v1038 = vrot.slane %v1036, 5
      %v1039 = vor.u32 %v1035, %v1038
      %v1040 = vrot.slane %v1039, 4
      %v1042 = vshll.u32 %v307, 16
      %v1044 = vrot.slane %v1042, 5
      %v1045 = vsel %vm533, %v1040, %v1044
      %v1047 = vshrl.u32 %v308, 16
      %v1049 = vrot.slane %v1047, 4
      %v1050 = vshll.u32 %v308, 16
      %v1052 = vrot.slane %v1050, 5
      %v1053 = vor.u32 %v1049, %v1052
      %v1054 = vrot.slane %v1053, 4
      %v1056 = vshll.u32 %v309, 16
      %v1058 = vrot.slane %v1056, 5
      %v1059 = vsel %vm533, %v1054, %v1058
      %v1061 = vshrl.u32 %v310, 16
      %v1063 = vrot.slane %v1061, 4
      %v1064 = vshll.u32 %v310, 16
      %v1066 = vrot.slane %v1064, 5
      %v1067 = vor.u32 %v1063, %v1066
      %v1068 = vrot.slane %v1067, 4
      %v1070 = vshll.u32 %v311, 16
      %v1072 = vrot.slane %v1070, 5
      %v1073 = vsel %vm533, %v1068, %v1072
      %v1074 = vunpack.c.l.b16 %v975
      %v1075 = vunpack.c.l.b16 %v989
      %v1076 = vunpack.c.l.b16 %v1003
      %v1077 = vunpack.c.l.b16 %v1017
      %v1078 = vunpack.c.l.b16 %v1031
      %v1079 = vunpack.c.l.b16 %v1045
      %v1080 = vunpack.c.l.b16 %v1059
      %v1081 = vunpack.c.l.b16 %v1073
      %v1082 = vpack.c.b16 %v1075, %v1074
      %v1083 = vpack.c.b16 %v1077, %v1076
      %v1084 = vpack.c.b16 %v1079, %v1078
      %v1085 = vpack.c.b16 %v1081, %v1080
      %v1087 = vsel %vm349, %v1082, 0
      %v1090 = vsel %vm349, %v1083, 0
      %v1093 = vsel %vm349, %v1084, 0
      %v1096 = vsel %vm349, %v1085, 0
      %v1099 = vsel %vm362, %v325, 0
      %1101 = vmatprep.subr.bf16.mxu0 0
      %1102 = vmatpush1.bf16.msra.mxu0 0
      %1103 = vmatprep.subr.bf16.mxu0 0
      %1104 = vmatpush1.bf16.msra.mxu0 0
      %1105 = vmatprep.subr.bf16.mxu0 0
      %1106 = vmatpush1.bf16.msra.mxu0 0
      %1107 = vmatprep.subr.bf16.mxu0 0
      %1108 = vmatpush1.bf16.msra.mxu0 0
      %1109 = vmatprep.subr.bf16.mxu0 0
      %1110 = vmatpush1.bf16.msra.mxu0 0
      %1111 = vmatprep.subr.bf16.mxu0 0
      %1112 = vmatpush1.bf16.msra.mxu0 0
      %1113 = vmatprep.subr.bf16.mxu0 0
      %1114 = vmatpush1.bf16.msra.mxu0 0
      %1115 = vmatprep.subr.bf16.mxu0 0
      %1116 = vmatpush1.bf16.msra.mxu0 %v1099
      %1117 = vmatprep.subr.bf16.mxu0 0
      %1118 = vmatpush2.bf16.msra.mxu0 0
      %1119 = vmatprep.subr.bf16.mxu0 0
      %1120 = vmatpush2.bf16.msra.mxu0 0
      %1121 = vmatprep.subr.bf16.mxu0 0
      %1122 = vmatpush2.bf16.msra.mxu0 0
      %1123 = vmatprep.subr.bf16.mxu0 0
      %1124 = vmatpush2.bf16.msra.mxu0 0
      %1125 = vmatprep.subr.bf16.mxu0 0
      %1126 = vmatpush2.bf16.msra.mxu0 0
      %1127 = vmatprep.subr.bf16.mxu0 0
      %1128 = vmatpush2.bf16.msra.mxu0 0
      %1129 = vmatprep.subr.bf16.mxu0 0
      %1130 = vmatpush2.bf16.msra.mxu0 0
      %1131 = vmatprep.subr.bf16.mxu0 0
      %1132 = vmatpush2.bf16.msra.mxu0 0
      %1133 = vmatprep.mubr.bf16.mxu0 0
      %1134 = vmatmul.mubr.bf16.gmra.mxu0 %v1087
      %v1135 = vpop.f32.mrf.mxu0
      %v1136 = vadd.f32 0.0, %v1135
      %v1137 = vpop.f32.mrf.mxu0
      %v1138 = vpop.f32.mrf.mxu0
      %v1139 = vadd.f32 0.0, %v1138
      %v1140 = vpop.f32.mrf.mxu0
      %1141 = vmatprep.mubr.bf16.mxu0 0
      %1142 = vmatmul.mubr.bf16.gmra.mxu0 %v1090
      %v1143 = vpop.f32.mrf.mxu0
      %v1144 = vadd.f32 0.0, %v1143
      %v1145 = vpop.f32.mrf.mxu0
      %v1146 = vpop.f32.mrf.mxu0
      %v1147 = vadd.f32 0.0, %v1146
      %v1148 = vpop.f32.mrf.mxu0
      %1149 = vmatprep.mubr.bf16.mxu0 0
      %1150 = vmatmul.mubr.bf16.gmra.mxu0 %v1093
      %v1151 = vpop.f32.mrf.mxu0
      %v1152 = vadd.f32 0.0, %v1151
      %v1153 = vpop.f32.mrf.mxu0
      %v1154 = vpop.f32.mrf.mxu0
      %v1155 = vadd.f32 0.0, %v1154
      %v1156 = vpop.f32.mrf.mxu0
      %1157 = vmatprep.mubr.bf16.mxu0 0
      %1158 = vmatmul.mubr.bf16.gmra.mxu0 %v1096
      %v1159 = vpop.f32.mrf.mxu0
      %v1160 = vadd.f32 0.0, %v1159
      %v1161 = vpop.f32.mrf.mxu0
      %v1162 = vpop.f32.mrf.mxu0
      %v1163 = vadd.f32 0.0, %v1162
      %v1164 = vpop.f32.mrf.mxu0
      %1165 = vdwg.mxu0
      %v1166 = vadd.f32 %v954, %v1136
      %v1167 = vadd.f32 %v955, %v1139
      %v1168 = vadd.f32 %v956, %v1144
      %v1169 = vadd.f32 %v957, %v1147
      %v1170 = vadd.f32 %v958, %v1152
      %v1171 = vadd.f32 %v959, %v1155
      %v1172 = vadd.f32 %v960, %v1160
      %v1173 = vadd.f32 %v961, %v1163
      %v1175 = vunpack.c.l.b16 %v285
      %v1176 = vpack.c.b16 %v441, %v440
      %v1177 = vpack.c.b16 %v443, %v442
      %v1178 = vpack.c.b16 %v445, %v444
      %v1179 = vpack.c.b16 %v1175, %v446
      %v1181 = vsel %vm349, %v1176, 0
      %v1184 = vsel %vm349, %v1177, 0
      %v1187 = vsel %vm349, %v1178, 0
      %v1190 = vsel %vm349, %v1179, 0
      %v1193 = vsel %vm362, %v326, 0
      %1195 = vmatprep.subr.bf16.mxu0 0
      %1196 = vmatpush1.bf16.msra.mxu0 0
      %1197 = vmatprep.subr.bf16.mxu0 0
      %1198 = vmatpush1.bf16.msra.mxu0 0
      %1199 = vmatprep.subr.bf16.mxu0 0
      %1200 = vmatpush1.bf16.msra.mxu0 0
      %1201 = vmatprep.subr.bf16.mxu0 0
      %1202 = vmatpush1.bf16.msra.mxu0 0
      %1203 = vmatprep.subr.bf16.mxu0 0
      %1204 = vmatpush1.bf16.msra.mxu0 0
      %1205 = vmatprep.subr.bf16.mxu0 0
      %1206 = vmatpush1.bf16.msra.mxu0 0
      %1207 = vmatprep.subr.bf16.mxu0 0
      %1208 = vmatpush1.bf16.msra.mxu0 0
      %1209 = vmatprep.subr.bf16.mxu0 0
      %1210 = vmatpush1.bf16.msra.mxu0 %v1193
      %1211 = vmatprep.subr.bf16.mxu0 0
      %1212 = vmatpush2.bf16.msra.mxu0 0
      %1213 = vmatprep.subr.bf16.mxu0 0
      %1214 = vmatpush2.bf16.msra.mxu0 0
      %1215 = vmatprep.subr.bf16.mxu0 0
      %1216 = vmatpush2.bf16.msra.mxu0 0
      %1217 = vmatprep.subr.bf16.mxu0 0
      %1218 = vmatpush2.bf16.msra.mxu0 0
      %1219 = vmatprep.subr.bf16.mxu0 0
      %1220 = vmatpush2.bf16.msra.mxu0 0
      %1221 = vmatprep.subr.bf16.mxu0 0
      %1222 = vmatpush2.bf16.msra.mxu0 0
      %1223 = vmatprep.subr.bf16.mxu0 0
      %1224 = vmatpush2.bf16.msra.mxu0 0
      %1225 = vmatprep.subr.bf16.mxu0 0
      %1226 = vmatpush2.bf16.msra.mxu0 0
      %1227 = vmatprep.mubr.bf16.mxu0 0
      %1228 = vmatmul.mubr.bf16.gmra.mxu0 %v1181
      %v1229 = vpop.f32.mrf.mxu0
      %v1230 = vadd.f32 0.0, %v1229
      %v1231 = vpop.f32.mrf.mxu0
      %v1232 = vpop.f32.mrf.mxu0
      %v1233 = vadd.f32 0.0, %v1232
      %v1234 = vpop.f32.mrf.mxu0
      %1235 = vmatprep.mubr.bf16.mxu0 0
      %1236 = vmatmul.mubr.bf16.gmra.mxu0 %v1184
      %v1237 = vpop.f32.mrf.mxu0
      %v1238 = vadd.f32 0.0, %v1237
      %v1239 = vpop.f32.mrf.mxu0
      %v1240 = vpop.f32.mrf.mxu0
      %v1241 = vadd.f32 0.0, %v1240
      %v1242 = vpop.f32.mrf.mxu0
      %1243 = vmatprep.mubr.bf16.mxu0 0
      %1244 = vmatmul.mubr.bf16.gmra.mxu0 %v1187
      %v1245 = vpop.f32.mrf.mxu0
      %v1246 = vadd.f32 0.0, %v1245
      %v1247 = vpop.f32.mrf.mxu0
      %v1248 = vpop.f32.mrf.mxu0
      %v1249 = vadd.f32 0.0, %v1248
      %v1250 = vpop.f32.mrf.mxu0
      %1251 = vmatprep.mubr.bf16.mxu0 0
      %1252 = vmatmul.mubr.bf16.gmra.mxu0 %v1190
      %v1253 = vpop.f32.mrf.mxu0
      %v1254 = vadd.f32 0.0, %v1253
      %v1255 = vpop.f32.mrf.mxu0
      %v1256 = vpop.f32.mrf.mxu0
      %v1257 = vadd.f32 0.0, %v1256
      %v1258 = vpop.f32.mrf.mxu0
      %1259 = vdwg.mxu0
      %v1260 = vadd.f32 %v1166, %v1230
      %v1261 = vadd.f32 %v1167, %v1233
      %v1262 = vadd.f32 %v1168, %v1238
      %v1263 = vadd.f32 %v1169, %v1241
      %v1264 = vadd.f32 %v1170, %v1246
      %v1265 = vadd.f32 %v1171, %v1249
      %v1266 = vadd.f32 %v1172, %v1254
      %v1267 = vadd.f32 %v1173, %v1257
      %v1269 = vunpack.c.l.b16 %v295
      %v1270 = vpack.c.b16 %v339, %v338
      %v1271 = vpack.c.b16 %v341, %v340
      %v1272 = vpack.c.b16 %v343, %v342
      %v1273 = vpack.c.b16 %v1269, %v344
      %v1275 = vsel %vm349, %v1270, 0
      %v1278 = vsel %vm349, %v1271, 0
      %v1281 = vsel %vm349, %v1272, 0
      %v1284 = vsel %vm349, %v1273, 0
      %v1287 = vsel %vm362, %v327, 0
      %1289 = vmatprep.subr.bf16.mxu0 0
      %1290 = vmatpush1.bf16.msra.mxu0 0
      %1291 = vmatprep.subr.bf16.mxu0 0
      %1292 = vmatpush1.bf16.msra.mxu0 0
      %1293 = vmatprep.subr.bf16.mxu0 0
      %1294 = vmatpush1.bf16.msra.mxu0 0
      %1295 = vmatprep.subr.bf16.mxu0 0
      %1296 = vmatpush1.bf16.msra.mxu0 0
      %1297 = vmatprep.subr.bf16.mxu0 0
      %1298 = vmatpush1.bf16.msra.mxu0 0
      %1299 = vmatprep.subr.bf16.mxu0 0
      %1300 = vmatpush1.bf16.msra.mxu0 0
      %1301 = vmatprep.subr.bf16.mxu0 0
      %1302 = vmatpush1.bf16.msra.mxu0 0
      %1303 = vmatprep.subr.bf16.mxu0 0
      %1304 = vmatpush1.bf16.msra.mxu0 %v1287
      %1305 = vmatprep.subr.bf16.mxu0 0
      %1306 = vmatpush2.bf16.msra.mxu0 0
      %1307 = vmatprep.subr.bf16.mxu0 0
      %1308 = vmatpush2.bf16.msra.mxu0 0
      %1309 = vmatprep.subr.bf16.mxu0 0
      %1310 = vmatpush2.bf16.msra.mxu0 0
      %1311 = vmatprep.subr.bf16.mxu0 0
      %1312 = vmatpush2.bf16.msra.mxu0 0
      %1313 = vmatprep.subr.bf16.mxu0 0
      %1314 = vmatpush2.bf16.msra.mxu0 0
      %1315 = vmatprep.subr.bf16.mxu0 0
      %1316 = vmatpush2.bf16.msra.mxu0 0
      %1317 = vmatprep.subr.bf16.mxu0 0
      %1318 = vmatpush2.bf16.msra.mxu0 0
      %1319 = vmatprep.subr.bf16.mxu0 0
      %1320 = vmatpush2.bf16.msra.mxu0 0
      %1321 = vmatprep.mubr.bf16.mxu0 0
      %1322 = vmatmul.mubr.bf16.gmra.mxu0 %v1275
      %v1323 = vpop.f32.mrf.mxu0
      %v1324 = vadd.f32 0.0, %v1323
      %v1325 = vpop.f32.mrf.mxu0
      %v1326 = vpop.f32.mrf.mxu0
      %v1327 = vadd.f32 0.0, %v1326
      %v1328 = vpop.f32.mrf.mxu0
      %1329 = vmatprep.mubr.bf16.mxu0 0
      %1330 = vmatmul.mubr.bf16.gmra.mxu0 %v1278
      %v1331 = vpop.f32.mrf.mxu0
      %v1332 = vadd.f32 0.0, %v1331
      %v1333 = vpop.f32.mrf.mxu0
      %v1334 = vpop.f32.mrf.mxu0
      %v1335 = vadd.f32 0.0, %v1334
      %v1336 = vpop.f32.mrf.mxu0
      %1337 = vmatprep.mubr.bf16.mxu0 0
      %1338 = vmatmul.mubr.bf16.gmra.mxu0 %v1281
      %v1339 = vpop.f32.mrf.mxu0
      %v1340 = vadd.f32 0.0, %v1339
      %v1341 = vpop.f32.mrf.mxu0
      %v1342 = vpop.f32.mrf.mxu0
      %v1343 = vadd.f32 0.0, %v1342
      %v1344 = vpop.f32.mrf.mxu0
      %1345 = vmatprep.mubr.bf16.mxu0 0
      %1346 = vmatmul.mubr.bf16.gmra.mxu0 %v1284
      %v1347 = vpop.f32.mrf.mxu0
      %v1348 = vadd.f32 0.0, %v1347
      %v1349 = vpop.f32.mrf.mxu0
      %v1350 = vpop.f32.mrf.mxu0
      %v1351 = vadd.f32 0.0, %v1350
      %v1352 = vpop.f32.mrf.mxu0
      %1353 = vdwg.mxu0
      %v1354 = vadd.f32 %v1260, %v1324
      %v1355 = vadd.f32 %v1261, %v1327
      %v1356 = vadd.f32 %v1262, %v1332
      %v1357 = vadd.f32 %v1263, %v1335
      %v1358 = vadd.f32 %v1264, %v1340
      %v1359 = vadd.f32 %v1265, %v1343
      %v1360 = vadd.f32 %v1266, %v1348
      %v1361 = vadd.f32 %v1267, %v1351
      %v1363 = vshrl.u32 %v285, 16
      %v1365 = vrot.slane %v1363, 4
      %v1366 = vshll.u32 %v285, 16
      %v1368 = vrot.slane %v1366, 5
      %v1369 = vor.u32 %v1365, %v1368
      %v1370 = vrot.slane %v1369, 4
      %v1372 = vshll.u32 %v286, 16
      %v1374 = vrot.slane %v1372, 5
      %v1375 = vsel %vm533, %v1370, %v1374
      %v1376 = vunpack.c.l.b16 %v1375
      %v1377 = vpack.c.b16 %v648, %v647
      %v1378 = vpack.c.b16 %v650, %v649
      %v1379 = vpack.c.b16 %v652, %v651
      %v1380 = vpack.c.b16 %v1376, %v653
      %v1382 = vsel %vm349, %v1377, 0
      %v1385 = vsel %vm349, %v1378, 0
      %v1388 = vsel %vm349, %v1379, 0
      %v1391 = vsel %vm349, %v1380, 0
      %v1394 = vsel %vm362, %v328, 0
      %1396 = vmatprep.subr.bf16.mxu0 0
      %1397 = vmatpush1.bf16.msra.mxu0 0
      %1398 = vmatprep.subr.bf16.mxu0 0
      %1399 = vmatpush1.bf16.msra.mxu0 0
      %1400 = vmatprep.subr.bf16.mxu0 0
      %1401 = vmatpush1.bf16.msra.mxu0 0
      %1402 = vmatprep.subr.bf16.mxu0 0
      %1403 = vmatpush1.bf16.msra.mxu0 0
      %1404 = vmatprep.subr.bf16.mxu0 0
      %1405 = vmatpush1.bf16.msra.mxu0 0
      %1406 = vmatprep.subr.bf16.mxu0 0
      %1407 = vmatpush1.bf16.msra.mxu0 0
      %1408 = vmatprep.subr.bf16.mxu0 0
      %1409 = vmatpush1.bf16.msra.mxu0 0
      %1410 = vmatprep.subr.bf16.mxu0 0
      %1411 = vmatpush1.bf16.msra.mxu0 %v1394
      %1412 = vmatprep.subr.bf16.mxu0 0
      %1413 = vmatpush2.bf16.msra.mxu0 0
      %1414 = vmatprep.subr.bf16.mxu0 0
      %1415 = vmatpush2.bf16.msra.mxu0 0
      %1416 = vmatprep.subr.bf16.mxu0 0
      %1417 = vmatpush2.bf16.msra.mxu0 0
      %1418 = vmatprep.subr.bf16.mxu0 0
      %1419 = vmatpush2.bf16.msra.mxu0 0
      %1420 = vmatprep.subr.bf16.mxu0 0
      %1421 = vmatpush2.bf16.msra.mxu0 0
      %1422 = vmatprep.subr.bf16.mxu0 0
      %1423 = vmatpush2.bf16.msra.mxu0 0
      %1424 = vmatprep.subr.bf16.mxu0 0
      %1425 = vmatpush2.bf16.msra.mxu0 0
      %1426 = vmatprep.subr.bf16.mxu0 0
      %1427 = vmatpush2.bf16.msra.mxu0 0
      %1428 = vmatprep.mubr.bf16.mxu0 0
      %1429 = vmatmul.mubr.bf16.gmra.mxu0 %v1382
      %v1430 = vpop.f32.mrf.mxu0
      %v1431 = vadd.f32 0.0, %v1430
      %v1432 = vpop.f32.mrf.mxu0
      %v1433 = vpop.f32.mrf.mxu0
      %v1434 = vadd.f32 0.0, %v1433
      %v1435 = vpop.f32.mrf.mxu0
      %1436 = vmatprep.mubr.bf16.mxu0 0
      %1437 = vmatmul.mubr.bf16.gmra.mxu0 %v1385
      %v1438 = vpop.f32.mrf.mxu0
      %v1439 = vadd.f32 0.0, %v1438
      %v1440 = vpop.f32.mrf.mxu0
      %v1441 = vpop.f32.mrf.mxu0
      %v1442 = vadd.f32 0.0, %v1441
      %v1443 = vpop.f32.mrf.mxu0
      %1444 = vmatprep.mubr.bf16.mxu0 0
      %1445 = vmatmul.mubr.bf16.gmra.mxu0 %v1388
      %v1446 = vpop.f32.mrf.mxu0
      %v1447 = vadd.f32 0.0, %v1446
      %v1448 = vpop.f32.mrf.mxu0
      %v1449 = vpop.f32.mrf.mxu0
      %v1450 = vadd.f32 0.0, %v1449
      %v1451 = vpop.f32.mrf.mxu0
      %1452 = vmatprep.mubr.bf16.mxu0 0
      %1453 = vmatmul.mubr.bf16.gmra.mxu0 %v1391
      %v1454 = vpop.f32.mrf.mxu0
      %v1455 = vadd.f32 0.0, %v1454
      %v1456 = vpop.f32.mrf.mxu0
      %v1457 = vpop.f32.mrf.mxu0
      %v1458 = vadd.f32 0.0, %v1457
      %v1459 = vpop.f32.mrf.mxu0
      %1460 = vdwg.mxu0
      %v1461 = vadd.f32 %v1354, %v1431
      %v1462 = vadd.f32 %v1355, %v1434
      %v1463 = vadd.f32 %v1356, %v1439
      %v1464 = vadd.f32 %v1357, %v1442
      %v1465 = vadd.f32 %v1358, %v1447
      %v1466 = vadd.f32 %v1359, %v1450
      %v1467 = vadd.f32 %v1360, %v1455
      %v1468 = vadd.f32 %v1361, %v1458
      %v1469 = vld [vmem:[%s256] sm:$0x1]
      %v1471 = vlaneseq
      %v1472 = vshrl.u32 %v1471, 7
      %v1473 = vsub.s32 0, %v1472
      %v1474 = vrot.slane %v1469, %v1473
      %v1476 = vmul.f32 %v1461, %v1474
      %v1477 = vmul.f32 %v1462, %v1474
      %v1478 = vmul.f32 %v1463, %v1474
      %v1479 = vmul.f32 %v1464, %v1474
      %v1480 = vmul.f32 %v1465, %v1474
      %v1481 = vmul.f32 %v1466, %v1474
      %v1482 = vmul.f32 %v1467, %v1474
      %v1483 = vmul.f32 %v1468, %v1474
      %v1484 = vld [vmem:[%s259] sm:$0x1]
      %v1486 = vlaneseq
      %v1487 = vshrl.u32 %v1486, 7
      %v1488 = vsub.s32 0, %v1487
      %v1489 = vrot.slane %v1484, %v1488
      %v1491 = vadd.f32 %v1476, %v1489
      %v1492 = vadd.f32 %v1477, %v1489
      %v1493 = vadd.f32 %v1478, %v1489
      %v1494 = vadd.f32 %v1479, %v1489
      %v1495 = vadd.f32 %v1480, %v1489
      %v1496 = vadd.f32 %v1481, %v1489
      %v1497 = vadd.f32 %v1482, %v1489
      %v1498 = vadd.f32 %v1483, %v1489
      %v1499 = vmax.f32 %v1491, 0.0
      %v1500 = vmax.f32 %v1492, 0.0
      %v1501 = vmax.f32 %v1493, 0.0
      %v1502 = vmax.f32 %v1494, 0.0
      %v1503 = vmax.f32 %v1495, 0.0
      %v1504 = vmax.f32 %v1496, 0.0
      %v1505 = vmax.f32 %v1497, 0.0
      %v1506 = vmax.f32 %v1498, 0.0
      %v1507 = vpack.c.bf16 %v1499, %v1499
      %v1508 = vpack.c.bf16 %v1500, %v1500
      %v1509 = vpack.c.bf16 %v1501, %v1501
      %v1510 = vpack.c.bf16 %v1502, %v1502
      %v1511 = vpack.c.bf16 %v1503, %v1503
      %v1512 = vpack.c.bf16 %v1504, %v1504
      %v1513 = vpack.c.bf16 %v1505, %v1505
      %v1514 = vpack.c.bf16 %v1506, %v1506
      %vm1515 = vcmask 60416
      %1516 = vst.msk [vmem:[%s267] sm:$0xf] %vm1515, %v1507
      %1517 = vst.msk [vmem:[%s267 + $0x4] sm:$0xf] %vm1515, %v1508
      %1518 = vst.msk [vmem:[%s267 + $0x8] sm:$0xf] %vm1515, %v1509
      %1519 = vst.msk [vmem:[%s267 + $0xc] sm:$0xf] %vm1515, %v1510
      %1520 = vst.msk [vmem:[%s267 + $0x10] sm:$0xf] %vm1515, %v1511
      %1521 = vst.msk [vmem:[%s267 + $0x14] sm:$0xf] %vm1515, %v1512
      %1522 = vst.msk [vmem:[%s267 + $0x18] sm:$0xf] %vm1515, %v1513
      %1523 = vst.msk [vmem:[%s267 + $0x1c] sm:$0xf] %vm1515, %v1514
      %p1524 = scmp.lt.s32.totalorder %s19, 1
      %s1525 = scalar_select %p1524, %s19, 1
      %p1526 = scmp.lt.s32.totalorder %s20, 0
      %s1527 = scalar_select %p1526, %s20, 0
      %s1528 = smul.addr %s1525, 8
      %s1529 = sadd.s32 %s1527, %s1528
      %s1530 = smul.addr %s1529, 4
      %s1531 = scalar_lea.vmem %s4, %s1530
      // Predicated region
      $region37: #{_basic_block_forward.2} parent=35 // pred_check
        %p1532 = pneg %p151
      $region38: #{_basic_block_forward.2} parent=35 // pred_check_branch
        %1534 = sbr.rel (%p1532) target = $region40
      $region39: #{_basic_block_forward.2} parent=35 // pred_region
        _
      $region40: #{_basic_block_forward.2} parent=35 // pred_fallthru
        _
    $region36: #{_basic_block_forward.2} parent=5 // pred_fallthru
      _
    %p1535 = scmp.le.s32.totalorder 2, %s10
    // Predicated region
    $region41: #{_basic_block_forward.2} parent=5 // pred_check
      %p1536 = pneg %p1535
    $region42: #{_basic_block_forward.2} parent=5 // pred_check_branch
      %1538 = sbr.rel (%p1536) target = $region44
    $region43: #{_basic_block_forward.2} parent=5 // pred_region
      %s1539 = ssub.s32 %s10, 2
      // Predicated region
      $region45: #{_basic_block_forward.2} parent=43 // pred_check
        %p1540 = pneg %p157
      $region46: #{_basic_block_forward.2} parent=43 // pred_check_branch
        %1542 = sbr.rel (%p1540) target = $region48
      $region47: #{_basic_block_forward.2} parent=43 // pred_region
        %p1543 = scmp.lt.s32.totalorder %s21, 1
        %s1544 = scalar_select %p1543, %s21, 1
        %p1545 = scmp.lt.s32.totalorder %s22, 0
        %s1546 = scalar_select %p1545, %s22, 0
        %s1547 = smul.addr %s1544, 8
        %s1548 = sadd.s32 %s1546, %s1547
        %s1549 = smul.addr %s1548, 4
        %s1550 = scalar_lea.vmem %s4, %s1549
      $region48: #{_basic_block_forward.2} parent=43 // pred_fallthru
        _
    $region44: #{_basic_block_forward.2} parent=5 // pred_fallthru
      _
  $region6: #{_basic_block_forward.2} parent=0 // loop_footer
    %s14 = sadd.s32 1, %s10
  $region7: #{_basic_block_forward.2} parent=0 // loop_footer_branch
    %9 = sbr.rel target = $region3
  $region8: #{_basic_block_forward.2} parent=0 // loop_exit
    _

// kernel: _basic_block_forward.3
$region0: #{_basic_block_forward.3}
  #allocation0 [shape = 'u32[]', space=smem, size = 0x4, offset = 0x4, fixed_abs, tag = 'smem constant byte address 0x4 - core index']
  #allocation1 [shape = 'u32[144,128]{1,0:T(1,128)}', space=vmem, size = 0x12000, scoped, tag = 'internal scratch']
  %s0 = inlined_call_operand.vmem [shape: bf16[2,10,10,8], index: 0, kind: input, shape index: {}]
  %s1 = inlined_call_operand.vmem [shape: bf16[3,3,8,8], index: 1, kind: input, shape index: {}]
  %s2 = inlined_call_operand.vmem [shape: bf16[8,9,9,4], index: 2, kind: input, shape index: {}]
  %s3 = inlined_call_operand.vmem [shape: bf16[4,8], index: 3, kind: input, shape index: {}]
  %s4 = inlined_call_operand.vmem [shape: f32[2,8,8,8], index: 4, kind: output, shape index: {}]
  %s5 = sld [smem:[#allocation0]]
  $region49: #{_basic_block_forward.3} parent=0
    _
  %s7 = ssub.s32 1, %s5
  %s8 = scalar_select 0, %s7, %s5
  loop: start=0, step=1, limit=4
  $region2: #{_basic_block_forward.3} parent=0 // loop_pre_header
    _
  $region3: #{_basic_block_forward.3} parent=0 // loop_header
    %s10 = sphi 0, %s14
    %p11 = scmp.ge.s32.totalorder %s10, 4
    %s17 = sphi 0, %s29
    %s18 = sphi 0, %s25
    %s19 = sphi 0, %s17
    %s20 = sphi 0, %s18
    %s21 = sphi 0, %s19
    %s22 = sphi 0, %s20
    %s32 = sphi 0, %s34
    %s35 = sphi 0, %s32
    %s36 = sphi 0, %s35
    %s52 = sphi 0, %s36
    %s58 = sphi 0, %s60
    %s61 = sphi 0, %s58
    %s62 = sphi 0, %s61
    %s78 = sphi 0, %s62
    %s84 = sphi 0, %s86
    %s87 = sphi 0, %s84
    %s88 = sphi 0, %s87
    %s104 = sphi 0, %s88
    %s110 = sphi 0, %s112
    %s113 = sphi 0, %s110
    %s114 = sphi 0, %s113
    %s130 = sphi 0, %s114
    %s138 = sphi 0, %s140
    %s141 = sphi 0, %s138
    %s142 = sphi 0, %s141
    %s158 = sphi 0, %s142
  $region4: #{_basic_block_forward.3} parent=0 // loop_header_branch
    %13 = sbr.rel (%p11) target = $region8
  $region5: #{_basic_block_forward.3} parent=0 // loop_body
    %s15 = ssub.s32 %s10, 1
    %s16 = ssub.s32 %s10, 2
    %s23 = sadd.s32 1, %s18
    %p24 = scmp.ge.s32.totalorder %s23, 1
    %s25 = scalar_select %p24, 0, %s23
    %s26 = sadd.s32 1, %s17
    %s27 = scalar_select %p24, %s26, %s17
    %p28 = scmp.ge.s32.totalorder %s27, 2
    %s29 = scalar_select %p28, 0, %s27
    %s30 = ssub.s32 %s17, %s29
    %p31 = scmp.eq.s32.totalorder %s30, 0
    %s33 = sadd.s32 %s32, 1
    %s34 = scalar_select %p31, %s32, %s33
    %p37 = pneg %p31
    %p38 = scmp.eq.s32.totalorder %s10, 1
    %p39 = por %p37, %p38
    %p40 = scmp.ne.s32.totalorder %s32, %s35
    %p41 = scmp.eq.s32.totalorder %s10, 0
    %p42 = por %p40, %p41
    %p43 = scmp.ne.s32.totalorder %s32, %s35
    %p44 = scmp.eq.s32.totalorder %s15, 1
    %p45 = por %p43, %p44
    %p46 = scmp.ne.s32.totalorder %s35, %s36
    %p47 = scmp.eq.s32.totalorder %s15, 0
    %p48 = por %p46, %p47
    %p49 = scmp.ne.s32.totalorder %s35, %s36
    %p50 = scmp.eq.s32.totalorder %s16, 1
    %p51 = por %p49, %p50
    %p53 = scmp.ne.s32.totalorder %s36, %s52
    %p54 = scmp.eq.s32.totalorder %s16, 0
    %p55 = por %p53, %p54
    %s56 = ssub.s32 %s18, %s25
    %p57 = scmp.eq.s32.totalorder %s56, 0
    %s59 = sadd.s32 %s58, 1
    %s60 = scalar_select %p57, %s58, %s59
    %p63 = pneg %p57
    %p64 = scmp.eq.s32.totalorder %s10, 1
    %p65 = por %p63, %p64
    %p66 = scmp.ne.s32.totalorder %s58, %s61
    %p67 = scmp.eq.s32.totalorder %s10, 0
    %p68 = por %p66, %p67
    %p69 = scmp.ne.s32.totalorder %s58, %s61
    %p70 = scmp.eq.s32.totalorder %s15, 1
    %p71 = por %p69, %p70
    %p72 = scmp.ne.s32.totalorder %s61, %s62
    %p73 = scmp.eq.s32.totalorder %s15, 0
    %p74 = por %p72, %p73
    %p75 = scmp.ne.s32.totalorder %s61, %s62
    %p76 = scmp.eq.s32.totalorder %s16, 1
    %p77 = por %p75, %p76
    %p79 = scmp.ne.s32.totalorder %s62, %s78
    %p80 = scmp.eq.s32.totalorder %s16, 0
    %p81 = por %p79, %p80
    %s82 = ssub.s32 %s17, %s29
    %p83 = scmp.eq.s32.totalorder %s82, 0
    %s85 = sadd.s32 %s84, 1
    %s86 = scalar_select %p83, %s84, %s85
    %p89 = pneg %p83
    %p90 = scmp.eq.s32.totalorder %s10, 1
    %p91 = por %p89, %p90
    %p92 = scmp.ne.s32.totalorder %s84, %s87
    %p93 = scmp.eq.s32.totalorder %s10, 0
    %p94 = por %p92, %p93
    %p95 = scmp.ne.s32.totalorder %s84, %s87
    %p96 = scmp.eq.s32.totalorder %s15, 1
    %p97 = por %p95, %p96
    %p98 = scmp.ne.s32.totalorder %s87, %s88
    %p99 = scmp.eq.s32.totalorder %s15, 0
    %p100 = por %p98, %p99
    %p101 = scmp.ne.s32.totalorder %s87, %s88
    %p102 = scmp.eq.s32.totalorder %s16, 1
    %p103 = por %p101, %p102
    %p105 = scmp.ne.s32.totalorder %s88, %s104
    %p106 = scmp.eq.s32.totalorder %s16, 0
    %p107 = por %p105, %p106
    %s108 = ssub.s32 %s18, %s25
    %p109 = scmp.eq.s32.totalorder %s108, 0
    %s111 = sadd.s32 %s110, 1
    %s112 = scalar_select %p109, %s110, %s111
    %p115 = pneg %p109
    %p116 = scmp.eq.s32.totalorder %s10, 1
    %p117 = por %p115, %p116
    %p118 = scmp.ne.s32.totalorder %s110, %s113
    %p119 = scmp.eq.s32.totalorder %s10, 0
    %p120 = por %p118, %p119
    %p121 = scmp.ne.s32.totalorder %s110, %s113
    %p122 = scmp.eq.s32.totalorder %s15, 1
    %p123 = por %p121, %p122
    %p124 = scmp.ne.s32.totalorder %s113, %s114
    %p125 = scmp.eq.s32.totalorder %s15, 0
    %p126 = por %p124, %p125
    %p127 = scmp.ne.s32.totalorder %s113, %s114
    %p128 = scmp.eq.s32.totalorder %s16, 1
    %p129 = por %p127, %p128
    %p131 = scmp.ne.s32.totalorder %s114, %s130
    %p132 = scmp.eq.s32.totalorder %s16, 0
    %p133 = por %p131, %p132
    %s134 = ssub.s32 %s17, %s29
    %s135 = ssub.s32 %s18, %s25
    %s136 = sor.u32 %s134, %s135
    %p137 = scmp.eq.s32.totalorder %s136, 0
    %s139 = sadd.s32 %s138, 1
    %s140 = scalar_select %p137, %s138, %s139
    %p143 = pneg %p137
    %p144 = scmp.eq.s32.totalorder %s10, 1
    %p145 = por %p143, %p144
    %p146 = scmp.ne.s32.totalorder %s138, %s141
    %p147 = scmp.eq.s32.totalorder %s10, 0
    %p148 = por %p146, %p147
    %p149 = scmp.ne.s32.totalorder %s138, %s141
    %p150 = scmp.eq.s32.totalorder %s15, 1
    %p151 = por %p149, %p150
    %p152 = scmp.ne.s32.totalorder %s141, %s142
    %p153 = scmp.eq.s32.totalorder %s15, 0
    %p154 = por %p152, %p153
    %p155 = scmp.ne.s32.totalorder %s141, %s142
    %p156 = scmp.eq.s32.totalorder %s16, 1
    %p157 = por %p155, %p156
    %p159 = scmp.ne.s32.totalorder %s142, %s158
    %p160 = scmp.eq.s32.totalorder %s16, 0
    %p161 = por %p159, %p160
    %p162 = scmp.le.s32.totalorder 1, %s10
    %p163 = scmp.lt.s32.totalorder %s10, 3
    %p164 = pnand %p162, %p163
    %p165 = pneg %p164
    // Predicated region
    $region9: #{_basic_block_forward.3} parent=5 // pred_check
      _
    $region10: #{_basic_block_forward.3} parent=5 // pred_check_branch
      %167 = sbr.rel (%p164) target = $region12
    $region11: #{_basic_block_forward.3} parent=5 // pred_region
      %s168 = ssub.s32 %s10, 1
      // Predicated region
      $region13: #{_basic_block_forward.3} parent=11 // pred_check
        %p169 = pneg %p74
      $region14: #{_basic_block_forward.3} parent=11 // pred_check_branch
        %171 = sbr.rel (%p169) target = $region16
      $region15: #{_basic_block_forward.3} parent=11 // pred_region
        %p172 = scmp.lt.s32.totalorder %s20, 0
        %s173 = scalar_select %p172, %s20, 0
        %s174 = smul.addr %s173, 4
        %s175 = scalar_lea.vmem %s1, %s174
      $region16: #{_basic_block_forward.3} parent=11 // pred_fallthru
        _
      // Predicated region
      $region17: #{_basic_block_forward.3} parent=11 // pred_check
        %p176 = pneg %p126
      $region18: #{_basic_block_forward.3} parent=11 // pred_check_branch
        %178 = sbr.rel (%p176) target = $region20
      $region19: #{_basic_block_forward.3} parent=11 // pred_region
        %p179 = scmp.lt.s32.totalorder %s20, 0
        %s180 = scalar_select %p179, %s20, 0
        %s181 = smul.addr %s180, 2
        %s182 = scalar_lea.vmem %s3, %s181
      $region20: #{_basic_block_forward.3} parent=11 // pred_fallthru
        _
    $region12: #{_basic_block_forward.3} parent=5 // pred_fallthru
      _
    %p183 = scmp.lt.s32.totalorder %s10, 2
    // Predicated region
    $region21: #{_basic_block_forward.3} parent=5 // pred_check
      %p184 = pneg %p183
    $region22: #{_basic_block_forward.3} parent=5 // pred_check_branch
      %186 = sbr.rel (%p184) target = $region24
    $region23: #{_basic_block_forward.3} parent=5 // pred_region
      // Predicated region
      $region25: #{_basic_block_forward.3} parent=23 // pred_check
        %p187 = pneg %p42
      $region26: #{_basic_block_forward.3} parent=23 // pred_check_branch
        %189 = sbr.rel (%p187) target = $region28
      $region27: #{_basic_block_forward.3} parent=23 // pred_region
        %p190 = scmp.lt.s32.totalorder %s17, 1
        %s191 = scalar_select %p190, %s17, 1
        %s192 = smul.addr %s191, 20
        %s193 = smul.addr %s192, 4
        %s194 = scalar_lea.vmem %s0, %s193
      $region28: #{_basic_block_forward.3} parent=23 // pred_fallthru
        _
      // Predicated region
      $region29: #{_basic_block_forward.3} parent=23 // pred_check
        %p195 = pneg %p94
      $region30: #{_basic_block_forward.3} parent=23 // pred_check_branch
        %197 = sbr.rel (%p195) target = $region32
      $region31: #{_basic_block_forward.3} parent=23 // pred_region
        %s198 = smul.u32 4, %s17
        %p199 = scmp.lt.s32.totalorder %s198, 7
        %s200 = scalar_select %p199, %s198, 7
        %s201 = smul.addr %s200, 18
        %s202 = smul.addr %s201, 4
        %s203 = scalar_lea.vmem %s2, %s202
        %s204 = smul.u32 4, %s17
      $region32: #{_basic_block_forward.3} parent=23 // pred_fallthru
        _
    $region24: #{_basic_block_forward.3} parent=5 // pred_fallthru
      _
    %p205 = scmp.le.s32.totalorder 1, %s10
    %p206 = scmp.lt.s32.totalorder %s10, 3
    %p207 = pnand %p205, %p206
    %p208 = pneg %p207
    // Predicated region
    $region33: #{_basic_block_forward.3} parent=5 // pred_check
      _
    $region34: #{_basic_block_forward.3} parent=5 // pred_check_branch
      %210 = sbr.rel (%p207) target = $region36
    $region35: #{_basic_block_forward.3} parent=5 // pred_region
      %s211 = ssub.s32 %s10, 1
      %p212 = scmp.lt.s32.totalorder %s19, 1
      %s213 = scalar_select %p212, %s19, 1
      %s214 = smul.addr %s213, 20
      %s215 = smul.addr %s214, 4
      %s216 = scalar_lea.vmem %s0, %s215
      %p217 = pneg %p48
      %p218 = pneg %p45
      %p219 = scmp.lt.s32.totalorder %s20, 0
      %s220 = scalar_select %p219, %s20, 0
      %s221 = smul.addr %s220, 4
      %s222 = scalar_lea.vmem %s1, %s221
      %p223 = pneg %p74
      %p224 = pneg %p71
      %s225 = smul.u32 4, %s19
      %p226 = scmp.lt.s32.totalorder %s225, 7
      %s227 = scalar_select %p226, %s225, 7
      %s228 = smul.addr %s227, 18
      %s229 = smul.addr %s228, 4
      %s230 = scalar_lea.vmem %s2, %s229
      %p231 = pneg %p100
      %p232 = pneg %p97
      %p233 = scmp.lt.s32.totalorder %s20, 0
      %s234 = scalar_select %p233, %s20, 0
      %s235 = smul.addr %s234, 2
      %s236 = scalar_lea.vmem %s3, %s235
      %p237 = pneg %p126
      %p238 = pneg %p123
      %p239 = pneg %p154
      %p240 = pneg %p151
      %p241 = scmp.lt.s32.totalorder %s19, 1
      %s242 = scalar_select %p241, %s19, 1
      %p243 = scmp.lt.s32.totalorder %s20, 0
      %s244 = scalar_select %p243, %s20, 0
      %s245 = smul.addr %s242, 8
      %s246 = sadd.s32 %s244, %s245
      %s247 = smul.addr %s246, 8
      %s248 = scalar_lea.vmem %s4, %s247
      %p249 = scmp.lt.s32.totalorder %s19, 1
      %s250 = scalar_select %p249, %s19, 1
      %s251 = smul.addr %s250, 20
      %s252 = smul.addr %s251, 4
      %s253 = scalar_lea.vmem %s0, %s252
      %p254 = scmp.lt.s32.totalorder %s20, 0
      %s255 = scalar_select %p254, %s20, 0
      %s256 = smul.addr %s255, 4
      %s257 = scalar_lea.vmem %s1, %s256
      %s258 = smul.u32 4, %s19
      %p259 = scmp.lt.s32.totalorder %s258, 7
      %s260 = scalar_select %p259, %s258, 7
      %s261 = smul.addr %s260, 18
      %s262 = smul.addr %s261, 4
      %s263 = scalar_lea.vmem %s2, %s262
      %s264 = smul.u32 4, %s19
      %p265 = scmp.lt.s32.totalorder %s20, 0
      %s266 = scalar_select %p265, %s20, 0
      %s267 = smul.addr %s266, 2
      %s268 = scalar_lea.vmem %s3, %s267
      %p269 = scmp.lt.s32.totalorder %s19, 1
      %s270 = scalar_select %p269, %s19, 1
      %p271 = scmp.lt.s32.totalorder %s20, 0
      %s272 = scalar_select %p271, %s20, 0
      %s273 = smul.addr %s270, 8
      %s274 = sadd.s32 %s272, %s273
      %s275 = smul.addr %s274, 8
      %s276 = scalar_lea.vmem %s4, %s275
      %v278 = vld [vmem:[%s253] sm:$0xf]
      %v279 = vld [vmem:[%s253 + $0x4] sm:$0x1]
      %v280 = vld [vmem:[%s253 + $0x8] sm:$0xf]
      %v281 = vld [vmem:[%s253 + $0xc] sm:$0x1]
      %v282 = vld [vmem:[%s253 + $0x10] sm:$0xf]
      %v283 = vld [vmem:[%s253 + $0x14] sm:$0x1]
      %v284 = vld [vmem:[%s253 + $0x18] sm:$0xf]
      %v285 = vld [vmem:[%s253 + $0x1c] sm:$0x1]
      %v286 = vld [vmem:[%s253 + $0x20] sm:$0xf]
      %v287 = vld [vmem:[%s253 + $0x24] sm:$0x1]
      %v288 = vld [vmem:[%s253 + $0x28] sm:$0xf]
      %v289 = vld [vmem:[%s253 + $0x2c] sm:$0x1]
      %v290 = vld [vmem:[%s253 + $0x30] sm:$0xf]
      %v291 = vld [vmem:[%s253 + $0x34] sm:$0x1]
      %v292 = vld [vmem:[%s253 + $0x38] sm:$0xf]
      %v293 = vld [vmem:[%s253 + $0x3c] sm:$0x1]
      %v294 = vld [vmem:[%s253 + $0x40] sm:$0xf]
      %v295 = vld [vmem:[%s253 + $0x44] sm:$0x1]
      %v296 = vld [vmem:[%s253 + $0x48] sm:$0xf]
      %v297 = vld [vmem:[%s253 + $0x4c] sm:$0x1]
      %v298 = vld [vmem:[%s257] sm:$0xf]
      %v299 = vld [vmem:[%s257 + $0x4] sm:$0xf]
      %v300 = vld [vmem:[%s257 + $0x8] sm:$0xf]
      %v301 = vld [vmem:[%s257 + $0xc] sm:$0xf]
      %v302 = vld [vmem:[%s257 + $0x10] sm:$0xf]
      %v303 = vld [vmem:[%s257 + $0x14] sm:$0xf]
      %v304 = vld [vmem:[%s257 + $0x18] sm:$0xf]
      %v305 = vld [vmem:[%s257 + $0x1c] sm:$0xf]
      %v306 = vld [vmem:[%s257 + $0x20] sm:$0xf]
      %vm307 = vsmask.f32 3328
      %vm308 = vsmask.f32 7440
      %vm309 = vmor %vm307, %vm308
      %v311 = vshrl.u32 %v278, 16
      %v313 = vrot.slane %v311, 4
      %v314 = vshll.u32 %v278, 16
      %v316 = vrot.slane %v314, 5
      %v317 = vor.u32 %v313, %v316
      %v318 = vrot.slane %v317, 4
      %v320 = vshll.u32 %v279, 16
      %v322 = vrot.slane %v320, 5
      %v323 = vsel %vm309, %v318, %v322
      %v325 = vshrl.u32 %v280, 16
      %v327 = vrot.slane %v325, 4
      %v328 = vshll.u32 %v280, 16
      %v330 = vrot.slane %v328, 5
      %v331 = vor.u32 %v327, %v330
      %v332 = vrot.slane %v331, 4
      %v334 = vshll.u32 %v281, 16
      %v336 = vrot.slane %v334, 5
      %v337 = vsel %vm309, %v332, %v336
      %v339 = vshrl.u32 %v282, 16
      %v341 = vrot.slane %v339, 4
      %v342 = vshll.u32 %v282, 16
      %v344 = vrot.slane %v342, 5
      %v345 = vor.u32 %v341, %v344
      %v346 = vrot.slane %v345, 4
      %v348 = vshll.u32 %v283, 16
      %v350 = vrot.slane %v348, 5
      %v351 = vsel %vm309, %v346, %v350
      %v353 = vshrl.u32 %v284, 16
      %v355 = vrot.slane %v353, 4
      %v356 = vshll.u32 %v284, 16
      %v358 = vrot.slane %v356, 5
      %v359 = vor.u32 %v355, %v358
      %v360 = vrot.slane %v359, 4
      %v362 = vshll.u32 %v285, 16
      %v364 = vrot.slane %v362, 5
      %v365 = vsel %vm309, %v360, %v364
      %v367 = vshrl.u32 %v286, 16
      %v369 = vrot.slane %v367, 4
      %v370 = vshll.u32 %v286, 16
      %v372 = vrot.slane %v370, 5
      %v373 = vor.u32 %v369, %v372
      %v374 = vrot.slane %v373, 4
      %v376 = vshll.u32 %v287, 16
      %v378 = vrot.slane %v376, 5
      %v379 = vsel %vm309, %v374, %v378
      %v381 = vshrl.u32 %v288, 16
      %v383 = vrot.slane %v381, 4
      %v384 = vshll.u32 %v288, 16
      %v386 = vrot.slane %v384, 5
      %v387 = vor.u32 %v383, %v386
      %v388 = vrot.slane %v387, 4
      %v390 = vshll.u32 %v289, 16
      %v392 = vrot.slane %v390, 5
      %v393 = vsel %vm309, %v388, %v392
      %v395 = vshrl.u32 %v290, 16
      %v397 = vrot.slane %v395, 4
      %v398 = vshll.u32 %v290, 16
      %v400 = vrot.slane %v398, 5
      %v401 = vor.u32 %v397, %v400
      %v402 = vrot.slane %v401, 4
      %v404 = vshll.u32 %v291, 16
      %v406 = vrot.slane %v404, 5
      %v407 = vsel %vm309, %v402, %v406
      %v409 = vshrl.u32 %v292, 16
      %v411 = vrot.slane %v409, 4
      %v412 = vshll.u32 %v292, 16
      %v414 = vrot.slane %v412, 5
      %v415 = vor.u32 %v411, %v414
      %v416 = vrot.slane %v415, 4
      %v418 = vshll.u32 %v293, 16
      %v420 = vrot.slane %v418, 5
      %v421 = vsel %vm309, %v416, %v420
      %v422 = vunpack.c.l.b16 %v323
      %v423 = vunpack.c.l.b16 %v337
      %v424 = vunpack.c.l.b16 %v351
      %v425 = vunpack.c.l.b16 %v365
      %v426 = vunpack.c.l.b16 %v379
      %v427 = vunpack.c.l.b16 %v393
      %v428 = vunpack.c.l.b16 %v407
      %v429 = vunpack.c.l.b16 %v421
      %v430 = vpack.c.b16 %v423, %v422
      %v431 = vpack.c.b16 %v425, %v424
      %v432 = vpack.c.b16 %v427, %v426
      %v433 = vpack.c.b16 %v429, %v428
      %vm434 = vcmask 64512
      %v436 = vsel %vm434, %v430, 0
      %v439 = vsel %vm434, %v431, 0
      %v442 = vsel %vm434, %v432, 0
      %v445 = vsel %vm434, %v433, 0
      %vm447 = vcmask 1043456
      %v449 = vsel %vm447, %v299, 0
      %451 = vmatprep.subr.bf16.mxu0 0
      %452 = vmatpush1.bf16.msra.mxu0 0
      %453 = vmatprep.subr.bf16.mxu0 0
      %454 = vmatpush1.bf16.msra.mxu0 0
      %455 = vmatprep.subr.bf16.mxu0 0
      %456 = vmatpush1.bf16.msra.mxu0 0
      %457 = vmatprep.subr.bf16.mxu0 0
      %458 = vmatpush1.bf16.msra.mxu0 0
      %459 = vmatprep.subr.bf16.mxu0 0
      %460 = vmatpush1.bf16.msra.mxu0 0
      %461 = vmatprep.subr.bf16.mxu0 0
      %462 = vmatpush1.bf16.msra.mxu0 0
      %463 = vmatprep.subr.bf16.mxu0 0
      %464 = vmatpush1.bf16.msra.mxu0 0
      %465 = vmatprep.subr.bf16.mxu0 0
      %466 = vmatpush1.bf16.msra.mxu0 %v449
      %467 = vmatprep.subr.bf16.mxu0 0
      %468 = vmatpush2.bf16.msra.mxu0 0
      %469 = vmatprep.subr.bf16.mxu0 0
      %470 = vmatpush2.bf16.msra.mxu0 0
      %471 = vmatprep.subr.bf16.mxu0 0
      %472 = vmatpush2.bf16.msra.mxu0 0
      %473 = vmatprep.subr.bf16.mxu0 0
      %474 = vmatpush2.bf16.msra.mxu0 0
      %475 = vmatprep.subr.bf16.mxu0 0
      %476 = vmatpush2.bf16.msra.mxu0 0
      %477 = vmatprep.subr.bf16.mxu0 0
      %478 = vmatpush2.bf16.msra.mxu0 0
      %479 = vmatprep.subr.bf16.mxu0 0
      %480 = vmatpush2.bf16.msra.mxu0 0
      %481 = vmatprep.subr.bf16.mxu0 0
      %482 = vmatpush2.bf16.msra.mxu0 0
      %483 = vmatprep.mubr.bf16.mxu0 0
      %484 = vmatmul.mubr.bf16.gmra.mxu0 %v436
      %v485 = vpop.f32.mrf.mxu0
      %v486 = vadd.f32 0.0, %v485
      %v487 = vpop.f32.mrf.mxu0
      %v488 = vpop.f32.mrf.mxu0
      %v489 = vadd.f32 0.0, %v488
      %v490 = vpop.f32.mrf.mxu0
      %491 = vmatprep.mubr.bf16.mxu0 0
      %492 = vmatmul.mubr.bf16.gmra.mxu0 %v439
      %v493 = vpop.f32.mrf.mxu0
      %v494 = vadd.f32 0.0, %v493
      %v495 = vpop.f32.mrf.mxu0
      %v496 = vpop.f32.mrf.mxu0
      %v497 = vadd.f32 0.0, %v496
      %v498 = vpop.f32.mrf.mxu0
      %499 = vmatprep.mubr.bf16.mxu0 0
      %500 = vmatmul.mubr.bf16.gmra.mxu0 %v442
      %v501 = vpop.f32.mrf.mxu0
      %v502 = vadd.f32 0.0, %v501
      %v503 = vpop.f32.mrf.mxu0
      %v504 = vpop.f32.mrf.mxu0
      %v505 = vadd.f32 0.0, %v504
      %v506 = vpop.f32.mrf.mxu0
      %507 = vmatprep.mubr.bf16.mxu0 0
      %508 = vmatmul.mubr.bf16.gmra.mxu0 %v445
      %v509 = vpop.f32.mrf.mxu0
      %v510 = vadd.f32 0.0, %v509
      %v511 = vpop.f32.mrf.mxu0
      %v512 = vpop.f32.mrf.mxu0
      %v513 = vadd.f32 0.0, %v512
      %v514 = vpop.f32.mrf.mxu0
      %515 = vdwg.mxu0
      %v524 = vunpack.c.l.b16 %v278
      %v525 = vunpack.c.l.b16 %v280
      %v526 = vunpack.c.l.b16 %v282
      %v527 = vunpack.c.l.b16 %v284
      %v528 = vunpack.c.l.b16 %v286
      %v529 = vunpack.c.l.b16 %v288
      %v530 = vunpack.c.l.b16 %v290
      %v531 = vunpack.c.l.b16 %v292
      %v532 = vpack.c.b16 %v525, %v524
      %v533 = vpack.c.b16 %v527, %v526
      %v534 = vpack.c.b16 %v529, %v528
      %v535 = vpack.c.b16 %v531, %v530
      %v537 = vsel %vm434, %v532, 0
      %v540 = vsel %vm434, %v533, 0
      %v543 = vsel %vm434, %v534, 0
      %v546 = vsel %vm434, %v535, 0
      %v549 = vsel %vm447, %v298, 0
      %551 = vmatprep.subr.bf16.mxu0 0
      %552 = vmatpush1.bf16.msra.mxu0 0
      %553 = vmatprep.subr.bf16.mxu0 0
      %554 = vmatpush1.bf16.msra.mxu0 0
      %555 = vmatprep.subr.bf16.mxu0 0
      %556 = vmatpush1.bf16.msra.mxu0 0
      %557 = vmatprep.subr.bf16.mxu0 0
      %558 = vmatpush1.bf16.msra.mxu0 0
      %559 = vmatprep.subr.bf16.mxu0 0
      %560 = vmatpush1.bf16.msra.mxu0 0
      %561 = vmatprep.subr.bf16.mxu0 0
      %562 = vmatpush1.bf16.msra.mxu0 0
      %563 = vmatprep.subr.bf16.mxu0 0
      %564 = vmatpush1.bf16.msra.mxu0 0
      %565 = vmatprep.subr.bf16.mxu0 0
      %566 = vmatpush1.bf16.msra.mxu0 %v549
      %567 = vmatprep.subr.bf16.mxu0 0
      %568 = vmatpush2.bf16.msra.mxu0 0
      %569 = vmatprep.subr.bf16.mxu0 0
      %570 = vmatpush2.bf16.msra.mxu0 0
      %571 = vmatprep.subr.bf16.mxu0 0
      %572 = vmatpush2.bf16.msra.mxu0 0
      %573 = vmatprep.subr.bf16.mxu0 0
      %574 = vmatpush2.bf16.msra.mxu0 0
      %575 = vmatprep.subr.bf16.mxu0 0
      %576 = vmatpush2.bf16.msra.mxu0 0
      %577 = vmatprep.subr.bf16.mxu0 0
      %578 = vmatpush2.bf16.msra.mxu0 0
      %579 = vmatprep.subr.bf16.mxu0 0
      %580 = vmatpush2.bf16.msra.mxu0 0
      %581 = vmatprep.subr.bf16.mxu0 0
      %582 = vmatpush2.bf16.msra.mxu0 0
      %583 = vmatprep.mubr.bf16.mxu0 0
      %584 = vmatmul.mubr.bf16.gmra.mxu0 %v537
      %v585 = vpop.f32.mrf.mxu0
      %v586 = vadd.f32 %v486, %v585
      %v587 = vpop.f32.mrf.mxu0
      %v588 = vpop.f32.mrf.mxu0
      %v589 = vadd.f32 %v489, %v588
      %v590 = vpop.f32.mrf.mxu0
      %591 = vmatprep.mubr.bf16.mxu0 0
      %592 = vmatmul.mubr.bf16.gmra.mxu0 %v540
      %v593 = vpop.f32.mrf.mxu0
      %v594 = vadd.f32 %v494, %v593
      %v595 = vpop.f32.mrf.mxu0
      %v596 = vpop.f32.mrf.mxu0
      %v597 = vadd.f32 %v497, %v596
      %v598 = vpop.f32.mrf.mxu0
      %599 = vmatprep.mubr.bf16.mxu0 0
      %600 = vmatmul.mubr.bf16.gmra.mxu0 %v543
      %v601 = vpop.f32.mrf.mxu0
      %v602 = vadd.f32 %v502, %v601
      %v603 = vpop.f32.mrf.mxu0
      %v604 = vpop.f32.mrf.mxu0
      %v605 = vadd.f32 %v505, %v604
      %v606 = vpop.f32.mrf.mxu0
      %607 = vmatprep.mubr.bf16.mxu0 0
      %608 = vmatmul.mubr.bf16.gmra.mxu0 %v546
      %v609 = vpop.f32.mrf.mxu0
      %v610 = vadd.f32 %v510, %v609
      %v611 = vpop.f32.mrf.mxu0
      %v612 = vpop.f32.mrf.mxu0
      %v613 = vadd.f32 %v513, %v612
      %v614 = vpop.f32.mrf.mxu0
      %615 = vdwg.mxu0
      %vm624 = vcmask 1042432
      %vm625 = vcmask 1046532
      %vm626 = vmor %vm624, %vm625
      %v627 = vrot.slane %v278, 5
      %v628 = vrot.slane %v627, 4
      %v629 = vrot.slane %v279, 5
      %v630 = vsel %vm626, %v628, %v629
      %v631 = vrot.slane %v280, 5
      %v632 = vrot.slane %v631, 4
      %v633 = vrot.slane %v281, 5
      %v634 = vsel %vm626, %v632, %v633
      %v635 = vrot.slane %v282, 5
      %v636 = vrot.slane %v635, 4
      %v637 = vrot.slane %v283, 5
      %v638 = vsel %vm626, %v636, %v637
      %v639 = vrot.slane %v284, 5
      %v640 = vrot.slane %v639, 4
      %v641 = vrot.slane %v285, 5
      %v642 = vsel %vm626, %v640, %v641
      %v643 = vrot.slane %v286, 5
      %v644 = vrot.slane %v643, 4
      %v645 = vrot.slane %v287, 5
      %v646 = vsel %vm626, %v644, %v645
      %v647 = vrot.slane %v288, 5
      %v648 = vrot.slane %v647, 4
      %v649 = vrot.slane %v289, 5
      %v650 = vsel %vm626, %v648, %v649
      %v651 = vrot.slane %v290, 5
      %v652 = vrot.slane %v651, 4
      %v653 = vrot.slane %v291, 5
      %v654 = vsel %vm626, %v652, %v653
      %v655 = vrot.slane %v292, 5
      %v656 = vrot.slane %v655, 4
      %v657 = vrot.slane %v293, 5
      %v658 = vsel %vm626, %v656, %v657
      %v659 = vunpack.c.l.b16 %v630
      %v660 = vunpack.c.l.b16 %v634
      %v661 = vunpack.c.l.b16 %v638
      %v662 = vunpack.c.l.b16 %v642
      %v663 = vunpack.c.l.b16 %v646
      %v664 = vunpack.c.l.b16 %v650
      %v665 = vunpack.c.l.b16 %v654
      %v666 = vunpack.c.l.b16 %v658
      %v667 = vpack.c.b16 %v660, %v659
      %v668 = vpack.c.b16 %v662, %v661
      %v669 = vpack.c.b16 %v664, %v663
      %v670 = vpack.c.b16 %v666, %v665
      %v672 = vsel %vm434, %v667, 0
      %v675 = vsel %vm434, %v668, 0
      %v678 = vsel %vm434, %v669, 0
      %v681 = vsel %vm434, %v670, 0
      %v684 = vsel %vm447, %v300, 0
      %686 = vmatprep.subr.bf16.mxu0 0
      %687 = vmatpush1.bf16.msra.mxu0 0
      %688 = vmatprep.subr.bf16.mxu0 0
      %689 = vmatpush1.bf16.msra.mxu0 0
      %690 = vmatprep.subr.bf16.mxu0 0
      %691 = vmatpush1.bf16.msra.mxu0 0
      %692 = vmatprep.subr.bf16.mxu0 0
      %693 = vmatpush1.bf16.msra.mxu0 0
      %694 = vmatprep.subr.bf16.mxu0 0
      %695 = vmatpush1.bf16.msra.mxu0 0
      %696 = vmatprep.subr.bf16.mxu0 0
      %697 = vmatpush1.bf16.msra.mxu0 0
      %698 = vmatprep.subr.bf16.mxu0 0
      %699 = vmatpush1.bf16.msra.mxu0 0
      %700 = vmatprep.subr.bf16.mxu0 0
      %701 = vmatpush1.bf16.msra.mxu0 %v684
      %702 = vmatprep.subr.bf16.mxu0 0
      %703 = vmatpush2.bf16.msra.mxu0 0
      %704 = vmatprep.subr.bf16.mxu0 0
      %705 = vmatpush2.bf16.msra.mxu0 0
      %706 = vmatprep.subr.bf16.mxu0 0
      %707 = vmatpush2.bf16.msra.mxu0 0
      %708 = vmatprep.subr.bf16.mxu0 0
      %709 = vmatpush2.bf16.msra.mxu0 0
      %710 = vmatprep.subr.bf16.mxu0 0
      %711 = vmatpush2.bf16.msra.mxu0 0
      %712 = vmatprep.subr.bf16.mxu0 0
      %713 = vmatpush2.bf16.msra.mxu0 0
      %714 = vmatprep.subr.bf16.mxu0 0
      %715 = vmatpush2.bf16.msra.mxu0 0
      %716 = vmatprep.subr.bf16.mxu0 0
      %717 = vmatpush2.bf16.msra.mxu0 0
      %718 = vmatprep.mubr.bf16.mxu0 0
      %719 = vmatmul.mubr.bf16.gmra.mxu0 %v672
      %v720 = vpop.f32.mrf.mxu0
      %v721 = vadd.f32 0.0, %v720
      %v722 = vpop.f32.mrf.mxu0
      %v723 = vpop.f32.mrf.mxu0
      %v724 = vadd.f32 0.0, %v723
      %v725 = vpop.f32.mrf.mxu0
      %726 = vmatprep.mubr.bf16.mxu0 0
      %727 = vmatmul.mubr.bf16.gmra.mxu0 %v675
      %v728 = vpop.f32.mrf.mxu0
      %v729 = vadd.f32 0.0, %v728
      %v730 = vpop.f32.mrf.mxu0
      %v731 = vpop.f32.mrf.mxu0
      %v732 = vadd.f32 0.0, %v731
      %v733 = vpop.f32.mrf.mxu0
      %734 = vmatprep.mubr.bf16.mxu0 0
      %735 = vmatmul.mubr.bf16.gmra.mxu0 %v678
      %v736 = vpop.f32.mrf.mxu0
      %v737 = vadd.f32 0.0, %v736
      %v738 = vpop.f32.mrf.mxu0
      %v739 = vpop.f32.mrf.mxu0
      %v740 = vadd.f32 0.0, %v739
      %v741 = vpop.f32.mrf.mxu0
      %742 = vmatprep.mubr.bf16.mxu0 0
      %743 = vmatmul.mubr.bf16.gmra.mxu0 %v681
      %v744 = vpop.f32.mrf.mxu0
      %v745 = vadd.f32 0.0, %v744
      %v746 = vpop.f32.mrf.mxu0
      %v747 = vpop.f32.mrf.mxu0
      %v748 = vadd.f32 0.0, %v747
      %v749 = vpop.f32.mrf.mxu0
      %750 = vdwg.mxu0
      %v751 = vadd.f32 %v586, %v721
      %v752 = vadd.f32 %v589, %v724
      %v753 = vadd.f32 %v594, %v729
      %v754 = vadd.f32 %v597, %v732
      %v755 = vadd.f32 %v602, %v737
      %v756 = vadd.f32 %v605, %v740
      %v757 = vadd.f32 %v610, %v745
      %v758 = vadd.f32 %v613, %v748
      %v760 = vunpack.c.l.b16 %v294
      %v761 = vpack.c.b16 %v526, %v525
      %v762 = vpack.c.b16 %v528, %v527
      %v763 = vpack.c.b16 %v530, %v529
      %v764 = vpack.c.b16 %v760, %v531
      %v766 = vsel %vm434, %v761, 0
      %v769 = vsel %vm434, %v762, 0
      %v772 = vsel %vm434, %v763, 0
      %v775 = vsel %vm434, %v764, 0
      %v778 = vsel %vm447, %v301, 0
      %780 = vmatprep.subr.bf16.mxu0 0
      %781 = vmatpush1.bf16.msra.mxu0 0
      %782 = vmatprep.subr.bf16.mxu0 0
      %783 = vmatpush1.bf16.msra.mxu0 0
      %784 = vmatprep.subr.bf16.mxu0 0
      %785 = vmatpush1.bf16.msra.mxu0 0
      %786 = vmatprep.subr.bf16.mxu0 0
      %787 = vmatpush1.bf16.msra.mxu0 0
      %788 = vmatprep.subr.bf16.mxu0 0
      %789 = vmatpush1.bf16.msra.mxu0 0
      %790 = vmatprep.subr.bf16.mxu0 0
      %791 = vmatpush1.bf16.msra.mxu0 0
      %792 = vmatprep.subr.bf16.mxu0 0
      %793 = vmatpush1.bf16.msra.mxu0 0
      %794 = vmatprep.subr.bf16.mxu0 0
      %795 = vmatpush1.bf16.msra.mxu0 %v778
      %796 = vmatprep.subr.bf16.mxu0 0
      %797 = vmatpush2.bf16.msra.mxu0 0
      %798 = vmatprep.subr.bf16.mxu0 0
      %799 = vmatpush2.bf16.msra.mxu0 0
      %800 = vmatprep.subr.bf16.mxu0 0
      %801 = vmatpush2.bf16.msra.mxu0 0
      %802 = vmatprep.subr.bf16.mxu0 0
      %803 = vmatpush2.bf16.msra.mxu0 0
      %804 = vmatprep.subr.bf16.mxu0 0
      %805 = vmatpush2.bf16.msra.mxu0 0
      %806 = vmatprep.subr.bf16.mxu0 0
      %807 = vmatpush2.bf16.msra.mxu0 0
      %808 = vmatprep.subr.bf16.mxu0 0
      %809 = vmatpush2.bf16.msra.mxu0 0
      %810 = vmatprep.subr.bf16.mxu0 0
      %811 = vmatpush2.bf16.msra.mxu0 0
      %812 = vmatprep.mubr.bf16.mxu0 0
      %813 = vmatmul.mubr.bf16.gmra.mxu0 %v766
      %v814 = vpop.f32.mrf.mxu0
      %v815 = vadd.f32 0.0, %v814
      %v816 = vpop.f32.mrf.mxu0
      %v817 = vpop.f32.mrf.mxu0
      %v818 = vadd.f32 0.0, %v817
      %v819 = vpop.f32.mrf.mxu0
      %820 = vmatprep.mubr.bf16.mxu0 0
      %821 = vmatmul.mubr.bf16.gmra.mxu0 %v769
      %v822 = vpop.f32.mrf.mxu0
      %v823 = vadd.f32 0.0, %v822
      %v824 = vpop.f32.mrf.mxu0
      %v825 = vpop.f32.mrf.mxu0
      %v826 = vadd.f32 0.0, %v825
      %v827 = vpop.f32.mrf.mxu0
      %828 = vmatprep.mubr.bf16.mxu0 0
      %829 = vmatmul.mubr.bf16.gmra.mxu0 %v772
      %v830 = vpop.f32.mrf.mxu0
      %v831 = vadd.f32 0.0, %v830
      %v832 = vpop.f32.mrf.mxu0
      %v833 = vpop.f32.mrf.mxu0
      %v834 = vadd.f32 0.0, %v833
      %v835 = vpop.f32.mrf.mxu0
      %836 = vmatprep.mubr.bf16.mxu0 0
      %837 = vmatmul.mubr.bf16.gmra.mxu0 %v775
      %v838 = vpop.f32.mrf.mxu0
      %v839 = vadd.f32 0.0, %v838
      %v840 = vpop.f32.mrf.mxu0
      %v841 = vpop.f32.mrf.mxu0
      %v842 = vadd.f32 0.0, %v841
      %v843 = vpop.f32.mrf.mxu0
      %844 = vdwg.mxu0
      %v845 = vadd.f32 %v751, %v815
      %v846 = vadd.f32 %v752, %v818
      %v847 = vadd.f32 %v753, %v823
      %v848 = vadd.f32 %v754, %v826
      %v849 = vadd.f32 %v755, %v831
      %v850 = vadd.f32 %v756, %v834
      %v851 = vadd.f32 %v757, %v839
      %v852 = vadd.f32 %v758, %v842
      %v854 = vshrl.u32 %v294, 16
      %v856 = vrot.slane %v854, 4
      %v857 = vshll.u32 %v294, 16
      %v859 = vrot.slane %v857, 5
      %v860 = vor.u32 %v856, %v859
      %v861 = vrot.slane %v860, 4
      %v863 = vshll.u32 %v295, 16
      %v865 = vrot.slane %v863, 5
      %v866 = vsel %vm309, %v861, %v865
      %v867 = vunpack.c.l.b16 %v866
      %v868 = vpack.c.b16 %v424, %v423
      %v869 = vpack.c.b16 %v426, %v425
      %v870 = vpack.c.b16 %v428, %v427
      %v871 = vpack.c.b16 %v867, %v429
      %v873 = vsel %vm434, %v868, 0
      %v876 = vsel %vm434, %v869, 0
      %v879 = vsel %vm434, %v870, 0
      %v882 = vsel %vm434, %v871, 0
      %v885 = vsel %vm447, %v302, 0
      %887 = vmatprep.subr.bf16.mxu0 0
      %888 = vmatpush1.bf16.msra.mxu0 0
      %889 = vmatprep.subr.bf16.mxu0 0
      %890 = vmatpush1.bf16.msra.mxu0 0
      %891 = vmatprep.subr.bf16.mxu0 0
      %892 = vmatpush1.bf16.msra.mxu0 0
      %893 = vmatprep.subr.bf16.mxu0 0
      %894 = vmatpush1.bf16.msra.mxu0 0
      %895 = vmatprep.subr.bf16.mxu0 0
      %896 = vmatpush1.bf16.msra.mxu0 0
      %897 = vmatprep.subr.bf16.mxu0 0
      %898 = vmatpush1.bf16.msra.mxu0 0
      %899 = vmatprep.subr.bf16.mxu0 0
      %900 = vmatpush1.bf16.msra.mxu0 0
      %901 = vmatprep.subr.bf16.mxu0 0
      %902 = vmatpush1.bf16.msra.mxu0 %v885
      %903 = vmatprep.subr.bf16.mxu0 0
      %904 = vmatpush2.bf16.msra.mxu0 0
      %905 = vmatprep.subr.bf16.mxu0 0
      %906 = vmatpush2.bf16.msra.mxu0 0
      %907 = vmatprep.subr.bf16.mxu0 0
      %908 = vmatpush2.bf16.msra.mxu0 0
      %909 = vmatprep.subr.bf16.mxu0 0
      %910 = vmatpush2.bf16.msra.mxu0 0
      %911 = vmatprep.subr.bf16.mxu0 0
      %912 = vmatpush2.bf16.msra.mxu0 0
      %913 = vmatprep.subr.bf16.mxu0 0
      %914 = vmatpush2.bf16.msra.mxu0 0
      %915 = vmatprep.subr.bf16.mxu0 0
      %916 = vmatpush2.bf16.msra.mxu0 0
      %917 = vmatprep.subr.bf16.mxu0 0
      %918 = vmatpush2.bf16.msra.mxu0 0
      %919 = vmatprep.mubr.bf16.mxu0 0
      %920 = vmatmul.mubr.bf16.gmra.mxu0 %v873
      %v921 = vpop.f32.mrf.mxu0
      %v922 = vadd.f32 0.0, %v921
      %v923 = vpop.f32.mrf.mxu0
      %v924 = vpop.f32.mrf.mxu0
      %v925 = vadd.f32 0.0, %v924
      %v926 = vpop.f32.mrf.mxu0
      %927 = vmatprep.mubr.bf16.mxu0 0
      %928 = vmatmul.mubr.bf16.gmra.mxu0 %v876
      %v929 = vpop.f32.mrf.mxu0
      %v930 = vadd.f32 0.0, %v929
      %v931 = vpop.f32.mrf.mxu0
      %v932 = vpop.f32.mrf.mxu0
      %v933 = vadd.f32 0.0, %v932
      %v934 = vpop.f32.mrf.mxu0
      %935 = vmatprep.mubr.bf16.mxu0 0
      %936 = vmatmul.mubr.bf16.gmra.mxu0 %v879
      %v937 = vpop.f32.mrf.mxu0
      %v938 = vadd.f32 0.0, %v937
      %v939 = vpop.f32.mrf.mxu0
      %v940 = vpop.f32.mrf.mxu0
      %v941 = vadd.f32 0.0, %v940
      %v942 = vpop.f32.mrf.mxu0
      %943 = vmatprep.mubr.bf16.mxu0 0
      %944 = vmatmul.mubr.bf16.gmra.mxu0 %v882
      %v945 = vpop.f32.mrf.mxu0
      %v946 = vadd.f32 0.0, %v945
      %v947 = vpop.f32.mrf.mxu0
      %v948 = vpop.f32.mrf.mxu0
      %v949 = vadd.f32 0.0, %v948
      %v950 = vpop.f32.mrf.mxu0
      %951 = vdwg.mxu0
      %v952 = vadd.f32 %v845, %v922
      %v953 = vadd.f32 %v846, %v925
      %v954 = vadd.f32 %v847, %v930
      %v955 = vadd.f32 %v848, %v933
      %v956 = vadd.f32 %v849, %v938
      %v957 = vadd.f32 %v850, %v941
      %v958 = vadd.f32 %v851, %v946
      %v959 = vadd.f32 %v852, %v949
      %v961 = vrot.slane %v294, 5
      %v962 = vrot.slane %v961, 4
      %v963 = vrot.slane %v295, 5
      %v964 = vsel %vm626, %v962, %v963
      %v965 = vunpack.c.l.b16 %v964
      %v966 = vpack.c.b16 %v661, %v660
      %v967 = vpack.c.b16 %v663, %v662
      %v968 = vpack.c.b16 %v665, %v664
      %v969 = vpack.c.b16 %v965, %v666
      %v971 = vsel %vm434, %v966, 0
      %v974 = vsel %vm434, %v967, 0
      %v977 = vsel %vm434, %v968, 0
      %v980 = vsel %vm434, %v969, 0
      %v983 = vsel %vm447, %v303, 0
      %985 = vmatprep.subr.bf16.mxu0 0
      %986 = vmatpush1.bf16.msra.mxu0 0
      %987 = vmatprep.subr.bf16.mxu0 0
      %988 = vmatpush1.bf16.msra.mxu0 0
      %989 = vmatprep.subr.bf16.mxu0 0
      %990 = vmatpush1.bf16.msra.mxu0 0
      %991 = vmatprep.subr.bf16.mxu0 0
      %992 = vmatpush1.bf16.msra.mxu0 0
      %993 = vmatprep.subr.bf16.mxu0 0
      %994 = vmatpush1.bf16.msra.mxu0 0
      %995 = vmatprep.subr.bf16.mxu0 0
      %996 = vmatpush1.bf16.msra.mxu0 0
      %997 = vmatprep.subr.bf16.mxu0 0
      %998 = vmatpush1.bf16.msra.mxu0 0
      %999 = vmatprep.subr.bf16.mxu0 0
      %1000 = vmatpush1.bf16.msra.mxu0 %v983
      %1001 = vmatprep.subr.bf16.mxu0 0
      %1002 = vmatpush2.bf16.msra.mxu0 0
      %1003 = vmatprep.subr.bf16.mxu0 0
      %1004 = vmatpush2.bf16.msra.mxu0 0
      %1005 = vmatprep.subr.bf16.mxu0 0
      %1006 = vmatpush2.bf16.msra.mxu0 0
      %1007 = vmatprep.subr.bf16.mxu0 0
      %1008 = vmatpush2.bf16.msra.mxu0 0
      %1009 = vmatprep.subr.bf16.mxu0 0
      %1010 = vmatpush2.bf16.msra.mxu0 0
      %1011 = vmatprep.subr.bf16.mxu0 0
      %1012 = vmatpush2.bf16.msra.mxu0 0
      %1013 = vmatprep.subr.bf16.mxu0 0
      %1014 = vmatpush2.bf16.msra.mxu0 0
      %1015 = vmatprep.subr.bf16.mxu0 0
      %1016 = vmatpush2.bf16.msra.mxu0 0
      %1017 = vmatprep.mubr.bf16.mxu0 0
      %1018 = vmatmul.mubr.bf16.gmra.mxu0 %v971
      %v1019 = vpop.f32.mrf.mxu0
      %v1020 = vadd.f32 0.0, %v1019
      %v1021 = vpop.f32.mrf.mxu0
      %v1022 = vpop.f32.mrf.mxu0
      %v1023 = vadd.f32 0.0, %v1022
      %v1024 = vpop.f32.mrf.mxu0
      %1025 = vmatprep.mubr.bf16.mxu0 0
      %1026 = vmatmul.mubr.bf16.gmra.mxu0 %v974
      %v1027 = vpop.f32.mrf.mxu0
      %v1028 = vadd.f32 0.0, %v1027
      %v1029 = vpop.f32.mrf.mxu0
      %v1030 = vpop.f32.mrf.mxu0
      %v1031 = vadd.f32 0.0, %v1030
      %v1032 = vpop.f32.mrf.mxu0
      %1033 = vmatprep.mubr.bf16.mxu0 0
      %1034 = vmatmul.mubr.bf16.gmra.mxu0 %v977
      %v1035 = vpop.f32.mrf.mxu0
      %v1036 = vadd.f32 0.0, %v1035
      %v1037 = vpop.f32.mrf.mxu0
      %v1038 = vpop.f32.mrf.mxu0
      %v1039 = vadd.f32 0.0, %v1038
      %v1040 = vpop.f32.mrf.mxu0
      %1041 = vmatprep.mubr.bf16.mxu0 0
      %1042 = vmatmul.mubr.bf16.gmra.mxu0 %v980
      %v1043 = vpop.f32.mrf.mxu0
      %v1044 = vadd.f32 0.0, %v1043
      %v1045 = vpop.f32.mrf.mxu0
      %v1046 = vpop.f32.mrf.mxu0
      %v1047 = vadd.f32 0.0, %v1046
      %v1048 = vpop.f32.mrf.mxu0
      %1049 = vdwg.mxu0
      %v1050 = vadd.f32 %v952, %v1020
      %v1051 = vadd.f32 %v953, %v1023
      %v1052 = vadd.f32 %v954, %v1028
      %v1053 = vadd.f32 %v955, %v1031
      %v1054 = vadd.f32 %v956, %v1036
      %v1055 = vadd.f32 %v957, %v1039
      %v1056 = vadd.f32 %v958, %v1044
      %v1057 = vadd.f32 %v959, %v1047
      %v1059 = vunpack.c.l.b16 %v296
      %v1060 = vpack.c.b16 %v1059, %v760
      %v1062 = vsel %vm434, %v1060, 0
      %v1065 = vsel %vm447, %v304, 0
      %1067 = vmatprep.subr.bf16.mxu0 0
      %1068 = vmatpush1.bf16.msra.mxu0 0
      %1069 = vmatprep.subr.bf16.mxu0 0
      %1070 = vmatpush1.bf16.msra.mxu0 0
      %1071 = vmatprep.subr.bf16.mxu0 0
      %1072 = vmatpush1.bf16.msra.mxu0 0
      %1073 = vmatprep.subr.bf16.mxu0 0
      %1074 = vmatpush1.bf16.msra.mxu0 0
      %1075 = vmatprep.subr.bf16.mxu0 0
      %1076 = vmatpush1.bf16.msra.mxu0 0
      %1077 = vmatprep.subr.bf16.mxu0 0
      %1078 = vmatpush1.bf16.msra.mxu0 0
      %1079 = vmatprep.subr.bf16.mxu0 0
      %1080 = vmatpush1.bf16.msra.mxu0 0
      %1081 = vmatprep.subr.bf16.mxu0 0
      %1082 = vmatpush1.bf16.msra.mxu0 %v1065
      %1083 = vmatprep.subr.bf16.mxu0 0
      %1084 = vmatpush2.bf16.msra.mxu0 0
      %1085 = vmatprep.subr.bf16.mxu0 0
      %1086 = vmatpush2.bf16.msra.mxu0 0
      %1087 = vmatprep.subr.bf16.mxu0 0
      %1088 = vmatpush2.bf16.msra.mxu0 0
      %1089 = vmatprep.subr.bf16.mxu0 0
      %1090 = vmatpush2.bf16.msra.mxu0 0
      %1091 = vmatprep.subr.bf16.mxu0 0
      %1092 = vmatpush2.bf16.msra.mxu0 0
      %1093 = vmatprep.subr.bf16.mxu0 0
      %1094 = vmatpush2.bf16.msra.mxu0 0
      %1095 = vmatprep.subr.bf16.mxu0 0
      %1096 = vmatpush2.bf16.msra.mxu0 0
      %1097 = vmatprep.subr.bf16.mxu0 0
      %1098 = vmatpush2.bf16.msra.mxu0 0
      %1099 = vmatprep.mubr.bf16.mxu0 0
      %1100 = vmatmul.mubr.bf16.gmra.mxu0 %v540
      %v1101 = vpop.f32.mrf.mxu0
      %v1102 = vadd.f32 0.0, %v1101
      %v1103 = vpop.f32.mrf.mxu0
      %v1104 = vpop.f32.mrf.mxu0
      %v1105 = vadd.f32 0.0, %v1104
      %v1106 = vpop.f32.mrf.mxu0
      %1107 = vmatprep.mubr.bf16.mxu0 0
      %1108 = vmatmul.mubr.bf16.gmra.mxu0 %v543
      %v1109 = vpop.f32.mrf.mxu0
      %v1110 = vadd.f32 0.0, %v1109
      %v1111 = vpop.f32.mrf.mxu0
      %v1112 = vpop.f32.mrf.mxu0
      %v1113 = vadd.f32 0.0, %v1112
      %v1114 = vpop.f32.mrf.mxu0
      %1115 = vmatprep.mubr.bf16.mxu0 0
      %1116 = vmatmul.mubr.bf16.gmra.mxu0 %v546
      %v1117 = vpop.f32.mrf.mxu0
      %v1118 = vadd.f32 0.0, %v1117
      %v1119 = vpop.f32.mrf.mxu0
      %v1120 = vpop.f32.mrf.mxu0
      %v1121 = vadd.f32 0.0, %v1120
      %v1122 = vpop.f32.mrf.mxu0
      %1123 = vmatprep.mubr.bf16.mxu0 0
      %1124 = vmatmul.mubr.bf16.gmra.mxu0 %v1062
      %v1125 = vpop.f32.mrf.mxu0
      %v1126 = vadd.f32 0.0, %v1125
      %v1127 = vpop.f32.mrf.mxu0
      %v1128 = vpop.f32.mrf.mxu0
      %v1129 = vadd.f32 0.0, %v1128
      %v1130 = vpop.f32.mrf.mxu0
      %1131 = vdwg.mxu0
      %v1132 = vadd.f32 %v1050, %v1102
      %v1133 = vadd.f32 %v1051, %v1105
      %v1134 = vadd.f32 %v1052, %v1110
      %v1135 = vadd.f32 %v1053, %v1113
      %v1136 = vadd.f32 %v1054, %v1118
      %v1137 = vadd.f32 %v1055, %v1121
      %v1138 = vadd.f32 %v1056, %v1126
      %v1139 = vadd.f32 %v1057, %v1129
      %v1141 = vshrl.u32 %v296, 16
      %v1143 = vrot.slane %v1141, 4
      %v1144 = vshll.u32 %v296, 16
      %v1146 = vrot.slane %v1144, 5
      %v1147 = vor.u32 %v1143, %v1146
      %v1148 = vrot.slane %v1147, 4
      %v1150 = vshll.u32 %v297, 16
      %v1152 = vrot.slane %v1150, 5
      %v1153 = vsel %vm309, %v1148, %v1152
      %v1154 = vunpack.c.l.b16 %v1153
      %v1155 = vpack.c.b16 %v1154, %v867
      %v1157 = vsel %vm434, %v1155, 0
      %v1160 = vsel %vm447, %v305, 0
      %1162 = vmatprep.subr.bf16.mxu0 0
      %1163 = vmatpush1.bf16.msra.mxu0 0
      %1164 = vmatprep.subr.bf16.mxu0 0
      %1165 = vmatpush1.bf16.msra.mxu0 0
      %1166 = vmatprep.subr.bf16.mxu0 0
      %1167 = vmatpush1.bf16.msra.mxu0 0
      %1168 = vmatprep.subr.bf16.mxu0 0
      %1169 = vmatpush1.bf16.msra.mxu0 0
      %1170 = vmatprep.subr.bf16.mxu0 0
      %1171 = vmatpush1.bf16.msra.mxu0 0
      %1172 = vmatprep.subr.bf16.mxu0 0
      %1173 = vmatpush1.bf16.msra.mxu0 0
      %1174 = vmatprep.subr.bf16.mxu0 0
      %1175 = vmatpush1.bf16.msra.mxu0 0
      %1176 = vmatprep.subr.bf16.mxu0 0
      %1177 = vmatpush1.bf16.msra.mxu0 %v1160
      %1178 = vmatprep.subr.bf16.mxu0 0
      %1179 = vmatpush2.bf16.msra.mxu0 0
      %1180 = vmatprep.subr.bf16.mxu0 0
      %1181 = vmatpush2.bf16.msra.mxu0 0
      %1182 = vmatprep.subr.bf16.mxu0 0
      %1183 = vmatpush2.bf16.msra.mxu0 0
      %1184 = vmatprep.subr.bf16.mxu0 0
      %1185 = vmatpush2.bf16.msra.mxu0 0
      %1186 = vmatprep.subr.bf16.mxu0 0
      %1187 = vmatpush2.bf16.msra.mxu0 0
      %1188 = vmatprep.subr.bf16.mxu0 0
      %1189 = vmatpush2.bf16.msra.mxu0 0
      %1190 = vmatprep.subr.bf16.mxu0 0
      %1191 = vmatpush2.bf16.msra.mxu0 0
      %1192 = vmatprep.subr.bf16.mxu0 0
      %1193 = vmatpush2.bf16.msra.mxu0 0
      %1194 = vmatprep.mubr.bf16.mxu0 0
      %1195 = vmatmul.mubr.bf16.gmra.mxu0 %v439
      %v1196 = vpop.f32.mrf.mxu0
      %v1197 = vadd.f32 0.0, %v1196
      %v1198 = vpop.f32.mrf.mxu0
      %v1199 = vpop.f32.mrf.mxu0
      %v1200 = vadd.f32 0.0, %v1199
      %v1201 = vpop.f32.mrf.mxu0
      %1202 = vmatprep.mubr.bf16.mxu0 0
      %1203 = vmatmul.mubr.bf16.gmra.mxu0 %v442
      %v1204 = vpop.f32.mrf.mxu0
      %v1205 = vadd.f32 0.0, %v1204
      %v1206 = vpop.f32.mrf.mxu0
      %v1207 = vpop.f32.mrf.mxu0
      %v1208 = vadd.f32 0.0, %v1207
      %v1209 = vpop.f32.mrf.mxu0
      %1210 = vmatprep.mubr.bf16.mxu0 0
      %1211 = vmatmul.mubr.bf16.gmra.mxu0 %v445
      %v1212 = vpop.f32.mrf.mxu0
      %v1213 = vadd.f32 0.0, %v1212
      %v1214 = vpop.f32.mrf.mxu0
      %v1215 = vpop.f32.mrf.mxu0
      %v1216 = vadd.f32 0.0, %v1215
      %v1217 = vpop.f32.mrf.mxu0
      %1218 = vmatprep.mubr.bf16.mxu0 0
      %1219 = vmatmul.mubr.bf16.gmra.mxu0 %v1157
      %v1220 = vpop.f32.mrf.mxu0
      %v1221 = vadd.f32 0.0, %v1220
      %v1222 = vpop.f32.mrf.mxu0
      %v1223 = vpop.f32.mrf.mxu0
      %v1224 = vadd.f32 0.0, %v1223
      %v1225 = vpop.f32.mrf.mxu0
      %1226 = vdwg.mxu0
      %v1227 = vadd.f32 %v1132, %v1197
      %v1228 = vadd.f32 %v1133, %v1200
      %v1229 = vadd.f32 %v1134, %v1205
      %v1230 = vadd.f32 %v1135, %v1208
      %v1231 = vadd.f32 %v1136, %v1213
      %v1232 = vadd.f32 %v1137, %v1216
      %v1233 = vadd.f32 %v1138, %v1221
      %v1234 = vadd.f32 %v1139, %v1224
      %v1236 = vrot.slane %v296, 5
      %v1237 = vrot.slane %v1236, 4
      %v1238 = vrot.slane %v297, 5
      %v1239 = vsel %vm626, %v1237, %v1238
      %v1240 = vunpack.c.l.b16 %v1239
      %v1241 = vpack.c.b16 %v1240, %v965
      %v1243 = vsel %vm434, %v1241, 0
      %v1246 = vsel %vm447, %v306, 0
      %1248 = vmatprep.subr.bf16.mxu0 0
      %1249 = vmatpush1.bf16.msra.mxu0 0
      %1250 = vmatprep.subr.bf16.mxu0 0
      %1251 = vmatpush1.bf16.msra.mxu0 0
      %1252 = vmatprep.subr.bf16.mxu0 0
      %1253 = vmatpush1.bf16.msra.mxu0 0
      %1254 = vmatprep.subr.bf16.mxu0 0
      %1255 = vmatpush1.bf16.msra.mxu0 0
      %1256 = vmatprep.subr.bf16.mxu0 0
      %1257 = vmatpush1.bf16.msra.mxu0 0
      %1258 = vmatprep.subr.bf16.mxu0 0
      %1259 = vmatpush1.bf16.msra.mxu0 0
      %1260 = vmatprep.subr.bf16.mxu0 0
      %1261 = vmatpush1.bf16.msra.mxu0 0
      %1262 = vmatprep.subr.bf16.mxu0 0
      %1263 = vmatpush1.bf16.msra.mxu0 %v1246
      %1264 = vmatprep.subr.bf16.mxu0 0
      %1265 = vmatpush2.bf16.msra.mxu0 0
      %1266 = vmatprep.subr.bf16.mxu0 0
      %1267 = vmatpush2.bf16.msra.mxu0 0
      %1268 = vmatprep.subr.bf16.mxu0 0
      %1269 = vmatpush2.bf16.msra.mxu0 0
      %1270 = vmatprep.subr.bf16.mxu0 0
      %1271 = vmatpush2.bf16.msra.mxu0 0
      %1272 = vmatprep.subr.bf16.mxu0 0
      %1273 = vmatpush2.bf16.msra.mxu0 0
      %1274 = vmatprep.subr.bf16.mxu0 0
      %1275 = vmatpush2.bf16.msra.mxu0 0
      %1276 = vmatprep.subr.bf16.mxu0 0
      %1277 = vmatpush2.bf16.msra.mxu0 0
      %1278 = vmatprep.subr.bf16.mxu0 0
      %1279 = vmatpush2.bf16.msra.mxu0 0
      %1280 = vmatprep.mubr.bf16.mxu0 0
      %1281 = vmatmul.mubr.bf16.gmra.mxu0 %v675
      %v1282 = vpop.f32.mrf.mxu0
      %v1283 = vadd.f32 0.0, %v1282
      %v1284 = vpop.f32.mrf.mxu0
      %v1285 = vpop.f32.mrf.mxu0
      %v1286 = vadd.f32 0.0, %v1285
      %v1287 = vpop.f32.mrf.mxu0
      %1288 = vmatprep.mubr.bf16.mxu0 0
      %1289 = vmatmul.mubr.bf16.gmra.mxu0 %v678
      %v1290 = vpop.f32.mrf.mxu0
      %v1291 = vadd.f32 0.0, %v1290
      %v1292 = vpop.f32.mrf.mxu0
      %v1293 = vpop.f32.mrf.mxu0
      %v1294 = vadd.f32 0.0, %v1293
      %v1295 = vpop.f32.mrf.mxu0
      %1296 = vmatprep.mubr.bf16.mxu0 0
      %1297 = vmatmul.mubr.bf16.gmra.mxu0 %v681
      %v1298 = vpop.f32.mrf.mxu0
      %v1299 = vadd.f32 0.0, %v1298
      %v1300 = vpop.f32.mrf.mxu0
      %v1301 = vpop.f32.mrf.mxu0
      %v1302 = vadd.f32 0.0, %v1301
      %v1303 = vpop.f32.mrf.mxu0
      %1304 = vmatprep.mubr.bf16.mxu0 0
      %1305 = vmatmul.mubr.bf16.gmra.mxu0 %v1243
      %v1306 = vpop.f32.mrf.mxu0
      %v1307 = vadd.f32 0.0, %v1306
      %v1308 = vpop.f32.mrf.mxu0
      %v1309 = vpop.f32.mrf.mxu0
      %v1310 = vadd.f32 0.0, %v1309
      %v1311 = vpop.f32.mrf.mxu0
      %1312 = vdwg.mxu0
      %v1313 = vadd.f32 %v1227, %v1283
      %v1314 = vadd.f32 %v1228, %v1286
      %v1315 = vadd.f32 %v1229, %v1291
      %v1316 = vadd.f32 %v1230, %v1294
      %v1317 = vadd.f32 %v1231, %v1299
      %v1318 = vadd.f32 %v1232, %v1302
      %v1319 = vadd.f32 %v1233, %v1307
      %v1320 = vadd.f32 %v1234, %v1310
      %s1321 = scalar_lea.vmem %s263, 216
      %v1322 = vld [vmem:[%s1321] sm:$0xf]
      %v1323 = vld [vmem:[%s1321 + $0x8] sm:$0xf]
      %v1324 = vld [vmem:[%s1321 + $0x10] sm:$0xf]
      %v1325 = vld [vmem:[%s1321 + $0x18] sm:$0xf]
      %v1326 = vld [vmem:[%s1321 + $0x20] sm:$0xf]
      %v1327 = vld [vmem:[%s1321 + $0x28] sm:$0xf]
      %v1328 = vld [vmem:[%s1321 + $0x30] sm:$0xf]
      %v1329 = vld [vmem:[%s1321 + $0x38] sm:$0xf]
      %v1330 = vld [vmem:[%s268] sm:$0x3]
      %v1339 = vunpack.c.l.b16 %v1322
      %v1340 = vunpack.c.l.b16 %v1323
      %v1341 = vunpack.c.l.b16 %v1324
      %v1342 = vunpack.c.l.b16 %v1325
      %v1343 = vunpack.c.l.b16 %v1326
      %v1344 = vunpack.c.l.b16 %v1327
      %v1345 = vunpack.c.l.b16 %v1328
      %v1346 = vunpack.c.l.b16 %v1329
      %v1347 = vpack.c.b16 %v1340, %v1339
      %v1348 = vpack.c.b16 %v1342, %v1341
      %v1349 = vpack.c.b16 %v1344, %v1343
      %v1350 = vpack.c.b16 %v1346, %v1345
      %vm1351 = vcmask 31744
      %v1353 = vsel %vm1351, %v1347, 0
      %v1356 = vsel %vm1351, %v1348, 0
      %v1359 = vsel %vm1351, %v1349, 0
      %v1362 = vsel %vm1351, %v1350, 0
      %vm1364 = vcmask 1041408
      %v1366 = vsel %vm1364, %v1330, 0
      %1368 = vmatprep.subr.bf16.mxu0 0
      %1369 = vmatpush1.bf16.msra.mxu0 0
      %1370 = vmatprep.subr.bf16.mxu0 0
      %1371 = vmatpush1.bf16.msra.mxu0 0
      %1372 = vmatprep.subr.bf16.mxu0 0
      %1373 = vmatpush1.bf16.msra.mxu0 0
      %1374 = vmatprep.subr.bf16.mxu0 0
      %1375 = vmatpush1.bf16.msra.mxu0 0
      %1376 = vmatprep.subr.bf16.mxu0 0
      %1377 = vmatpush1.bf16.msra.mxu0 0
      %1378 = vmatprep.subr.bf16.mxu0 0
      %1379 = vmatpush1.bf16.msra.mxu0 0
      %1380 = vmatprep.subr.bf16.mxu0 0
      %1381 = vmatpush1.bf16.msra.mxu0 0
      %1382 = vmatprep.subr.bf16.mxu0 0
      %1383 = vmatpush1.bf16.msra.mxu0 %v1366
      %1384 = vmatprep.subr.bf16.mxu0 0
      %1385 = vmatpush2.bf16.msra.mxu0 0
      %1386 = vmatprep.subr.bf16.mxu0 0
      %1387 = vmatpush2.bf16.msra.mxu0 0
      %1388 = vmatprep.subr.bf16.mxu0 0
      %1389 = vmatpush2.bf16.msra.mxu0 0
      %1390 = vmatprep.subr.bf16.mxu0 0
      %1391 = vmatpush2.bf16.msra.mxu0 0
      %1392 = vmatprep.subr.bf16.mxu0 0
      %1393 = vmatpush2.bf16.msra.mxu0 0
      %1394 = vmatprep.subr.bf16.mxu0 0
      %1395 = vmatpush2.bf16.msra.mxu0 0
      %1396 = vmatprep.subr.bf16.mxu0 0
      %1397 = vmatpush2.bf16.msra.mxu0 0
      %1398 = vmatprep.subr.bf16.mxu0 0
      %1399 = vmatpush2.bf16.msra.mxu0 0
      %1400 = vmatprep.mubr.bf16.mxu0 0
      %1401 = vmatmul.mubr.bf16.gmra.mxu0 %v1353
      %v1402 = vpop.f32.mrf.mxu0
      %v1403 = vadd.f32 0.0, %v1402
      %v1404 = vpop.f32.mrf.mxu0
      %v1405 = vpop.f32.mrf.mxu0
      %v1406 = vadd.f32 0.0, %v1405
      %v1407 = vpop.f32.mrf.mxu0
      %1408 = vmatprep.mubr.bf16.mxu0 0
      %1409 = vmatmul.mubr.bf16.gmra.mxu0 %v1356
      %v1410 = vpop.f32.mrf.mxu0
      %v1411 = vadd.f32 0.0, %v1410
      %v1412 = vpop.f32.mrf.mxu0
      %v1413 = vpop.f32.mrf.mxu0
      %v1414 = vadd.f32 0.0, %v1413
      %v1415 = vpop.f32.mrf.mxu0
      %1416 = vmatprep.mubr.bf16.mxu0 0
      %1417 = vmatmul.mubr.bf16.gmra.mxu0 %v1359
      %v1418 = vpop.f32.mrf.mxu0
      %v1419 = vadd.f32 0.0, %v1418
      %v1420 = vpop.f32.mrf.mxu0
      %v1421 = vpop.f32.mrf.mxu0
      %v1422 = vadd.f32 0.0, %v1421
      %v1423 = vpop.f32.mrf.mxu0
      %1424 = vmatprep.mubr.bf16.mxu0 0
      %1425 = vmatmul.mubr.bf16.gmra.mxu0 %v1362
      %v1426 = vpop.f32.mrf.mxu0
      %v1427 = vadd.f32 0.0, %v1426
      %v1428 = vpop.f32.mrf.mxu0
      %v1429 = vpop.f32.mrf.mxu0
      %v1430 = vadd.f32 0.0, %v1429
      %v1431 = vpop.f32.mrf.mxu0
      %1432 = vdwg.mxu0
      %v1433 = vadd.f32 %v1313, %v1403
      %v1434 = vadd.f32 %v1314, %v1406
      %v1435 = vadd.f32 %v1315, %v1411
      %v1436 = vadd.f32 %v1316, %v1414
      %v1437 = vadd.f32 %v1317, %v1419
      %v1438 = vadd.f32 %v1318, %v1422
      %v1439 = vadd.f32 %v1319, %v1427
      %v1440 = vadd.f32 %v1320, %v1430
      %1441 = vst.msk [vmem:[%s276] sm:$0xff] %vm434, %v1433
      %1442 = vst.msk [vmem:[%s276 + $0x8] sm:$0xff] %vm434, %v1434
      %1443 = vst.msk [vmem:[%s276 + $0x10] sm:$0xff] %vm434, %v1435
      %1444 = vst.msk [vmem:[%s276 + $0x18] sm:$0xff] %vm434, %v1436
      %1445 = vst.msk [vmem:[%s276 + $0x20] sm:$0xff] %vm434, %v1437
      %1446 = vst.msk [vmem:[%s276 + $0x28] sm:$0xff] %vm434, %v1438
      %1447 = vst.msk [vmem:[%s276 + $0x30] sm:$0xff] %vm434, %v1439
      %1448 = vst.msk [vmem:[%s276 + $0x38] sm:$0xff] %vm434, %v1440
      %p1449 = scmp.lt.s32.totalorder %s19, 1
      %s1450 = scalar_select %p1449, %s19, 1
      %p1451 = scmp.lt.s32.totalorder %s20, 0
      %s1452 = scalar_select %p1451, %s20, 0
      %s1453 = smul.addr %s1450, 8
      %s1454 = sadd.s32 %s1452, %s1453
      %s1455 = smul.addr %s1454, 8
      %s1456 = scalar_lea.vmem %s4, %s1455
      // Predicated region
      $region37: #{_basic_block_forward.3} parent=35 // pred_check
        %p1457 = pneg %p151
      $region38: #{_basic_block_forward.3} parent=35 // pred_check_branch
        %1459 = sbr.rel (%p1457) target = $region40
      $region39: #{_basic_block_forward.3} parent=35 // pred_region
        _
      $region40: #{_basic_block_forward.3} parent=35 // pred_fallthru
        _
    $region36: #{_basic_block_forward.3} parent=5 // pred_fallthru
      _
    %p1460 = scmp.le.s32.totalorder 2, %s10
    // Predicated region
    $region41: #{_basic_block_forward.3} parent=5 // pred_check
      %p1461 = pneg %p1460
    $region42: #{_basic_block_forward.3} parent=5 // pred_check_branch
      %1463 = sbr.rel (%p1461) target = $region44
    $region43: #{_basic_block_forward.3} parent=5 // pred_region
      %s1464 = ssub.s32 %s10, 2
      // Predicated region
      $region45: #{_basic_block_forward.3} parent=43 // pred_check
        %p1465 = pneg %p157
      $region46: #{_basic_block_forward.3} parent=43 // pred_check_branch
        %1467 = sbr.rel (%p1465) target = $region48
      $region47: #{_basic_block_forward.3} parent=43 // pred_region
        %p1468 = scmp.lt.s32.totalorder %s21, 1
        %s1469 = scalar_select %p1468, %s21, 1
        %p1470 = scmp.lt.s32.totalorder %s22, 0
        %s1471 = scalar_select %p1470, %s22, 0
        %s1472 = smul.addr %s1469, 8
        %s1473 = sadd.s32 %s1471, %s1472
        %s1474 = smul.addr %s1473, 8
        %s1475 = scalar_lea.vmem %s4, %s1474
      $region48: #{_basic_block_forward.3} parent=43 // pred_fallthru
        _
    $region44: #{_basic_block_forward.3} parent=5 // pred_fallthru
      _
  $region6: #{_basic_block_forward.3} parent=0 // loop_footer
    %s14 = sadd.s32 1, %s10
  $region7: #{_basic_block_forward.3} parent=0 // loop_footer_branch
    %9 = sbr.rel target = $region3
  $region8: #{_basic_block_forward.3} parent=0 // loop_exit
    _

</llo_original>
